<compile_context>
chip_gen: v7x
topology: tpu7x:2x2x1
jax: 0.10.0
libtpu: 0.0.40
codegen_flags: <defaults>
</compile_context>

<pallas_src>
import math
import functools

import jax
import jax.numpy as jnp
import numpy as np
from jax.experimental import pallas as pl
from jax.experimental.pallas import tpu as pltpu

# ---- small GPT config (consistent with the module's __init__) ----
VOCAB = 128
N_EMBD = 64
N_HEAD = 4
N_LAYER = 2
BLOCK_SIZE = 16
LN_EPS = 1e-5


# ---------------- in-kernel math helpers ----------------
def _erf(x):
    # Abramowitz & Stegun 7.1.26 polynomial, |err| < 1.5e-7 (~f32 exact).
    a1, a2, a3, a4, a5 = (0.254829592, -0.284496736, 1.421413741,
                          -1.453152027, 1.061405429)
    p = 0.3275911
    s = jnp.where(x >= 0.0, 1.0, -1.0)
    z = jnp.abs(x)
    t = 1.0 / (1.0 + p * z)
    poly = ((((a5 * t + a4) * t + a3) * t + a2) * t + a1) * t
    return s * (1.0 - poly * jnp.exp(-z * z))


def _gelu_exact(x):
    # matches torch.nn.GELU() (erf formulation)
    return 0.5 * x * (1.0 + _erf(x * (1.0 / math.sqrt(2.0))))


def _layernorm(x, w, b):
    mu = jnp.mean(x, axis=-1, keepdims=True)
    var = jnp.mean((x - mu) ** 2, axis=-1, keepdims=True)
    return (x - mu) * jax.lax.rsqrt(var + LN_EPS) * w + b


def _mm(x, w):
    # y = x @ W.T  for PyTorch-layout W = (out, in)
    return jax.lax.dot_general(x, w, (((1,), (1,)), ((), ())),
                               preferred_element_type=jnp.float32)


# ---------------- fused GPT forward kernel ----------------
def _gpt_kernel(idx_ref, pos_ref, tok_ref,
                ln1w_ref, ln1b_ref, wqkv_ref, bqkv_ref, wo_ref, bo_ref,
                ln2w_ref, ln2b_ref, w1_ref, b1_ref, w2_ref, b2_ref,
                lnfw_ref, lnfb_ref, wh_ref, o_ref,
                *, n_head, n_layer, batch, seqlen):
    BT = batch * seqlen
    vocab, C = tok_ref.shape
    hd = C // n_head
    scale = 1.0 / math.sqrt(hd)

    # ---- token embedding: one-hot x tok_emb matmul (exact gather on MXU) ----
    ids = idx_ref[...]                                            # (BT, 1) int32
    vocab_iota = jax.lax.broadcasted_iota(jnp.int32, (BT, vocab), 1)
    onehot = (vocab_iota == ids).astype(jnp.float32)              # (BT, VOCAB)
    x = jnp.dot(onehot, tok_ref[...], preferred_element_type=jnp.float32)
    x = x + pos_ref[...]                                          # pos_emb add
    # self.drop -> eval identity

    # causal mask (shared across layers & batches)
    row = jax.lax.broadcasted_iota(jnp.int32, (seqlen, seqlen), 0)
    col = jax.lax.broadcasted_iota(jnp.int32, (seqlen, seqlen), 1)
    causal = row >= col

    for l in range(n_layer):
        # ---- causal self-attention (fused QKV) ----
        h = _layernorm(x, ln1w_ref[l], ln1b_ref[l])
        qkv = _mm(h, wqkv_ref[l]) + bqkv_ref[l]                   # (BT, 3C)

        y_rows = []
        for b in range(batch):
            rs = slice(b * seqlen, (b + 1) * seqlen)
            heads = []
            for hh in range(n_head):
                qh = qkv[rs, hh * hd:(hh + 1) * hd] * scale
                kh = qkv[rs, C + hh * hd:C + (hh + 1) * hd]
                vh = qkv[rs, 2 * C + hh * hd:2 * C + (hh + 1) * hd]
                att = jax.lax.dot_general(qh, kh, (((1,), (1,)), ((), ())),
                                          preferred_element_type=jnp.float32)
                att = jnp.where(causal, att, jnp.float32(-1e30))
                att = att - jnp.max(att, axis=-1, keepdims=True)
                p = jnp.exp(att)
                p = p / jnp.sum(p, axis=-1, keepdims=True)        # attn_drop = id
                heads.append(jnp.dot(p, vh, preferred_element_type=jnp.float32))
            y_rows.append(jnp.concatenate(heads, axis=-1))        # (T, C)
        y = jnp.concatenate(y_rows, axis=0)                       # (BT, C)

        x = x + _mm(y, wo_ref[l]) + bo_ref[l]                     # residual 1 (resid_drop = id)

        # ---- MLP ----
        h2 = _layernorm(x, ln2w_ref[l], ln2b_ref[l])
        m = _gelu_exact(_mm(h2, w1_ref[l]) + b1_ref[l])
        x = x + _mm(m, w2_ref[l]) + b2_ref[l]                     # residual 2 (dropout = id)

    # ---- ln_f + head (lane-dense V=128 output) ----
    hf = _layernorm(x, lnfw_ref[...], lnfb_ref[...])
    o_ref[...] = _mm(hf, wh_ref[...])


# ---------------- pallas_call wrapper ----------------
def gpt_forward(idx, params):
    """idx: (B, T) int32 token ids -> logits (B, T, VOCAB). Single fused Pallas call."""
    B, T = idx.shape
    assert T <= BLOCK_SIZE, "Cannot forward, model block size is exhausted."
    C = N_EMBD
    BT = B * T
    blocks = params["blocks"]

    stack = lambda name: jnp.stack([blk[name] for blk in blocks], axis=0)
    # fuse Q/K/V weights & biases per layer
    wqkv = jnp.stack([jnp.concatenate([blk["wq"], blk["wk"], blk["wv"]], axis=0)
                      for blk in blocks], axis=0)                 # (L, 3C, C)
    bqkv = jnp.stack([jnp.concatenate([blk["bq"], blk["bk"], blk["bv"]], axis=-1)
                      for blk in blocks], axis=0)                 # (L, 1, 3C)

    args = [
        idx.reshape(BT, 1).astype(jnp.int32),
        jnp.broadcast_to(params["pos_emb"][0, :T, :], (B, T, C)).reshape(BT, C),
        params["tok_emb"],
        stack("ln1_w"), stack("ln1_b"), wqkv, bqkv,
        stack("wo"), stack("bo"),
        stack("ln2_w"), stack("ln2_b"),
        stack("w1"), stack("b1"), stack("w2"), stack("b2"),
        params["lnf_w"], params["lnf_b"], params["head_w"],
    ]

    def fullspec(a):
        nd = a.ndim
        return pl.BlockSpec(a.shape, lambda i, nd=nd: (0,) * nd)

    logits = pl.pallas_call(
        functools.partial(_gpt_kernel, n_head=N_HEAD, n_layer=N_LAYER,
                          batch=B, seqlen=T),
        out_shape=jax.ShapeDtypeStruct((BT, VOCAB), jnp.float32),
        grid=(1,),
        in_specs=[fullspec(a) for a in args],
        out_specs=pl.BlockSpec((BT, VOCAB), lambda i: (0, 0)),
        compiler_params=pltpu.CompilerParams(
            dimension_semantics=("arbitrary",)),
    )(*args)
    return logits.reshape(B, T, VOCAB)
    # TODO(synk): bert masking uses torch.rand (non-deterministic) — not implemented.
    # TODO(synk): use_embd=False soft_q/gc path and unused self.dense/self.c layers skipped.
    # TODO(synk): cross-entropy loss branch (targets is not None) not implemented.


# ---------------- deterministic parameter init ----------------
def init_params(key):
    def nrm(k, shape):  # nn.Linear / nn.Embedding init: N(0, 0.02)
        return 0.02 * jax.random.normal(k, shape, jnp.float32)

    keys = jax.random.split(key, 2 + N_LAYER)
    C = N_EMBD
    params = {
        "tok_emb": nrm(keys[0], (VOCAB, C)),
        "pos_emb": jnp.zeros((1, BLOCK_SIZE, C), jnp.float32),
        "lnf_w": jnp.ones((1, C), jnp.float32),
        "lnf_b": jnp.zeros((1, C), jnp.float32),
        "head_w": nrm(keys[1], (VOCAB, C)),   # bias=False
        "blocks": [],
    }
    for l in range(N_LAYER):
        ks = jax.random.split(keys[2 + l], 6)
        params["blocks"].append({
            "ln1_w": jnp.ones((1, C), jnp.float32),
            "ln1_b": jnp.zeros((1, C), jnp.float32),
            "wq": nrm(ks[0], (C, C)), "bq": jnp.zeros((1, C), jnp.float32),
            "wk": nrm(ks[1], (C, C)), "bk": jnp.zeros((1, C), jnp.float32),
            "wv": nrm(ks[2], (C, C)), "bv": jnp.zeros((1, C), jnp.float32),
            "wo": nrm(ks[3], (C, C)), "bo": jnp.zeros((1, C), jnp.float32),
            "ln2_w": jnp.ones((1, C), jnp.float32),
            "ln2_b": jnp.zeros((1, C), jnp.float32),
            "w1": nrm(ks[4], (4 * C, C)), "b1": jnp.zeros((1, 4 * C), jnp.float32),
            "w2": nrm(ks[5], (C, 4 * C)), "b2": jnp.zeros((1, C), jnp.float32),
        })
    return params


# ---------------- pure-JAX reference (for correctness check) ----------------
def ref_forward(idx, params):
    B, T = idx.shape
    C, H = N_EMBD, N_HEAD
    hd = C // H
    x = jnp.take(params["tok_emb"], idx, axis=0) + params["pos_emb"][:, :T, :]
    for p in params["blocks"]:
        h = _layernorm(x, p["ln1_w"], p["ln1_b"])
        q = h @ p["wq"].T + p["bq"]
        k = h @ p["wk"].T + p["bk"]
        v = h @ p["wv"].T + p["bv"]
        split = lambda z: jnp.transpose(z.reshape(B, T, H, hd), (0, 2, 1, 3))
        qh, kh, vh = split(q), split(k), split(v)
        att = jnp.einsum("bhtd,bhsd->bhts", qh, kh) / math.sqrt(hd)
        mask = jnp.tril(jnp.ones((T, T), bool))
        att = jnp.where(mask, att, -jnp.inf)
        att = jax.nn.softmax(att, axis=-1)
        y = jnp.einsum("bhts,bhsd->bhtd", att, vh)
        y = jnp.transpose(y, (0, 2, 1, 3)).reshape(B, T, C)
        x = x + (y @ p["wo"].T + p["bo"])
        h2 = _layernorm(x, p["ln2_w"], p["ln2_b"])
        m = jax.nn.gelu(h2 @ p["w1"].T + p["b1"], approximate=False)
        x = x + (m @ p["w2"].T + p["b2"])
    x = _layernorm(x, params["lnf_w"], params["lnf_b"])
    return x @ params["head_w"].T


if __name__ == "__main__":
    key = jax.random.PRNGKey(0)
    pkey, ikey = jax.random.split(key)
    params = init_params(pkey)

    B, T = 2, 8
    idx = jax.random.randint(ikey, (B, T), 0, VOCAB, dtype=jnp.int32)

    logits = gpt_forward(idx, params)
    logits = jax.block_until_ready(logits)
    assert logits.shape == (B, T, VOCAB)

    ref = jax.block_until_ready(ref_forward(idx, params))
    np.testing.assert_allclose(np.asarray(logits), np.asarray(ref),
                               atol=1e-3, rtol=1e-3)
    print("KERNEL_OK")
</pallas_src>

<mosaic_0001>
module attributes {stable_mosaic.version = 11 : i64} {
  func.func @_gpt_kernel(%arg0: i32, %arg1: memref<16x1xi32, #tpu.memory_space<vmem>>, %arg2: memref<16x64xf32, #tpu.memory_space<vmem>>, %arg3: memref<128x64xf32, #tpu.memory_space<vmem>>, %arg4: memref<2x1x64xf32, #tpu.memory_space<vmem>>, %arg5: memref<2x1x64xf32, #tpu.memory_space<vmem>>, %arg6: memref<2x192x64xf32, #tpu.memory_space<vmem>>, %arg7: memref<2x1x192xf32, #tpu.memory_space<vmem>>, %arg8: memref<2x64x64xf32, #tpu.memory_space<vmem>>, %arg9: memref<2x1x64xf32, #tpu.memory_space<vmem>>, %arg10: memref<2x1x64xf32, #tpu.memory_space<vmem>>, %arg11: memref<2x1x64xf32, #tpu.memory_space<vmem>>, %arg12: memref<2x256x64xf32, #tpu.memory_space<vmem>>, %arg13: memref<2x1x256xf32, #tpu.memory_space<vmem>>, %arg14: memref<2x64x256xf32, #tpu.memory_space<vmem>>, %arg15: memref<2x1x64xf32, #tpu.memory_space<vmem>>, %arg16: memref<1x64xf32, #tpu.memory_space<vmem>>, %arg17: memref<1x64xf32, #tpu.memory_space<vmem>>, %arg18: memref<128x64xf32, #tpu.memory_space<vmem>>, %arg19: memref<16x128xf32, #tpu.memory_space<vmem>>) attributes {dimension_semantics = [#tpu.dimension_semantics<arbitrary>], iteration_bounds = array<i64: 1>, scalar_prefetch = 0 : i64, scratch_operands = 0 : i64, tpu.core_type = #tpu.core_type<tc>, window_params = [{pipeline_mode = #tpu.pipeline_mode<synchronous>, transform_indices = @transform_0, window_bounds = array<i64: 16, 1>}, {pipeline_mode = #tpu.pipeline_mode<synchronous>, transform_indices = @transform_1, window_bounds = array<i64: 16, 64>}, {pipeline_mode = #tpu.pipeline_mode<synchronous>, transform_indices = @transform_2, window_bounds = array<i64: 128, 64>}, {pipeline_mode = #tpu.pipeline_mode<synchronous>, transform_indices = @transform_3, window_bounds = array<i64: 2, 1, 64>}, {pipeline_mode = #tpu.pipeline_mode<synchronous>, transform_indices = @transform_4, window_bounds = array<i64: 2, 1, 64>}, {pipeline_mode = #tpu.pipeline_mode<synchronous>, transform_indices = @transform_5, window_bounds = array<i64: 2, 192, 64>}, {pipeline_mode = #tpu.pipeline_mode<synchronous>, transform_indices = @transform_6, window_bounds = array<i64: 2, 1, 192>}, {pipeline_mode = #tpu.pipeline_mode<synchronous>, transform_indices = @transform_7, window_bounds = array<i64: 2, 64, 64>}, {pipeline_mode = #tpu.pipeline_mode<synchronous>, transform_indices = @transform_8, window_bounds = array<i64: 2, 1, 64>}, {pipeline_mode = #tpu.pipeline_mode<synchronous>, transform_indices = @transform_9, window_bounds = array<i64: 2, 1, 64>}, {pipeline_mode = #tpu.pipeline_mode<synchronous>, transform_indices = @transform_10, window_bounds = array<i64: 2, 1, 64>}, {pipeline_mode = #tpu.pipeline_mode<synchronous>, transform_indices = @transform_11, window_bounds = array<i64: 2, 256, 64>}, {pipeline_mode = #tpu.pipeline_mode<synchronous>, transform_indices = @transform_12, window_bounds = array<i64: 2, 1, 256>}, {pipeline_mode = #tpu.pipeline_mode<synchronous>, transform_indices = @transform_13, window_bounds = array<i64: 2, 64, 256>}, {pipeline_mode = #tpu.pipeline_mode<synchronous>, transform_indices = @transform_14, window_bounds = array<i64: 2, 1, 64>}, {pipeline_mode = #tpu.pipeline_mode<synchronous>, transform_indices = @transform_15, window_bounds = array<i64: 1, 64>}, {pipeline_mode = #tpu.pipeline_mode<synchronous>, transform_indices = @transform_16, window_bounds = array<i64: 1, 64>}, {pipeline_mode = #tpu.pipeline_mode<synchronous>, transform_indices = @transform_17, window_bounds = array<i64: 128, 64>}, {pipeline_mode = #tpu.pipeline_mode<synchronous>, transform_indices = @transform_18, window_bounds = array<i64: 16, 128>}]} {
    %c0 = arith.constant 0 : index
    %c0_0 = arith.constant 0 : index
    %0 = vector.load %arg1[%c0, %c0_0] : memref<16x1xi32, #tpu.memory_space<vmem>>, vector<16x1xi32>
    %1 = tpu.iota {dimensions = array<i32: 1>} : vector<16x128xi32>
    %2 = vector.broadcast %0 : vector<16x1xi32> to vector<16x128xi32>
    %3 = arith.cmpi eq, %1, %2 : vector<16x128xi32>
    %4 = arith.extui %3 : vector<16x128xi1> to vector<16x128xi32>
    %5 = arith.sitofp %4 : vector<16x128xi32> to vector<16x128xf32>
    %c0_1 = arith.constant 0 : index
    %c0_2 = arith.constant 0 : index
    %6 = vector.load %arg3[%c0_1, %c0_2] : memref<128x64xf32, #tpu.memory_space<vmem>>, vector<128x64xf32>
    %cst = arith.constant dense<0.000000e+00> : vector<16x64xf32>
    %7 = tpu.matmul %5, %6, %cst {dimension_numbers = #tpu.dot_dimension_numbers<[1], [0], [0], [1], [0, 0, 1, 1], [], []>} : vector<16x128xf32>, vector<128x64xf32>, vector<16x64xf32> -> vector<16x64xf32>
    %c0_3 = arith.constant 0 : index
    %c0_4 = arith.constant 0 : index
    %8 = vector.load %arg2[%c0_3, %c0_4] : memref<16x64xf32, #tpu.memory_space<vmem>>, vector<16x64xf32>
    %9 = arith.addf %7, %8 : vector<16x64xf32>
    %10 = tpu.iota {dimensions = array<i32: 0>} : vector<8x8xi32>
    %11 = tpu.iota {dimensions = array<i32: 1>} : vector<8x8xi32>
    %12 = arith.cmpi sge, %10, %11 : vector<8x8xi32>
    %c0_5 = arith.constant 0 : index
    %c0_6 = arith.constant 0 : index
    %c0_7 = arith.constant 0 : index
    %13 = vector.load %arg4[%c0_5, %c0_6, %c0_7] : memref<2x1x64xf32, #tpu.memory_space<vmem>>, vector<1x1x64xf32>
    %14 = vector.shape_cast %13 : vector<1x1x64xf32> to vector<1x64xf32>
    %c0_8 = arith.constant 0 : index
    %c0_9 = arith.constant 0 : index
    %c0_10 = arith.constant 0 : index
    %15 = vector.load %arg5[%c0_8, %c0_9, %c0_10] : memref<2x1x64xf32, #tpu.memory_space<vmem>>, vector<1x1x64xf32>
    %16 = vector.shape_cast %15 : vector<1x1x64xf32> to vector<1x64xf32>
    %cst_11 = arith.constant dense<0.000000e+00> : vector<16xf32>
    %17 = vector.multi_reduction <add>, %9, %cst_11 [1] : vector<16x64xf32> to vector<16xf32>
    %18 = vector.shape_cast %17 : vector<16xf32> to vector<16x1xf32>
    %cst_12 = arith.constant 6.400000e+01 : f32
    %19 = vector.broadcast %cst_12 : f32 to vector<16x1xf32>
    %20 = arith.divf %18, %19 : vector<16x1xf32>
    %21 = vector.broadcast %20 : vector<16x1xf32> to vector<16x64xf32>
    %22 = arith.subf %9, %21 : vector<16x64xf32>
    %23 = arith.mulf %22, %22 : vector<16x64xf32>
    %cst_13 = arith.constant dense<0.000000e+00> : vector<16xf32>
    %24 = vector.multi_reduction <add>, %23, %cst_13 [1] : vector<16x64xf32> to vector<16xf32>
    %25 = vector.shape_cast %24 : vector<16xf32> to vector<16x1xf32>
    %cst_14 = arith.constant 6.400000e+01 : f32
    %26 = vector.broadcast %cst_14 : f32 to vector<16x1xf32>
    %27 = arith.divf %25, %26 : vector<16x1xf32>
    %28 = vector.broadcast %20 : vector<16x1xf32> to vector<16x64xf32>
    %29 = arith.subf %9, %28 : vector<16x64xf32>
    %cst_15 = arith.constant 9.99999974E-6 : f32
    %30 = vector.broadcast %cst_15 : f32 to vector<16x1xf32>
    %31 = arith.addf %27, %30 : vector<16x1xf32>
    %32 = math.rsqrt %31 : vector<16x1xf32>
    %33 = vector.broadcast %32 : vector<16x1xf32> to vector<16x64xf32>
    %34 = arith.mulf %29, %33 : vector<16x64xf32>
    %35 = vector.broadcast %14 : vector<1x64xf32> to vector<16x64xf32>
    %36 = arith.mulf %34, %35 : vector<16x64xf32>
    %37 = vector.broadcast %16 : vector<1x64xf32> to vector<16x64xf32>
    %38 = arith.addf %36, %37 : vector<16x64xf32>
    %c0_16 = arith.constant 0 : index
    %c0_17 = arith.constant 0 : index
    %c0_18 = arith.constant 0 : index
    %39 = vector.load %arg6[%c0_16, %c0_17, %c0_18] : memref<2x192x64xf32, #tpu.memory_space<vmem>>, vector<1x192x64xf32>
    %40 = vector.shape_cast %39 : vector<1x192x64xf32> to vector<192x64xf32>
    %cst_19 = arith.constant dense<0.000000e+00> : vector<16x192xf32>
    %41 = tpu.matmul %38, %40, %cst_19 {dimension_numbers = #tpu.dot_dimension_numbers<[1], [1], [0], [0], [0, 0, 1, 0], [], []>} : vector<16x64xf32>, vector<192x64xf32>, vector<16x192xf32> -> vector<16x192xf32>
    %c0_20 = arith.constant 0 : index
    %c0_21 = arith.constant 0 : index
    %c0_22 = arith.constant 0 : index
    %42 = vector.load %arg7[%c0_20, %c0_21, %c0_22] : memref<2x1x192xf32, #tpu.memory_space<vmem>>, vector<1x1x192xf32>
    %43 = vector.shape_cast %42 : vector<1x1x192xf32> to vector<1x192xf32>
    %44 = vector.broadcast %43 : vector<1x192xf32> to vector<16x192xf32>
    %45 = arith.addf %41, %44 : vector<16x192xf32>
    %46 = vector.extract_strided_slice %45 {offsets = [0, 0], sizes = [8, 16], strides = [1, 1]} : vector<16x192xf32> to vector<8x16xf32>
    %cst_23 = arith.constant 2.500000e-01 : f32
    %47 = vector.broadcast %cst_23 : f32 to vector<8x16xf32>
    %48 = arith.mulf %46, %47 : vector<8x16xf32>
    %49 = vector.extract_strided_slice %45 {offsets = [0, 64], sizes = [8, 16], strides = [1, 1]} : vector<16x192xf32> to vector<8x16xf32>
    %50 = vector.extract_strided_slice %45 {offsets = [0, 128], sizes = [8, 16], strides = [1, 1]} : vector<16x192xf32> to vector<8x16xf32>
    %cst_24 = arith.constant dense<0.000000e+00> : vector<8x8xf32>
    %51 = tpu.matmul %48, %49, %cst_24 {dimension_numbers = #tpu.dot_dimension_numbers<[1], [1], [0], [0], [0, 0, 1, 0], [], []>} : vector<8x16xf32>, vector<8x16xf32>, vector<8x8xf32> -> vector<8x8xf32>
    %cst_25 = arith.constant -1.000000e+30 : f32
    %52 = vector.broadcast %cst_25 : f32 to vector<8x8xf32>
    %53 = arith.select %12, %51, %52 : vector<8x8xi1>, vector<8x8xf32>
    %cst_26 = arith.constant dense<0xFF800000> : vector<8xf32>
    %54 = vector.multi_reduction <maximumf>, %53, %cst_26 [1] : vector<8x8xf32> to vector<8xf32>
    %55 = vector.shape_cast %54 : vector<8xf32> to vector<8x1xf32>
    %56 = vector.broadcast %55 : vector<8x1xf32> to vector<8x8xf32>
    %57 = arith.subf %53, %56 : vector<8x8xf32>
    %58 = math.exp %57 : vector<8x8xf32>
    %cst_27 = arith.constant dense<0.000000e+00> : vector<8xf32>
    %59 = vector.multi_reduction <add>, %58, %cst_27 [1] : vector<8x8xf32> to vector<8xf32>
    %60 = vector.shape_cast %59 : vector<8xf32> to vector<8x1xf32>
    %61 = vector.broadcast %60 : vector<8x1xf32> to vector<8x8xf32>
    %62 = arith.divf %58, %61 : vector<8x8xf32>
    %cst_28 = arith.constant dense<0.000000e+00> : vector<8x16xf32>
    %63 = tpu.matmul %62, %50, %cst_28 {dimension_numbers = #tpu.dot_dimension_numbers<[1], [0], [0], [1], [0, 0, 1, 1], [], []>} : vector<8x8xf32>, vector<8x16xf32>, vector<8x16xf32> -> vector<8x16xf32>
    %64 = vector.extract_strided_slice %45 {offsets = [0, 16], sizes = [8, 16], strides = [1, 1]} : vector<16x192xf32> to vector<8x16xf32>
    %cst_29 = arith.constant 2.500000e-01 : f32
    %65 = vector.broadcast %cst_29 : f32 to vector<8x16xf32>
    %66 = arith.mulf %64, %65 : vector<8x16xf32>
    %67 = vector.extract_strided_slice %45 {offsets = [0, 80], sizes = [8, 16], strides = [1, 1]} : vector<16x192xf32> to vector<8x16xf32>
    %68 = vector.extract_strided_slice %45 {offsets = [0, 144], sizes = [8, 16], strides = [1, 1]} : vector<16x192xf32> to vector<8x16xf32>
    %cst_30 = arith.constant dense<0.000000e+00> : vector<8x8xf32>
    %69 = tpu.matmul %66, %67, %cst_30 {dimension_numbers = #tpu.dot_dimension_numbers<[1], [1], [0], [0], [0, 0, 1, 0], [], []>} : vector<8x16xf32>, vector<8x16xf32>, vector<8x8xf32> -> vector<8x8xf32>
    %cst_31 = arith.constant -1.000000e+30 : f32
    %70 = vector.broadcast %cst_31 : f32 to vector<8x8xf32>
    %71 = arith.select %12, %69, %70 : vector<8x8xi1>, vector<8x8xf32>
    %cst_32 = arith.constant dense<0xFF800000> : vector<8xf32>
    %72 = vector.multi_reduction <maximumf>, %71, %cst_32 [1] : vector<8x8xf32> to vector<8xf32>
    %73 = vector.shape_cast %72 : vector<8xf32> to vector<8x1xf32>
    %74 = vector.broadcast %73 : vector<8x1xf32> to vector<8x8xf32>
    %75 = arith.subf %71, %74 : vector<8x8xf32>
    %76 = math.exp %75 : vector<8x8xf32>
    %cst_33 = arith.constant dense<0.000000e+00> : vector<8xf32>
    %77 = vector.multi_reduction <add>, %76, %cst_33 [1] : vector<8x8xf32> to vector<8xf32>
    %78 = vector.shape_cast %77 : vector<8xf32> to vector<8x1xf32>
    %79 = vector.broadcast %78 : vector<8x1xf32> to vector<8x8xf32>
    %80 = arith.divf %76, %79 : vector<8x8xf32>
    %cst_34 = arith.constant dense<0.000000e+00> : vector<8x16xf32>
    %81 = tpu.matmul %80, %68, %cst_34 {dimension_numbers = #tpu.dot_dimension_numbers<[1], [0], [0], [1], [0, 0, 1, 1], [], []>} : vector<8x8xf32>, vector<8x16xf32>, vector<8x16xf32> -> vector<8x16xf32>
    %82 = vector.extract_strided_slice %45 {offsets = [0, 32], sizes = [8, 16], strides = [1, 1]} : vector<16x192xf32> to vector<8x16xf32>
    %cst_35 = arith.constant 2.500000e-01 : f32
    %83 = vector.broadcast %cst_35 : f32 to vector<8x16xf32>
    %84 = arith.mulf %82, %83 : vector<8x16xf32>
    %85 = vector.extract_strided_slice %45 {offsets = [0, 96], sizes = [8, 16], strides = [1, 1]} : vector<16x192xf32> to vector<8x16xf32>
    %86 = vector.extract_strided_slice %45 {offsets = [0, 160], sizes = [8, 16], strides = [1, 1]} : vector<16x192xf32> to vector<8x16xf32>
    %cst_36 = arith.constant dense<0.000000e+00> : vector<8x8xf32>
    %87 = tpu.matmul %84, %85, %cst_36 {dimension_numbers = #tpu.dot_dimension_numbers<[1], [1], [0], [0], [0, 0, 1, 0], [], []>} : vector<8x16xf32>, vector<8x16xf32>, vector<8x8xf32> -> vector<8x8xf32>
    %cst_37 = arith.constant -1.000000e+30 : f32
    %88 = vector.broadcast %cst_37 : f32 to vector<8x8xf32>
    %89 = arith.select %12, %87, %88 : vector<8x8xi1>, vector<8x8xf32>
    %cst_38 = arith.constant dense<0xFF800000> : vector<8xf32>
    %90 = vector.multi_reduction <maximumf>, %89, %cst_38 [1] : vector<8x8xf32> to vector<8xf32>
    %91 = vector.shape_cast %90 : vector<8xf32> to vector<8x1xf32>
    %92 = vector.broadcast %91 : vector<8x1xf32> to vector<8x8xf32>
    %93 = arith.subf %89, %92 : vector<8x8xf32>
    %94 = math.exp %93 : vector<8x8xf32>
    %cst_39 = arith.constant dense<0.000000e+00> : vector<8xf32>
    %95 = vector.multi_reduction <add>, %94, %cst_39 [1] : vector<8x8xf32> to vector<8xf32>
    %96 = vector.shape_cast %95 : vector<8xf32> to vector<8x1xf32>
    %97 = vector.broadcast %96 : vector<8x1xf32> to vector<8x8xf32>
    %98 = arith.divf %94, %97 : vector<8x8xf32>
    %cst_40 = arith.constant dense<0.000000e+00> : vector<8x16xf32>
    %99 = tpu.matmul %98, %86, %cst_40 {dimension_numbers = #tpu.dot_dimension_numbers<[1], [0], [0], [1], [0, 0, 1, 1], [], []>} : vector<8x8xf32>, vector<8x16xf32>, vector<8x16xf32> -> vector<8x16xf32>
    %100 = vector.extract_strided_slice %45 {offsets = [0, 48], sizes = [8, 16], strides = [1, 1]} : vector<16x192xf32> to vector<8x16xf32>
    %cst_41 = arith.constant 2.500000e-01 : f32
    %101 = vector.broadcast %cst_41 : f32 to vector<8x16xf32>
    %102 = arith.mulf %100, %101 : vector<8x16xf32>
    %103 = vector.extract_strided_slice %45 {offsets = [0, 112], sizes = [8, 16], strides = [1, 1]} : vector<16x192xf32> to vector<8x16xf32>
    %104 = vector.extract_strided_slice %45 {offsets = [0, 176], sizes = [8, 16], strides = [1, 1]} : vector<16x192xf32> to vector<8x16xf32>
    %cst_42 = arith.constant dense<0.000000e+00> : vector<8x8xf32>
    %105 = tpu.matmul %102, %103, %cst_42 {dimension_numbers = #tpu.dot_dimension_numbers<[1], [1], [0], [0], [0, 0, 1, 0], [], []>} : vector<8x16xf32>, vector<8x16xf32>, vector<8x8xf32> -> vector<8x8xf32>
    %cst_43 = arith.constant -1.000000e+30 : f32
    %106 = vector.broadcast %cst_43 : f32 to vector<8x8xf32>
    %107 = arith.select %12, %105, %106 : vector<8x8xi1>, vector<8x8xf32>
    %cst_44 = arith.constant dense<0xFF800000> : vector<8xf32>
    %108 = vector.multi_reduction <maximumf>, %107, %cst_44 [1] : vector<8x8xf32> to vector<8xf32>
    %109 = vector.shape_cast %108 : vector<8xf32> to vector<8x1xf32>
    %110 = vector.broadcast %109 : vector<8x1xf32> to vector<8x8xf32>
    %111 = arith.subf %107, %110 : vector<8x8xf32>
    %112 = math.exp %111 : vector<8x8xf32>
    %cst_45 = arith.constant dense<0.000000e+00> : vector<8xf32>
    %113 = vector.multi_reduction <add>, %112, %cst_45 [1] : vector<8x8xf32> to vector<8xf32>
    %114 = vector.shape_cast %113 : vector<8xf32> to vector<8x1xf32>
    %115 = vector.broadcast %114 : vector<8x1xf32> to vector<8x8xf32>
    %116 = arith.divf %112, %115 : vector<8x8xf32>
    %cst_46 = arith.constant dense<0.000000e+00> : vector<8x16xf32>
    %117 = tpu.matmul %116, %104, %cst_46 {dimension_numbers = #tpu.dot_dimension_numbers<[1], [0], [0], [1], [0, 0, 1, 1], [], []>} : vector<8x8xf32>, vector<8x16xf32>, vector<8x16xf32> -> vector<8x16xf32>
    %118 = tpu.concatenate %63, %81, %99, %117 in 1 : vector<8x16xf32>, vector<8x16xf32>, vector<8x16xf32>, vector<8x16xf32> -> vector<8x64xf32>
    %119 = vector.extract_strided_slice %45 {offsets = [8, 0], sizes = [8, 16], strides = [1, 1]} : vector<16x192xf32> to vector<8x16xf32>
    %cst_47 = arith.constant 2.500000e-01 : f32
    %120 = vector.broadcast %cst_47 : f32 to vector<8x16xf32>
    %121 = arith.mulf %119, %120 : vector<8x16xf32>
    %122 = vector.extract_strided_slice %45 {offsets = [8, 64], sizes = [8, 16], strides = [1, 1]} : vector<16x192xf32> to vector<8x16xf32>
    %123 = vector.extract_strided_slice %45 {offsets = [8, 128], sizes = [8, 16], strides = [1, 1]} : vector<16x192xf32> to vector<8x16xf32>
    %cst_48 = arith.constant dense<0.000000e+00> : vector<8x8xf32>
    %124 = tpu.matmul %121, %122, %cst_48 {dimension_numbers = #tpu.dot_dimension_numbers<[1], [1], [0], [0], [0, 0, 1, 0], [], []>} : vector<8x16xf32>, vector<8x16xf32>, vector<8x8xf32> -> vector<8x8xf32>
    %cst_49 = arith.constant -1.000000e+30 : f32
    %125 = vector.broadcast %cst_49 : f32 to vector<8x8xf32>
    %126 = arith.select %12, %124, %125 : vector<8x8xi1>, vector<8x8xf32>
    %cst_50 = arith.constant dense<0xFF800000> : vector<8xf32>
    %127 = vector.multi_reduction <maximumf>, %126, %cst_50 [1] : vector<8x8xf32> to vector<8xf32>
    %128 = vector.shape_cast %127 : vector<8xf32> to vector<8x1xf32>
    %129 = vector.broadcast %128 : vector<8x1xf32> to vector<8x8xf32>
    %130 = arith.subf %126, %129 : vector<8x8xf32>
    %131 = math.exp %130 : vector<8x8xf32>
    %cst_51 = arith.constant dense<0.000000e+00> : vector<8xf32>
    %132 = vector.multi_reduction <add>, %131, %cst_51 [1] : vector<8x8xf32> to vector<8xf32>
    %133 = vector.shape_cast %132 : vector<8xf32> to vector<8x1xf32>
    %134 = vector.broadcast %133 : vector<8x1xf32> to vector<8x8xf32>
    %135 = arith.divf %131, %134 : vector<8x8xf32>
    %cst_52 = arith.constant dense<0.000000e+00> : vector<8x16xf32>
    %136 = tpu.matmul %135, %123, %cst_52 {dimension_numbers = #tpu.dot_dimension_numbers<[1], [0], [0], [1], [0, 0, 1, 1], [], []>} : vector<8x8xf32>, vector<8x16xf32>, vector<8x16xf32> -> vector<8x16xf32>
    %137 = vector.extract_strided_slice %45 {offsets = [8, 16], sizes = [8, 16], strides = [1, 1]} : vector<16x192xf32> to vector<8x16xf32>
    %cst_53 = arith.constant 2.500000e-01 : f32
    %138 = vector.broadcast %cst_53 : f32 to vector<8x16xf32>
    %139 = arith.mulf %137, %138 : vector<8x16xf32>
    %140 = vector.extract_strided_slice %45 {offsets = [8, 80], sizes = [8, 16], strides = [1, 1]} : vector<16x192xf32> to vector<8x16xf32>
    %141 = vector.extract_strided_slice %45 {offsets = [8, 144], sizes = [8, 16], strides = [1, 1]} : vector<16x192xf32> to vector<8x16xf32>
    %cst_54 = arith.constant dense<0.000000e+00> : vector<8x8xf32>
    %142 = tpu.matmul %139, %140, %cst_54 {dimension_numbers = #tpu.dot_dimension_numbers<[1], [1], [0], [0], [0, 0, 1, 0], [], []>} : vector<8x16xf32>, vector<8x16xf32>, vector<8x8xf32> -> vector<8x8xf32>
    %cst_55 = arith.constant -1.000000e+30 : f32
    %143 = vector.broadcast %cst_55 : f32 to vector<8x8xf32>
    %144 = arith.select %12, %142, %143 : vector<8x8xi1>, vector<8x8xf32>
    %cst_56 = arith.constant dense<0xFF800000> : vector<8xf32>
    %145 = vector.multi_reduction <maximumf>, %144, %cst_56 [1] : vector<8x8xf32> to vector<8xf32>
    %146 = vector.shape_cast %145 : vector<8xf32> to vector<8x1xf32>
    %147 = vector.broadcast %146 : vector<8x1xf32> to vector<8x8xf32>
    %148 = arith.subf %144, %147 : vector<8x8xf32>
    %149 = math.exp %148 : vector<8x8xf32>
    %cst_57 = arith.constant dense<0.000000e+00> : vector<8xf32>
    %150 = vector.multi_reduction <add>, %149, %cst_57 [1] : vector<8x8xf32> to vector<8xf32>
    %151 = vector.shape_cast %150 : vector<8xf32> to vector<8x1xf32>
    %152 = vector.broadcast %151 : vector<8x1xf32> to vector<8x8xf32>
    %153 = arith.divf %149, %152 : vector<8x8xf32>
    %cst_58 = arith.constant dense<0.000000e+00> : vector<8x16xf32>
    %154 = tpu.matmul %153, %141, %cst_58 {dimension_numbers = #tpu.dot_dimension_numbers<[1], [0], [0], [1], [0, 0, 1, 1], [], []>} : vector<8x8xf32>, vector<8x16xf32>, vector<8x16xf32> -> vector<8x16xf32>
    %155 = vector.extract_strided_slice %45 {offsets = [8, 32], sizes = [8, 16], strides = [1, 1]} : vector<16x192xf32> to vector<8x16xf32>
    %cst_59 = arith.constant 2.500000e-01 : f32
    %156 = vector.broadcast %cst_59 : f32 to vector<8x16xf32>
    %157 = arith.mulf %155, %156 : vector<8x16xf32>
    %158 = vector.extract_strided_slice %45 {offsets = [8, 96], sizes = [8, 16], strides = [1, 1]} : vector<16x192xf32> to vector<8x16xf32>
    %159 = vector.extract_strided_slice %45 {offsets = [8, 160], sizes = [8, 16], strides = [1, 1]} : vector<16x192xf32> to vector<8x16xf32>
    %cst_60 = arith.constant dense<0.000000e+00> : vector<8x8xf32>
    %160 = tpu.matmul %157, %158, %cst_60 {dimension_numbers = #tpu.dot_dimension_numbers<[1], [1], [0], [0], [0, 0, 1, 0], [], []>} : vector<8x16xf32>, vector<8x16xf32>, vector<8x8xf32> -> vector<8x8xf32>
    %cst_61 = arith.constant -1.000000e+30 : f32
    %161 = vector.broadcast %cst_61 : f32 to vector<8x8xf32>
    %162 = arith.select %12, %160, %161 : vector<8x8xi1>, vector<8x8xf32>
    %cst_62 = arith.constant dense<0xFF800000> : vector<8xf32>
    %163 = vector.multi_reduction <maximumf>, %162, %cst_62 [1] : vector<8x8xf32> to vector<8xf32>
    %164 = vector.shape_cast %163 : vector<8xf32> to vector<8x1xf32>
    %165 = vector.broadcast %164 : vector<8x1xf32> to vector<8x8xf32>
    %166 = arith.subf %162, %165 : vector<8x8xf32>
    %167 = math.exp %166 : vector<8x8xf32>
    %cst_63 = arith.constant dense<0.000000e+00> : vector<8xf32>
    %168 = vector.multi_reduction <add>, %167, %cst_63 [1] : vector<8x8xf32> to vector<8xf32>
    %169 = vector.shape_cast %168 : vector<8xf32> to vector<8x1xf32>
    %170 = vector.broadcast %169 : vector<8x1xf32> to vector<8x8xf32>
    %171 = arith.divf %167, %170 : vector<8x8xf32>
    %cst_64 = arith.constant dense<0.000000e+00> : vector<8x16xf32>
    %172 = tpu.matmul %171, %159, %cst_64 {dimension_numbers = #tpu.dot_dimension_numbers<[1], [0], [0], [1], [0, 0, 1, 1], [], []>} : vector<8x8xf32>, vector<8x16xf32>, vector<8x16xf32> -> vector<8x16xf32>
    %173 = vector.extract_strided_slice %45 {offsets = [8, 48], sizes = [8, 16], strides = [1, 1]} : vector<16x192xf32> to vector<8x16xf32>
    %cst_65 = arith.constant 2.500000e-01 : f32
    %174 = vector.broadcast %cst_65 : f32 to vector<8x16xf32>
    %175 = arith.mulf %173, %174 : vector<8x16xf32>
    %176 = vector.extract_strided_slice %45 {offsets = [8, 112], sizes = [8, 16], strides = [1, 1]} : vector<16x192xf32> to vector<8x16xf32>
    %177 = vector.extract_strided_slice %45 {offsets = [8, 176], sizes = [8, 16], strides = [1, 1]} : vector<16x192xf32> to vector<8x16xf32>
    %cst_66 = arith.constant dense<0.000000e+00> : vector<8x8xf32>
    %178 = tpu.matmul %175, %176, %cst_66 {dimension_numbers = #tpu.dot_dimension_numbers<[1], [1], [0], [0], [0, 0, 1, 0], [], []>} : vector<8x16xf32>, vector<8x16xf32>, vector<8x8xf32> -> vector<8x8xf32>
    %cst_67 = arith.constant -1.000000e+30 : f32
    %179 = vector.broadcast %cst_67 : f32 to vector<8x8xf32>
    %180 = arith.select %12, %178, %179 : vector<8x8xi1>, vector<8x8xf32>
    %cst_68 = arith.constant dense<0xFF800000> : vector<8xf32>
    %181 = vector.multi_reduction <maximumf>, %180, %cst_68 [1] : vector<8x8xf32> to vector<8xf32>
    %182 = vector.shape_cast %181 : vector<8xf32> to vector<8x1xf32>
    %183 = vector.broadcast %182 : vector<8x1xf32> to vector<8x8xf32>
    %184 = arith.subf %180, %183 : vector<8x8xf32>
    %185 = math.exp %184 : vector<8x8xf32>
    %cst_69 = arith.constant dense<0.000000e+00> : vector<8xf32>
    %186 = vector.multi_reduction <add>, %185, %cst_69 [1] : vector<8x8xf32> to vector<8xf32>
    %187 = vector.shape_cast %186 : vector<8xf32> to vector<8x1xf32>
    %188 = vector.broadcast %187 : vector<8x1xf32> to vector<8x8xf32>
    %189 = arith.divf %185, %188 : vector<8x8xf32>
    %cst_70 = arith.constant dense<0.000000e+00> : vector<8x16xf32>
    %190 = tpu.matmul %189, %177, %cst_70 {dimension_numbers = #tpu.dot_dimension_numbers<[1], [0], [0], [1], [0, 0, 1, 1], [], []>} : vector<8x8xf32>, vector<8x16xf32>, vector<8x16xf32> -> vector<8x16xf32>
    %191 = tpu.concatenate %136, %154, %172, %190 in 1 : vector<8x16xf32>, vector<8x16xf32>, vector<8x16xf32>, vector<8x16xf32> -> vector<8x64xf32>
    %192 = tpu.concatenate %118, %191 in 0 : vector<8x64xf32>, vector<8x64xf32> -> vector<16x64xf32>
    %c0_71 = arith.constant 0 : index
    %c0_72 = arith.constant 0 : index
    %c0_73 = arith.constant 0 : index
    %193 = vector.load %arg8[%c0_71, %c0_72, %c0_73] : memref<2x64x64xf32, #tpu.memory_space<vmem>>, vector<1x64x64xf32>
    %194 = vector.shape_cast %193 : vector<1x64x64xf32> to vector<64x64xf32>
    %cst_74 = arith.constant dense<0.000000e+00> : vector<16x64xf32>
    %195 = tpu.matmul %192, %194, %cst_74 {dimension_numbers = #tpu.dot_dimension_numbers<[1], [1], [0], [0], [0, 0, 1, 0], [], []>} : vector<16x64xf32>, vector<64x64xf32>, vector<16x64xf32> -> vector<16x64xf32>
    %196 = arith.addf %9, %195 : vector<16x64xf32>
    %c0_75 = arith.constant 0 : index
    %c0_76 = arith.constant 0 : index
    %c0_77 = arith.constant 0 : index
    %197 = vector.load %arg9[%c0_75, %c0_76, %c0_77] : memref<2x1x64xf32, #tpu.memory_space<vmem>>, vector<1x1x64xf32>
    %198 = vector.shape_cast %197 : vector<1x1x64xf32> to vector<1x64xf32>
    %199 = vector.broadcast %198 : vector<1x64xf32> to vector<16x64xf32>
    %200 = arith.addf %196, %199 : vector<16x64xf32>
    %c0_78 = arith.constant 0 : index
    %c0_79 = arith.constant 0 : index
    %c0_80 = arith.constant 0 : index
    %201 = vector.load %arg10[%c0_78, %c0_79, %c0_80] : memref<2x1x64xf32, #tpu.memory_space<vmem>>, vector<1x1x64xf32>
    %202 = vector.shape_cast %201 : vector<1x1x64xf32> to vector<1x64xf32>
    %c0_81 = arith.constant 0 : index
    %c0_82 = arith.constant 0 : index
    %c0_83 = arith.constant 0 : index
    %203 = vector.load %arg11[%c0_81, %c0_82, %c0_83] : memref<2x1x64xf32, #tpu.memory_space<vmem>>, vector<1x1x64xf32>
    %204 = vector.shape_cast %203 : vector<1x1x64xf32> to vector<1x64xf32>
    %cst_84 = arith.constant dense<0.000000e+00> : vector<16xf32>
    %205 = vector.multi_reduction <add>, %200, %cst_84 [1] : vector<16x64xf32> to vector<16xf32>
    %206 = vector.shape_cast %205 : vector<16xf32> to vector<16x1xf32>
    %cst_85 = arith.constant 6.400000e+01 : f32
    %207 = vector.broadcast %cst_85 : f32 to vector<16x1xf32>
    %208 = arith.divf %206, %207 : vector<16x1xf32>
    %209 = vector.broadcast %208 : vector<16x1xf32> to vector<16x64xf32>
    %210 = arith.subf %200, %209 : vector<16x64xf32>
    %211 = arith.mulf %210, %210 : vector<16x64xf32>
    %cst_86 = arith.constant dense<0.000000e+00> : vector<16xf32>
    %212 = vector.multi_reduction <add>, %211, %cst_86 [1] : vector<16x64xf32> to vector<16xf32>
    %213 = vector.shape_cast %212 : vector<16xf32> to vector<16x1xf32>
    %cst_87 = arith.constant 6.400000e+01 : f32
    %214 = vector.broadcast %cst_87 : f32 to vector<16x1xf32>
    %215 = arith.divf %213, %214 : vector<16x1xf32>
    %216 = vector.broadcast %208 : vector<16x1xf32> to vector<16x64xf32>
    %217 = arith.subf %200, %216 : vector<16x64xf32>
    %cst_88 = arith.constant 9.99999974E-6 : f32
    %218 = vector.broadcast %cst_88 : f32 to vector<16x1xf32>
    %219 = arith.addf %215, %218 : vector<16x1xf32>
    %220 = math.rsqrt %219 : vector<16x1xf32>
    %221 = vector.broadcast %220 : vector<16x1xf32> to vector<16x64xf32>
    %222 = arith.mulf %217, %221 : vector<16x64xf32>
    %223 = vector.broadcast %202 : vector<1x64xf32> to vector<16x64xf32>
    %224 = arith.mulf %222, %223 : vector<16x64xf32>
    %225 = vector.broadcast %204 : vector<1x64xf32> to vector<16x64xf32>
    %226 = arith.addf %224, %225 : vector<16x64xf32>
    %c0_89 = arith.constant 0 : index
    %c0_90 = arith.constant 0 : index
    %c0_91 = arith.constant 0 : index
    %227 = vector.load %arg12[%c0_89, %c0_90, %c0_91] : memref<2x256x64xf32, #tpu.memory_space<vmem>>, vector<1x256x64xf32>
    %228 = vector.shape_cast %227 : vector<1x256x64xf32> to vector<256x64xf32>
    %cst_92 = arith.constant dense<0.000000e+00> : vector<16x256xf32>
    %229 = tpu.matmul %226, %228, %cst_92 {dimension_numbers = #tpu.dot_dimension_numbers<[1], [1], [0], [0], [0, 0, 1, 0], [], []>} : vector<16x64xf32>, vector<256x64xf32>, vector<16x256xf32> -> vector<16x256xf32>
    %c0_93 = arith.constant 0 : index
    %c0_94 = arith.constant 0 : index
    %c0_95 = arith.constant 0 : index
    %230 = vector.load %arg13[%c0_93, %c0_94, %c0_95] : memref<2x1x256xf32, #tpu.memory_space<vmem>>, vector<1x1x256xf32>
    %231 = vector.shape_cast %230 : vector<1x1x256xf32> to vector<1x256xf32>
    %232 = vector.broadcast %231 : vector<1x256xf32> to vector<16x256xf32>
    %233 = arith.addf %229, %232 : vector<16x256xf32>
    %cst_96 = arith.constant 5.000000e-01 : f32
    %234 = vector.broadcast %cst_96 : f32 to vector<16x256xf32>
    %235 = arith.mulf %234, %233 : vector<16x256xf32>
    %cst_97 = arith.constant 0.707106769 : f32
    %236 = vector.broadcast %cst_97 : f32 to vector<16x256xf32>
    %237 = arith.mulf %233, %236 : vector<16x256xf32>
    %cst_98 = arith.constant 0.000000e+00 : f32
    %238 = vector.broadcast %cst_98 : f32 to vector<16x256xf32>
    %239 = arith.cmpf oge, %237, %238 : vector<16x256xf32>
    %cst_99 = arith.constant 1.000000e+00 : f32
    %cst_100 = arith.constant -1.000000e+00 : f32
    %240 = vector.broadcast %cst_99 : f32 to vector<16x256xf32>
    %241 = vector.broadcast %cst_100 : f32 to vector<16x256xf32>
    %242 = arith.select %239, %240, %241 : vector<16x256xi1>, vector<16x256xf32>
    %243 = math.absf %237 : vector<16x256xf32>
    %cst_101 = arith.constant 0.327591091 : f32
    %244 = vector.broadcast %cst_101 : f32 to vector<16x256xf32>
    %245 = arith.mulf %244, %243 : vector<16x256xf32>
    %cst_102 = arith.constant 1.000000e+00 : f32
    %246 = vector.broadcast %cst_102 : f32 to vector<16x256xf32>
    %247 = arith.addf %246, %245 : vector<16x256xf32>
    %cst_103 = arith.constant 1.000000e+00 : f32
    %248 = vector.broadcast %cst_103 : f32 to vector<16x256xf32>
    %249 = arith.divf %248, %247 : vector<16x256xf32>
    %cst_104 = arith.constant 1.06140542 : f32
    %250 = vector.broadcast %cst_104 : f32 to vector<16x256xf32>
    %251 = arith.mulf %250, %249 : vector<16x256xf32>
    %cst_105 = arith.constant -1.45315206 : f32
    %252 = vector.broadcast %cst_105 : f32 to vector<16x256xf32>
    %253 = arith.addf %251, %252 : vector<16x256xf32>
    %254 = arith.mulf %253, %249 : vector<16x256xf32>
    %cst_106 = arith.constant 1.42141378 : f32
    %255 = vector.broadcast %cst_106 : f32 to vector<16x256xf32>
    %256 = arith.addf %254, %255 : vector<16x256xf32>
    %257 = arith.mulf %256, %249 : vector<16x256xf32>
    %cst_107 = arith.constant -0.284496725 : f32
    %258 = vector.broadcast %cst_107 : f32 to vector<16x256xf32>
    %259 = arith.addf %257, %258 : vector<16x256xf32>
    %260 = arith.mulf %259, %249 : vector<16x256xf32>
    %cst_108 = arith.constant 0.254829586 : f32
    %261 = vector.broadcast %cst_108 : f32 to vector<16x256xf32>
    %262 = arith.addf %260, %261 : vector<16x256xf32>
    %263 = arith.mulf %262, %249 : vector<16x256xf32>
    %cst_109 = arith.constant 0.000000e+00 : f32
    %264 = vector.broadcast %cst_109 : f32 to vector<16x256xf32>
    %265 = arith.subf %264, %243 : vector<16x256xf32>
    %266 = arith.mulf %265, %243 : vector<16x256xf32>
    %267 = math.exp %266 : vector<16x256xf32>
    %268 = arith.mulf %263, %267 : vector<16x256xf32>
    %cst_110 = arith.constant 1.000000e+00 : f32
    %269 = vector.broadcast %cst_110 : f32 to vector<16x256xf32>
    %270 = arith.subf %269, %268 : vector<16x256xf32>
    %271 = arith.mulf %242, %270 : vector<16x256xf32>
    %cst_111 = arith.constant 1.000000e+00 : f32
    %272 = vector.broadcast %cst_111 : f32 to vector<16x256xf32>
    %273 = arith.addf %272, %271 : vector<16x256xf32>
    %274 = arith.mulf %235, %273 : vector<16x256xf32>
    %c0_112 = arith.constant 0 : index
    %c0_113 = arith.constant 0 : index
    %c0_114 = arith.constant 0 : index
    %275 = vector.load %arg14[%c0_112, %c0_113, %c0_114] : memref<2x64x256xf32, #tpu.memory_space<vmem>>, vector<1x64x256xf32>
    %276 = vector.shape_cast %275 : vector<1x64x256xf32> to vector<64x256xf32>
    %cst_115 = arith.constant dense<0.000000e+00> : vector<16x64xf32>
    %277 = tpu.matmul %274, %276, %cst_115 {dimension_numbers = #tpu.dot_dimension_numbers<[1], [1], [0], [0], [0, 0, 1, 0], [], []>} : vector<16x256xf32>, vector<64x256xf32>, vector<16x64xf32> -> vector<16x64xf32>
    %278 = arith.addf %200, %277 : vector<16x64xf32>
    %c0_116 = arith.constant 0 : index
    %c0_117 = arith.constant 0 : index
    %c0_118 = arith.constant 0 : index
    %279 = vector.load %arg15[%c0_116, %c0_117, %c0_118] : memref<2x1x64xf32, #tpu.memory_space<vmem>>, vector<1x1x64xf32>
    %280 = vector.shape_cast %279 : vector<1x1x64xf32> to vector<1x64xf32>
    %281 = vector.broadcast %280 : vector<1x64xf32> to vector<16x64xf32>
    %282 = arith.addf %278, %281 : vector<16x64xf32>
    %c1 = arith.constant 1 : index
    %c0_119 = arith.constant 0 : index
    %c0_120 = arith.constant 0 : index
    %283 = vector.load %arg4[%c1, %c0_119, %c0_120] : memref<2x1x64xf32, #tpu.memory_space<vmem>>, vector<1x1x64xf32>
    %284 = vector.shape_cast %283 : vector<1x1x64xf32> to vector<1x64xf32>
    %c1_121 = arith.constant 1 : index
    %c0_122 = arith.constant 0 : index
    %c0_123 = arith.constant 0 : index
    %285 = vector.load %arg5[%c1_121, %c0_122, %c0_123] : memref<2x1x64xf32, #tpu.memory_space<vmem>>, vector<1x1x64xf32>
    %286 = vector.shape_cast %285 : vector<1x1x64xf32> to vector<1x64xf32>
    %cst_124 = arith.constant dense<0.000000e+00> : vector<16xf32>
    %287 = vector.multi_reduction <add>, %282, %cst_124 [1] : vector<16x64xf32> to vector<16xf32>
    %288 = vector.shape_cast %287 : vector<16xf32> to vector<16x1xf32>
    %cst_125 = arith.constant 6.400000e+01 : f32
    %289 = vector.broadcast %cst_125 : f32 to vector<16x1xf32>
    %290 = arith.divf %288, %289 : vector<16x1xf32>
    %291 = vector.broadcast %290 : vector<16x1xf32> to vector<16x64xf32>
    %292 = arith.subf %282, %291 : vector<16x64xf32>
    %293 = arith.mulf %292, %292 : vector<16x64xf32>
    %cst_126 = arith.constant dense<0.000000e+00> : vector<16xf32>
    %294 = vector.multi_reduction <add>, %293, %cst_126 [1] : vector<16x64xf32> to vector<16xf32>
    %295 = vector.shape_cast %294 : vector<16xf32> to vector<16x1xf32>
    %cst_127 = arith.constant 6.400000e+01 : f32
    %296 = vector.broadcast %cst_127 : f32 to vector<16x1xf32>
    %297 = arith.divf %295, %296 : vector<16x1xf32>
    %298 = vector.broadcast %290 : vector<16x1xf32> to vector<16x64xf32>
    %299 = arith.subf %282, %298 : vector<16x64xf32>
    %cst_128 = arith.constant 9.99999974E-6 : f32
    %300 = vector.broadcast %cst_128 : f32 to vector<16x1xf32>
    %301 = arith.addf %297, %300 : vector<16x1xf32>
    %302 = math.rsqrt %301 : vector<16x1xf32>
    %303 = vector.broadcast %302 : vector<16x1xf32> to vector<16x64xf32>
    %304 = arith.mulf %299, %303 : vector<16x64xf32>
    %305 = vector.broadcast %284 : vector<1x64xf32> to vector<16x64xf32>
    %306 = arith.mulf %304, %305 : vector<16x64xf32>
    %307 = vector.broadcast %286 : vector<1x64xf32> to vector<16x64xf32>
    %308 = arith.addf %306, %307 : vector<16x64xf32>
    %c1_129 = arith.constant 1 : index
    %c0_130 = arith.constant 0 : index
    %c0_131 = arith.constant 0 : index
    %309 = vector.load %arg6[%c1_129, %c0_130, %c0_131] : memref<2x192x64xf32, #tpu.memory_space<vmem>>, vector<1x192x64xf32>
    %310 = vector.shape_cast %309 : vector<1x192x64xf32> to vector<192x64xf32>
    %cst_132 = arith.constant dense<0.000000e+00> : vector<16x192xf32>
    %311 = tpu.matmul %308, %310, %cst_132 {dimension_numbers = #tpu.dot_dimension_numbers<[1], [1], [0], [0], [0, 0, 1, 0], [], []>} : vector<16x64xf32>, vector<192x64xf32>, vector<16x192xf32> -> vector<16x192xf32>
    %c1_133 = arith.constant 1 : index
    %c0_134 = arith.constant 0 : index
    %c0_135 = arith.constant 0 : index
    %312 = vector.load %arg7[%c1_133, %c0_134, %c0_135] : memref<2x1x192xf32, #tpu.memory_space<vmem>>, vector<1x1x192xf32>
    %313 = vector.shape_cast %312 : vector<1x1x192xf32> to vector<1x192xf32>
    %314 = vector.broadcast %313 : vector<1x192xf32> to vector<16x192xf32>
    %315 = arith.addf %311, %314 : vector<16x192xf32>
    %316 = vector.extract_strided_slice %315 {offsets = [0, 0], sizes = [8, 16], strides = [1, 1]} : vector<16x192xf32> to vector<8x16xf32>
    %cst_136 = arith.constant 2.500000e-01 : f32
    %317 = vector.broadcast %cst_136 : f32 to vector<8x16xf32>
    %318 = arith.mulf %316, %317 : vector<8x16xf32>
    %319 = vector.extract_strided_slice %315 {offsets = [0, 64], sizes = [8, 16], strides = [1, 1]} : vector<16x192xf32> to vector<8x16xf32>
    %320 = vector.extract_strided_slice %315 {offsets = [0, 128], sizes = [8, 16], strides = [1, 1]} : vector<16x192xf32> to vector<8x16xf32>
    %cst_137 = arith.constant dense<0.000000e+00> : vector<8x8xf32>
    %321 = tpu.matmul %318, %319, %cst_137 {dimension_numbers = #tpu.dot_dimension_numbers<[1], [1], [0], [0], [0, 0, 1, 0], [], []>} : vector<8x16xf32>, vector<8x16xf32>, vector<8x8xf32> -> vector<8x8xf32>
    %cst_138 = arith.constant -1.000000e+30 : f32
    %322 = vector.broadcast %cst_138 : f32 to vector<8x8xf32>
    %323 = arith.select %12, %321, %322 : vector<8x8xi1>, vector<8x8xf32>
    %cst_139 = arith.constant dense<0xFF800000> : vector<8xf32>
    %324 = vector.multi_reduction <maximumf>, %323, %cst_139 [1] : vector<8x8xf32> to vector<8xf32>
    %325 = vector.shape_cast %324 : vector<8xf32> to vector<8x1xf32>
    %326 = vector.broadcast %325 : vector<8x1xf32> to vector<8x8xf32>
    %327 = arith.subf %323, %326 : vector<8x8xf32>
    %328 = math.exp %327 : vector<8x8xf32>
    %cst_140 = arith.constant dense<0.000000e+00> : vector<8xf32>
    %329 = vector.multi_reduction <add>, %328, %cst_140 [1] : vector<8x8xf32> to vector<8xf32>
    %330 = vector.shape_cast %329 : vector<8xf32> to vector<8x1xf32>
    %331 = vector.broadcast %330 : vector<8x1xf32> to vector<8x8xf32>
    %332 = arith.divf %328, %331 : vector<8x8xf32>
    %cst_141 = arith.constant dense<0.000000e+00> : vector<8x16xf32>
    %333 = tpu.matmul %332, %320, %cst_141 {dimension_numbers = #tpu.dot_dimension_numbers<[1], [0], [0], [1], [0, 0, 1, 1], [], []>} : vector<8x8xf32>, vector<8x16xf32>, vector<8x16xf32> -> vector<8x16xf32>
    %334 = vector.extract_strided_slice %315 {offsets = [0, 16], sizes = [8, 16], strides = [1, 1]} : vector<16x192xf32> to vector<8x16xf32>
    %cst_142 = arith.constant 2.500000e-01 : f32
    %335 = vector.broadcast %cst_142 : f32 to vector<8x16xf32>
    %336 = arith.mulf %334, %335 : vector<8x16xf32>
    %337 = vector.extract_strided_slice %315 {offsets = [0, 80], sizes = [8, 16], strides = [1, 1]} : vector<16x192xf32> to vector<8x16xf32>
    %338 = vector.extract_strided_slice %315 {offsets = [0, 144], sizes = [8, 16], strides = [1, 1]} : vector<16x192xf32> to vector<8x16xf32>
    %cst_143 = arith.constant dense<0.000000e+00> : vector<8x8xf32>
    %339 = tpu.matmul %336, %337, %cst_143 {dimension_numbers = #tpu.dot_dimension_numbers<[1], [1], [0], [0], [0, 0, 1, 0], [], []>} : vector<8x16xf32>, vector<8x16xf32>, vector<8x8xf32> -> vector<8x8xf32>
    %cst_144 = arith.constant -1.000000e+30 : f32
    %340 = vector.broadcast %cst_144 : f32 to vector<8x8xf32>
    %341 = arith.select %12, %339, %340 : vector<8x8xi1>, vector<8x8xf32>
    %cst_145 = arith.constant dense<0xFF800000> : vector<8xf32>
    %342 = vector.multi_reduction <maximumf>, %341, %cst_145 [1] : vector<8x8xf32> to vector<8xf32>
    %343 = vector.shape_cast %342 : vector<8xf32> to vector<8x1xf32>
    %344 = vector.broadcast %343 : vector<8x1xf32> to vector<8x8xf32>
    %345 = arith.subf %341, %344 : vector<8x8xf32>
    %346 = math.exp %345 : vector<8x8xf32>
    %cst_146 = arith.constant dense<0.000000e+00> : vector<8xf32>
    %347 = vector.multi_reduction <add>, %346, %cst_146 [1] : vector<8x8xf32> to vector<8xf32>
    %348 = vector.shape_cast %347 : vector<8xf32> to vector<8x1xf32>
    %349 = vector.broadcast %348 : vector<8x1xf32> to vector<8x8xf32>
    %350 = arith.divf %346, %349 : vector<8x8xf32>
    %cst_147 = arith.constant dense<0.000000e+00> : vector<8x16xf32>
    %351 = tpu.matmul %350, %338, %cst_147 {dimension_numbers = #tpu.dot_dimension_numbers<[1], [0], [0], [1], [0, 0, 1, 1], [], []>} : vector<8x8xf32>, vector<8x16xf32>, vector<8x16xf32> -> vector<8x16xf32>
    %352 = vector.extract_strided_slice %315 {offsets = [0, 32], sizes = [8, 16], strides = [1, 1]} : vector<16x192xf32> to vector<8x16xf32>
    %cst_148 = arith.constant 2.500000e-01 : f32
    %353 = vector.broadcast %cst_148 : f32 to vector<8x16xf32>
    %354 = arith.mulf %352, %353 : vector<8x16xf32>
    %355 = vector.extract_strided_slice %315 {offsets = [0, 96], sizes = [8, 16], strides = [1, 1]} : vector<16x192xf32> to vector<8x16xf32>
    %356 = vector.extract_strided_slice %315 {offsets = [0, 160], sizes = [8, 16], strides = [1, 1]} : vector<16x192xf32> to vector<8x16xf32>
    %cst_149 = arith.constant dense<0.000000e+00> : vector<8x8xf32>
    %357 = tpu.matmul %354, %355, %cst_149 {dimension_numbers = #tpu.dot_dimension_numbers<[1], [1], [0], [0], [0, 0, 1, 0], [], []>} : vector<8x16xf32>, vector<8x16xf32>, vector<8x8xf32> -> vector<8x8xf32>
    %cst_150 = arith.constant -1.000000e+30 : f32
    %358 = vector.broadcast %cst_150 : f32 to vector<8x8xf32>
    %359 = arith.select %12, %357, %358 : vector<8x8xi1>, vector<8x8xf32>
    %cst_151 = arith.constant dense<0xFF800000> : vector<8xf32>
    %360 = vector.multi_reduction <maximumf>, %359, %cst_151 [1] : vector<8x8xf32> to vector<8xf32>
    %361 = vector.shape_cast %360 : vector<8xf32> to vector<8x1xf32>
    %362 = vector.broadcast %361 : vector<8x1xf32> to vector<8x8xf32>
    %363 = arith.subf %359, %362 : vector<8x8xf32>
    %364 = math.exp %363 : vector<8x8xf32>
    %cst_152 = arith.constant dense<0.000000e+00> : vector<8xf32>
    %365 = vector.multi_reduction <add>, %364, %cst_152 [1] : vector<8x8xf32> to vector<8xf32>
    %366 = vector.shape_cast %365 : vector<8xf32> to vector<8x1xf32>
    %367 = vector.broadcast %366 : vector<8x1xf32> to vector<8x8xf32>
    %368 = arith.divf %364, %367 : vector<8x8xf32>
    %cst_153 = arith.constant dense<0.000000e+00> : vector<8x16xf32>
    %369 = tpu.matmul %368, %356, %cst_153 {dimension_numbers = #tpu.dot_dimension_numbers<[1], [0], [0], [1], [0, 0, 1, 1], [], []>} : vector<8x8xf32>, vector<8x16xf32>, vector<8x16xf32> -> vector<8x16xf32>
    %370 = vector.extract_strided_slice %315 {offsets = [0, 48], sizes = [8, 16], strides = [1, 1]} : vector<16x192xf32> to vector<8x16xf32>
    %cst_154 = arith.constant 2.500000e-01 : f32
    %371 = vector.broadcast %cst_154 : f32 to vector<8x16xf32>
    %372 = arith.mulf %370, %371 : vector<8x16xf32>
    %373 = vector.extract_strided_slice %315 {offsets = [0, 112], sizes = [8, 16], strides = [1, 1]} : vector<16x192xf32> to vector<8x16xf32>
    %374 = vector.extract_strided_slice %315 {offsets = [0, 176], sizes = [8, 16], strides = [1, 1]} : vector<16x192xf32> to vector<8x16xf32>
    %cst_155 = arith.constant dense<0.000000e+00> : vector<8x8xf32>
    %375 = tpu.matmul %372, %373, %cst_155 {dimension_numbers = #tpu.dot_dimension_numbers<[1], [1], [0], [0], [0, 0, 1, 0], [], []>} : vector<8x16xf32>, vector<8x16xf32>, vector<8x8xf32> -> vector<8x8xf32>
    %cst_156 = arith.constant -1.000000e+30 : f32
    %376 = vector.broadcast %cst_156 : f32 to vector<8x8xf32>
    %377 = arith.select %12, %375, %376 : vector<8x8xi1>, vector<8x8xf32>
    %cst_157 = arith.constant dense<0xFF800000> : vector<8xf32>
    %378 = vector.multi_reduction <maximumf>, %377, %cst_157 [1] : vector<8x8xf32> to vector<8xf32>
    %379 = vector.shape_cast %378 : vector<8xf32> to vector<8x1xf32>
    %380 = vector.broadcast %379 : vector<8x1xf32> to vector<8x8xf32>
    %381 = arith.subf %377, %380 : vector<8x8xf32>
    %382 = math.exp %381 : vector<8x8xf32>
    %cst_158 = arith.constant dense<0.000000e+00> : vector<8xf32>
    %383 = vector.multi_reduction <add>, %382, %cst_158 [1] : vector<8x8xf32> to vector<8xf32>
    %384 = vector.shape_cast %383 : vector<8xf32> to vector<8x1xf32>
    %385 = vector.broadcast %384 : vector<8x1xf32> to vector<8x8xf32>
    %386 = arith.divf %382, %385 : vector<8x8xf32>
    %cst_159 = arith.constant dense<0.000000e+00> : vector<8x16xf32>
    %387 = tpu.matmul %386, %374, %cst_159 {dimension_numbers = #tpu.dot_dimension_numbers<[1], [0], [0], [1], [0, 0, 1, 1], [], []>} : vector<8x8xf32>, vector<8x16xf32>, vector<8x16xf32> -> vector<8x16xf32>
    %388 = tpu.concatenate %333, %351, %369, %387 in 1 : vector<8x16xf32>, vector<8x16xf32>, vector<8x16xf32>, vector<8x16xf32> -> vector<8x64xf32>
    %389 = vector.extract_strided_slice %315 {offsets = [8, 0], sizes = [8, 16], strides = [1, 1]} : vector<16x192xf32> to vector<8x16xf32>
    %cst_160 = arith.constant 2.500000e-01 : f32
    %390 = vector.broadcast %cst_160 : f32 to vector<8x16xf32>
    %391 = arith.mulf %389, %390 : vector<8x16xf32>
    %392 = vector.extract_strided_slice %315 {offsets = [8, 64], sizes = [8, 16], strides = [1, 1]} : vector<16x192xf32> to vector<8x16xf32>
    %393 = vector.extract_strided_slice %315 {offsets = [8, 128], sizes = [8, 16], strides = [1, 1]} : vector<16x192xf32> to vector<8x16xf32>
    %cst_161 = arith.constant dense<0.000000e+00> : vector<8x8xf32>
    %394 = tpu.matmul %391, %392, %cst_161 {dimension_numbers = #tpu.dot_dimension_numbers<[1], [1], [0], [0], [0, 0, 1, 0], [], []>} : vector<8x16xf32>, vector<8x16xf32>, vector<8x8xf32> -> vector<8x8xf32>
    %cst_162 = arith.constant -1.000000e+30 : f32
    %395 = vector.broadcast %cst_162 : f32 to vector<8x8xf32>
    %396 = arith.select %12, %394, %395 : vector<8x8xi1>, vector<8x8xf32>
    %cst_163 = arith.constant dense<0xFF800000> : vector<8xf32>
    %397 = vector.multi_reduction <maximumf>, %396, %cst_163 [1] : vector<8x8xf32> to vector<8xf32>
    %398 = vector.shape_cast %397 : vector<8xf32> to vector<8x1xf32>
    %399 = vector.broadcast %398 : vector<8x1xf32> to vector<8x8xf32>
    %400 = arith.subf %396, %399 : vector<8x8xf32>
    %401 = math.exp %400 : vector<8x8xf32>
    %cst_164 = arith.constant dense<0.000000e+00> : vector<8xf32>
    %402 = vector.multi_reduction <add>, %401, %cst_164 [1] : vector<8x8xf32> to vector<8xf32>
    %403 = vector.shape_cast %402 : vector<8xf32> to vector<8x1xf32>
    %404 = vector.broadcast %403 : vector<8x1xf32> to vector<8x8xf32>
    %405 = arith.divf %401, %404 : vector<8x8xf32>
    %cst_165 = arith.constant dense<0.000000e+00> : vector<8x16xf32>
    %406 = tpu.matmul %405, %393, %cst_165 {dimension_numbers = #tpu.dot_dimension_numbers<[1], [0], [0], [1], [0, 0, 1, 1], [], []>} : vector<8x8xf32>, vector<8x16xf32>, vector<8x16xf32> -> vector<8x16xf32>
    %407 = vector.extract_strided_slice %315 {offsets = [8, 16], sizes = [8, 16], strides = [1, 1]} : vector<16x192xf32> to vector<8x16xf32>
    %cst_166 = arith.constant 2.500000e-01 : f32
    %408 = vector.broadcast %cst_166 : f32 to vector<8x16xf32>
    %409 = arith.mulf %407, %408 : vector<8x16xf32>
    %410 = vector.extract_strided_slice %315 {offsets = [8, 80], sizes = [8, 16], strides = [1, 1]} : vector<16x192xf32> to vector<8x16xf32>
    %411 = vector.extract_strided_slice %315 {offsets = [8, 144], sizes = [8, 16], strides = [1, 1]} : vector<16x192xf32> to vector<8x16xf32>
    %cst_167 = arith.constant dense<0.000000e+00> : vector<8x8xf32>
    %412 = tpu.matmul %409, %410, %cst_167 {dimension_numbers = #tpu.dot_dimension_numbers<[1], [1], [0], [0], [0, 0, 1, 0], [], []>} : vector<8x16xf32>, vector<8x16xf32>, vector<8x8xf32> -> vector<8x8xf32>
    %cst_168 = arith.constant -1.000000e+30 : f32
    %413 = vector.broadcast %cst_168 : f32 to vector<8x8xf32>
    %414 = arith.select %12, %412, %413 : vector<8x8xi1>, vector<8x8xf32>
    %cst_169 = arith.constant dense<0xFF800000> : vector<8xf32>
    %415 = vector.multi_reduction <maximumf>, %414, %cst_169 [1] : vector<8x8xf32> to vector<8xf32>
    %416 = vector.shape_cast %415 : vector<8xf32> to vector<8x1xf32>
    %417 = vector.broadcast %416 : vector<8x1xf32> to vector<8x8xf32>
    %418 = arith.subf %414, %417 : vector<8x8xf32>
    %419 = math.exp %418 : vector<8x8xf32>
    %cst_170 = arith.constant dense<0.000000e+00> : vector<8xf32>
    %420 = vector.multi_reduction <add>, %419, %cst_170 [1] : vector<8x8xf32> to vector<8xf32>
    %421 = vector.shape_cast %420 : vector<8xf32> to vector<8x1xf32>
    %422 = vector.broadcast %421 : vector<8x1xf32> to vector<8x8xf32>
    %423 = arith.divf %419, %422 : vector<8x8xf32>
    %cst_171 = arith.constant dense<0.000000e+00> : vector<8x16xf32>
    %424 = tpu.matmul %423, %411, %cst_171 {dimension_numbers = #tpu.dot_dimension_numbers<[1], [0], [0], [1], [0, 0, 1, 1], [], []>} : vector<8x8xf32>, vector<8x16xf32>, vector<8x16xf32> -> vector<8x16xf32>
    %425 = vector.extract_strided_slice %315 {offsets = [8, 32], sizes = [8, 16], strides = [1, 1]} : vector<16x192xf32> to vector<8x16xf32>
    %cst_172 = arith.constant 2.500000e-01 : f32
    %426 = vector.broadcast %cst_172 : f32 to vector<8x16xf32>
    %427 = arith.mulf %425, %426 : vector<8x16xf32>
    %428 = vector.extract_strided_slice %315 {offsets = [8, 96], sizes = [8, 16], strides = [1, 1]} : vector<16x192xf32> to vector<8x16xf32>
    %429 = vector.extract_strided_slice %315 {offsets = [8, 160], sizes = [8, 16], strides = [1, 1]} : vector<16x192xf32> to vector<8x16xf32>
    %cst_173 = arith.constant dense<0.000000e+00> : vector<8x8xf32>
    %430 = tpu.matmul %427, %428, %cst_173 {dimension_numbers = #tpu.dot_dimension_numbers<[1], [1], [0], [0], [0, 0, 1, 0], [], []>} : vector<8x16xf32>, vector<8x16xf32>, vector<8x8xf32> -> vector<8x8xf32>
    %cst_174 = arith.constant -1.000000e+30 : f32
    %431 = vector.broadcast %cst_174 : f32 to vector<8x8xf32>
    %432 = arith.select %12, %430, %431 : vector<8x8xi1>, vector<8x8xf32>
    %cst_175 = arith.constant dense<0xFF800000> : vector<8xf32>
    %433 = vector.multi_reduction <maximumf>, %432, %cst_175 [1] : vector<8x8xf32> to vector<8xf32>
    %434 = vector.shape_cast %433 : vector<8xf32> to vector<8x1xf32>
    %435 = vector.broadcast %434 : vector<8x1xf32> to vector<8x8xf32>
    %436 = arith.subf %432, %435 : vector<8x8xf32>
    %437 = math.exp %436 : vector<8x8xf32>
    %cst_176 = arith.constant dense<0.000000e+00> : vector<8xf32>
    %438 = vector.multi_reduction <add>, %437, %cst_176 [1] : vector<8x8xf32> to vector<8xf32>
    %439 = vector.shape_cast %438 : vector<8xf32> to vector<8x1xf32>
    %440 = vector.broadcast %439 : vector<8x1xf32> to vector<8x8xf32>
    %441 = arith.divf %437, %440 : vector<8x8xf32>
    %cst_177 = arith.constant dense<0.000000e+00> : vector<8x16xf32>
    %442 = tpu.matmul %441, %429, %cst_177 {dimension_numbers = #tpu.dot_dimension_numbers<[1], [0], [0], [1], [0, 0, 1, 1], [], []>} : vector<8x8xf32>, vector<8x16xf32>, vector<8x16xf32> -> vector<8x16xf32>
    %443 = vector.extract_strided_slice %315 {offsets = [8, 48], sizes = [8, 16], strides = [1, 1]} : vector<16x192xf32> to vector<8x16xf32>
    %cst_178 = arith.constant 2.500000e-01 : f32
    %444 = vector.broadcast %cst_178 : f32 to vector<8x16xf32>
    %445 = arith.mulf %443, %444 : vector<8x16xf32>
    %446 = vector.extract_strided_slice %315 {offsets = [8, 112], sizes = [8, 16], strides = [1, 1]} : vector<16x192xf32> to vector<8x16xf32>
    %447 = vector.extract_strided_slice %315 {offsets = [8, 176], sizes = [8, 16], strides = [1, 1]} : vector<16x192xf32> to vector<8x16xf32>
    %cst_179 = arith.constant dense<0.000000e+00> : vector<8x8xf32>
    %448 = tpu.matmul %445, %446, %cst_179 {dimension_numbers = #tpu.dot_dimension_numbers<[1], [1], [0], [0], [0, 0, 1, 0], [], []>} : vector<8x16xf32>, vector<8x16xf32>, vector<8x8xf32> -> vector<8x8xf32>
    %cst_180 = arith.constant -1.000000e+30 : f32
    %449 = vector.broadcast %cst_180 : f32 to vector<8x8xf32>
    %450 = arith.select %12, %448, %449 : vector<8x8xi1>, vector<8x8xf32>
    %cst_181 = arith.constant dense<0xFF800000> : vector<8xf32>
    %451 = vector.multi_reduction <maximumf>, %450, %cst_181 [1] : vector<8x8xf32> to vector<8xf32>
    %452 = vector.shape_cast %451 : vector<8xf32> to vector<8x1xf32>
    %453 = vector.broadcast %452 : vector<8x1xf32> to vector<8x8xf32>
    %454 = arith.subf %450, %453 : vector<8x8xf32>
    %455 = math.exp %454 : vector<8x8xf32>
    %cst_182 = arith.constant dense<0.000000e+00> : vector<8xf32>
    %456 = vector.multi_reduction <add>, %455, %cst_182 [1] : vector<8x8xf32> to vector<8xf32>
    %457 = vector.shape_cast %456 : vector<8xf32> to vector<8x1xf32>
    %458 = vector.broadcast %457 : vector<8x1xf32> to vector<8x8xf32>
    %459 = arith.divf %455, %458 : vector<8x8xf32>
    %cst_183 = arith.constant dense<0.000000e+00> : vector<8x16xf32>
    %460 = tpu.matmul %459, %447, %cst_183 {dimension_numbers = #tpu.dot_dimension_numbers<[1], [0], [0], [1], [0, 0, 1, 1], [], []>} : vector<8x8xf32>, vector<8x16xf32>, vector<8x16xf32> -> vector<8x16xf32>
    %461 = tpu.concatenate %406, %424, %442, %460 in 1 : vector<8x16xf32>, vector<8x16xf32>, vector<8x16xf32>, vector<8x16xf32> -> vector<8x64xf32>
    %462 = tpu.concatenate %388, %461 in 0 : vector<8x64xf32>, vector<8x64xf32> -> vector<16x64xf32>
    %c1_184 = arith.constant 1 : index
    %c0_185 = arith.constant 0 : index
    %c0_186 = arith.constant 0 : index
    %463 = vector.load %arg8[%c1_184, %c0_185, %c0_186] : memref<2x64x64xf32, #tpu.memory_space<vmem>>, vector<1x64x64xf32>
    %464 = vector.shape_cast %463 : vector<1x64x64xf32> to vector<64x64xf32>
    %cst_187 = arith.constant dense<0.000000e+00> : vector<16x64xf32>
    %465 = tpu.matmul %462, %464, %cst_187 {dimension_numbers = #tpu.dot_dimension_numbers<[1], [1], [0], [0], [0, 0, 1, 0], [], []>} : vector<16x64xf32>, vector<64x64xf32>, vector<16x64xf32> -> vector<16x64xf32>
    %466 = arith.addf %282, %465 : vector<16x64xf32>
    %c1_188 = arith.constant 1 : index
    %c0_189 = arith.constant 0 : index
    %c0_190 = arith.constant 0 : index
    %467 = vector.load %arg9[%c1_188, %c0_189, %c0_190] : memref<2x1x64xf32, #tpu.memory_space<vmem>>, vector<1x1x64xf32>
    %468 = vector.shape_cast %467 : vector<1x1x64xf32> to vector<1x64xf32>
    %469 = vector.broadcast %468 : vector<1x64xf32> to vector<16x64xf32>
    %470 = arith.addf %466, %469 : vector<16x64xf32>
    %c1_191 = arith.constant 1 : index
    %c0_192 = arith.constant 0 : index
    %c0_193 = arith.constant 0 : index
    %471 = vector.load %arg10[%c1_191, %c0_192, %c0_193] : memref<2x1x64xf32, #tpu.memory_space<vmem>>, vector<1x1x64xf32>
    %472 = vector.shape_cast %471 : vector<1x1x64xf32> to vector<1x64xf32>
    %c1_194 = arith.constant 1 : index
    %c0_195 = arith.constant 0 : index
    %c0_196 = arith.constant 0 : index
    %473 = vector.load %arg11[%c1_194, %c0_195, %c0_196] : memref<2x1x64xf32, #tpu.memory_space<vmem>>, vector<1x1x64xf32>
    %474 = vector.shape_cast %473 : vector<1x1x64xf32> to vector<1x64xf32>
    %cst_197 = arith.constant dense<0.000000e+00> : vector<16xf32>
    %475 = vector.multi_reduction <add>, %470, %cst_197 [1] : vector<16x64xf32> to vector<16xf32>
    %476 = vector.shape_cast %475 : vector<16xf32> to vector<16x1xf32>
    %cst_198 = arith.constant 6.400000e+01 : f32
    %477 = vector.broadcast %cst_198 : f32 to vector<16x1xf32>
    %478 = arith.divf %476, %477 : vector<16x1xf32>
    %479 = vector.broadcast %478 : vector<16x1xf32> to vector<16x64xf32>
    %480 = arith.subf %470, %479 : vector<16x64xf32>
    %481 = arith.mulf %480, %480 : vector<16x64xf32>
    %cst_199 = arith.constant dense<0.000000e+00> : vector<16xf32>
    %482 = vector.multi_reduction <add>, %481, %cst_199 [1] : vector<16x64xf32> to vector<16xf32>
    %483 = vector.shape_cast %482 : vector<16xf32> to vector<16x1xf32>
    %cst_200 = arith.constant 6.400000e+01 : f32
    %484 = vector.broadcast %cst_200 : f32 to vector<16x1xf32>
    %485 = arith.divf %483, %484 : vector<16x1xf32>
    %486 = vector.broadcast %478 : vector<16x1xf32> to vector<16x64xf32>
    %487 = arith.subf %470, %486 : vector<16x64xf32>
    %cst_201 = arith.constant 9.99999974E-6 : f32
    %488 = vector.broadcast %cst_201 : f32 to vector<16x1xf32>
    %489 = arith.addf %485, %488 : vector<16x1xf32>
    %490 = math.rsqrt %489 : vector<16x1xf32>
    %491 = vector.broadcast %490 : vector<16x1xf32> to vector<16x64xf32>
    %492 = arith.mulf %487, %491 : vector<16x64xf32>
    %493 = vector.broadcast %472 : vector<1x64xf32> to vector<16x64xf32>
    %494 = arith.mulf %492, %493 : vector<16x64xf32>
    %495 = vector.broadcast %474 : vector<1x64xf32> to vector<16x64xf32>
    %496 = arith.addf %494, %495 : vector<16x64xf32>
    %c1_202 = arith.constant 1 : index
    %c0_203 = arith.constant 0 : index
    %c0_204 = arith.constant 0 : index
    %497 = vector.load %arg12[%c1_202, %c0_203, %c0_204] : memref<2x256x64xf32, #tpu.memory_space<vmem>>, vector<1x256x64xf32>
    %498 = vector.shape_cast %497 : vector<1x256x64xf32> to vector<256x64xf32>
    %cst_205 = arith.constant dense<0.000000e+00> : vector<16x256xf32>
    %499 = tpu.matmul %496, %498, %cst_205 {dimension_numbers = #tpu.dot_dimension_numbers<[1], [1], [0], [0], [0, 0, 1, 0], [], []>} : vector<16x64xf32>, vector<256x64xf32>, vector<16x256xf32> -> vector<16x256xf32>
    %c1_206 = arith.constant 1 : index
    %c0_207 = arith.constant 0 : index
    %c0_208 = arith.constant 0 : index
    %500 = vector.load %arg13[%c1_206, %c0_207, %c0_208] : memref<2x1x256xf32, #tpu.memory_space<vmem>>, vector<1x1x256xf32>
    %501 = vector.shape_cast %500 : vector<1x1x256xf32> to vector<1x256xf32>
    %502 = vector.broadcast %501 : vector<1x256xf32> to vector<16x256xf32>
    %503 = arith.addf %499, %502 : vector<16x256xf32>
    %cst_209 = arith.constant 5.000000e-01 : f32
    %504 = vector.broadcast %cst_209 : f32 to vector<16x256xf32>
    %505 = arith.mulf %504, %503 : vector<16x256xf32>
    %cst_210 = arith.constant 0.707106769 : f32
    %506 = vector.broadcast %cst_210 : f32 to vector<16x256xf32>
    %507 = arith.mulf %503, %506 : vector<16x256xf32>
    %cst_211 = arith.constant 0.000000e+00 : f32
    %508 = vector.broadcast %cst_211 : f32 to vector<16x256xf32>
    %509 = arith.cmpf oge, %507, %508 : vector<16x256xf32>
    %cst_212 = arith.constant 1.000000e+00 : f32
    %cst_213 = arith.constant -1.000000e+00 : f32
    %510 = vector.broadcast %cst_212 : f32 to vector<16x256xf32>
    %511 = vector.broadcast %cst_213 : f32 to vector<16x256xf32>
    %512 = arith.select %509, %510, %511 : vector<16x256xi1>, vector<16x256xf32>
    %513 = math.absf %507 : vector<16x256xf32>
    %cst_214 = arith.constant 0.327591091 : f32
    %514 = vector.broadcast %cst_214 : f32 to vector<16x256xf32>
    %515 = arith.mulf %514, %513 : vector<16x256xf32>
    %cst_215 = arith.constant 1.000000e+00 : f32
    %516 = vector.broadcast %cst_215 : f32 to vector<16x256xf32>
    %517 = arith.addf %516, %515 : vector<16x256xf32>
    %cst_216 = arith.constant 1.000000e+00 : f32
    %518 = vector.broadcast %cst_216 : f32 to vector<16x256xf32>
    %519 = arith.divf %518, %517 : vector<16x256xf32>
    %cst_217 = arith.constant 1.06140542 : f32
    %520 = vector.broadcast %cst_217 : f32 to vector<16x256xf32>
    %521 = arith.mulf %520, %519 : vector<16x256xf32>
    %cst_218 = arith.constant -1.45315206 : f32
    %522 = vector.broadcast %cst_218 : f32 to vector<16x256xf32>
    %523 = arith.addf %521, %522 : vector<16x256xf32>
    %524 = arith.mulf %523, %519 : vector<16x256xf32>
    %cst_219 = arith.constant 1.42141378 : f32
    %525 = vector.broadcast %cst_219 : f32 to vector<16x256xf32>
    %526 = arith.addf %524, %525 : vector<16x256xf32>
    %527 = arith.mulf %526, %519 : vector<16x256xf32>
    %cst_220 = arith.constant -0.284496725 : f32
    %528 = vector.broadcast %cst_220 : f32 to vector<16x256xf32>
    %529 = arith.addf %527, %528 : vector<16x256xf32>
    %530 = arith.mulf %529, %519 : vector<16x256xf32>
    %cst_221 = arith.constant 0.254829586 : f32
    %531 = vector.broadcast %cst_221 : f32 to vector<16x256xf32>
    %532 = arith.addf %530, %531 : vector<16x256xf32>
    %533 = arith.mulf %532, %519 : vector<16x256xf32>
    %cst_222 = arith.constant 0.000000e+00 : f32
    %534 = vector.broadcast %cst_222 : f32 to vector<16x256xf32>
    %535 = arith.subf %534, %513 : vector<16x256xf32>
    %536 = arith.mulf %535, %513 : vector<16x256xf32>
    %537 = math.exp %536 : vector<16x256xf32>
    %538 = arith.mulf %533, %537 : vector<16x256xf32>
    %cst_223 = arith.constant 1.000000e+00 : f32
    %539 = vector.broadcast %cst_223 : f32 to vector<16x256xf32>
    %540 = arith.subf %539, %538 : vector<16x256xf32>
    %541 = arith.mulf %512, %540 : vector<16x256xf32>
    %cst_224 = arith.constant 1.000000e+00 : f32
    %542 = vector.broadcast %cst_224 : f32 to vector<16x256xf32>
    %543 = arith.addf %542, %541 : vector<16x256xf32>
    %544 = arith.mulf %505, %543 : vector<16x256xf32>
    %c1_225 = arith.constant 1 : index
    %c0_226 = arith.constant 0 : index
    %c0_227 = arith.constant 0 : index
    %545 = vector.load %arg14[%c1_225, %c0_226, %c0_227] : memref<2x64x256xf32, #tpu.memory_space<vmem>>, vector<1x64x256xf32>
    %546 = vector.shape_cast %545 : vector<1x64x256xf32> to vector<64x256xf32>
    %cst_228 = arith.constant dense<0.000000e+00> : vector<16x64xf32>
    %547 = tpu.matmul %544, %546, %cst_228 {dimension_numbers = #tpu.dot_dimension_numbers<[1], [1], [0], [0], [0, 0, 1, 0], [], []>} : vector<16x256xf32>, vector<64x256xf32>, vector<16x64xf32> -> vector<16x64xf32>
    %548 = arith.addf %470, %547 : vector<16x64xf32>
    %c1_229 = arith.constant 1 : index
    %c0_230 = arith.constant 0 : index
    %c0_231 = arith.constant 0 : index
    %549 = vector.load %arg15[%c1_229, %c0_230, %c0_231] : memref<2x1x64xf32, #tpu.memory_space<vmem>>, vector<1x1x64xf32>
    %550 = vector.shape_cast %549 : vector<1x1x64xf32> to vector<1x64xf32>
    %551 = vector.broadcast %550 : vector<1x64xf32> to vector<16x64xf32>
    %552 = arith.addf %548, %551 : vector<16x64xf32>
    %c0_232 = arith.constant 0 : index
    %c0_233 = arith.constant 0 : index
    %553 = vector.load %arg16[%c0_232, %c0_233] : memref<1x64xf32, #tpu.memory_space<vmem>>, vector<1x64xf32>
    %c0_234 = arith.constant 0 : index
    %c0_235 = arith.constant 0 : index
    %554 = vector.load %arg17[%c0_234, %c0_235] : memref<1x64xf32, #tpu.memory_space<vmem>>, vector<1x64xf32>
    %cst_236 = arith.constant dense<0.000000e+00> : vector<16xf32>
    %555 = vector.multi_reduction <add>, %552, %cst_236 [1] : vector<16x64xf32> to vector<16xf32>
    %556 = vector.shape_cast %555 : vector<16xf32> to vector<16x1xf32>
    %cst_237 = arith.constant 6.400000e+01 : f32
    %557 = vector.broadcast %cst_237 : f32 to vector<16x1xf32>
    %558 = arith.divf %556, %557 : vector<16x1xf32>
    %559 = vector.broadcast %558 : vector<16x1xf32> to vector<16x64xf32>
    %560 = arith.subf %552, %559 : vector<16x64xf32>
    %561 = arith.mulf %560, %560 : vector<16x64xf32>
    %cst_238 = arith.constant dense<0.000000e+00> : vector<16xf32>
    %562 = vector.multi_reduction <add>, %561, %cst_238 [1] : vector<16x64xf32> to vector<16xf32>
    %563 = vector.shape_cast %562 : vector<16xf32> to vector<16x1xf32>
    %cst_239 = arith.constant 6.400000e+01 : f32
    %564 = vector.broadcast %cst_239 : f32 to vector<16x1xf32>
    %565 = arith.divf %563, %564 : vector<16x1xf32>
    %566 = vector.broadcast %558 : vector<16x1xf32> to vector<16x64xf32>
    %567 = arith.subf %552, %566 : vector<16x64xf32>
    %cst_240 = arith.constant 9.99999974E-6 : f32
    %568 = vector.broadcast %cst_240 : f32 to vector<16x1xf32>
    %569 = arith.addf %565, %568 : vector<16x1xf32>
    %570 = math.rsqrt %569 : vector<16x1xf32>
    %571 = vector.broadcast %570 : vector<16x1xf32> to vector<16x64xf32>
    %572 = arith.mulf %567, %571 : vector<16x64xf32>
    %573 = vector.broadcast %553 : vector<1x64xf32> to vector<16x64xf32>
    %574 = arith.mulf %572, %573 : vector<16x64xf32>
    %575 = vector.broadcast %554 : vector<1x64xf32> to vector<16x64xf32>
    %576 = arith.addf %574, %575 : vector<16x64xf32>
    %c0_241 = arith.constant 0 : index
    %c0_242 = arith.constant 0 : index
    %577 = vector.load %arg18[%c0_241, %c0_242] : memref<128x64xf32, #tpu.memory_space<vmem>>, vector<128x64xf32>
    %cst_243 = arith.constant dense<0.000000e+00> : vector<16x128xf32>
    %578 = tpu.matmul %576, %577, %cst_243 {dimension_numbers = #tpu.dot_dimension_numbers<[1], [1], [0], [0], [0, 0, 1, 0], [], []>} : vector<16x64xf32>, vector<128x64xf32>, vector<16x128xf32> -> vector<16x128xf32>
    %c0_244 = arith.constant 0 : index
    %c0_245 = arith.constant 0 : index
    %579 = vector.load %arg19[%c0_244, %c0_245] : memref<16x128xf32, #tpu.memory_space<vmem>>, vector<16x128xf32>
    tpu.vector_store %arg19[%c0_244, %c0_245], %578 {strides = array<i32>} : memref<16x128xf32, #tpu.memory_space<vmem>>, vector<16x128xf32>,
    return
  }
  func.func @transform_0(%arg0: i32) -> (i32, i32) {
    %c0_i32 = arith.constant 0 : i32
    %c0_i32_0 = arith.constant 0 : i32
    %c0_i32_1 = arith.constant 0 : i32
    return %c0_i32, %c0_i32_0 : i32, i32
  }
  func.func @transform_1(%arg0: i32) -> (i32, i32) {
    %c0_i32 = arith.constant 0 : i32
    %c0_i32_0 = arith.constant 0 : i32
    %c0_i32_1 = arith.constant 0 : i32
    return %c0_i32, %c0_i32_0 : i32, i32
  }
  func.func @transform_2(%arg0: i32) -> (i32, i32) {
    %c0_i32 = arith.constant 0 : i32
    %c0_i32_0 = arith.constant 0 : i32
    %c0_i32_1 = arith.constant 0 : i32
    return %c0_i32, %c0_i32_0 : i32, i32
  }
  func.func @transform_3(%arg0: i32) -> (i32, i32, i32) {
    %c0_i32 = arith.constant 0 : i32
    %c0_i32_0 = arith.constant 0 : i32
    %c0_i32_1 = arith.constant 0 : i32
    %c0_i32_2 = arith.constant 0 : i32
    return %c0_i32, %c0_i32_0, %c0_i32_1 : i32, i32, i32
  }
  func.func @transform_4(%arg0: i32) -> (i32, i32, i32) {
    %c0_i32 = arith.constant 0 : i32
    %c0_i32_0 = arith.constant 0 : i32
    %c0_i32_1 = arith.constant 0 : i32
    %c0_i32_2 = arith.constant 0 : i32
    return %c0_i32, %c0_i32_0, %c0_i32_1 : i32, i32, i32
  }
  func.func @transform_5(%arg0: i32) -> (i32, i32, i32) {
    %c0_i32 = arith.constant 0 : i32
    %c0_i32_0 = arith.constant 0 : i32
    %c0_i32_1 = arith.constant 0 : i32
    %c0_i32_2 = arith.constant 0 : i32
    return %c0_i32, %c0_i32_0, %c0_i32_1 : i32, i32, i32
  }
  func.func @transform_6(%arg0: i32) -> (i32, i32, i32) {
    %c0_i32 = arith.constant 0 : i32
    %c0_i32_0 = arith.constant 0 : i32
    %c0_i32_1 = arith.constant 0 : i32
    %c0_i32_2 = arith.constant 0 : i32
    return %c0_i32, %c0_i32_0, %c0_i32_1 : i32, i32, i32
  }
  func.func @transform_7(%arg0: i32) -> (i32, i32, i32) {
    %c0_i32 = arith.constant 0 : i32
    %c0_i32_0 = arith.constant 0 : i32
    %c0_i32_1 = arith.constant 0 : i32
    %c0_i32_2 = arith.constant 0 : i32
    return %c0_i32, %c0_i32_0, %c0_i32_1 : i32, i32, i32
  }
  func.func @transform_8(%arg0: i32) -> (i32, i32, i32) {
    %c0_i32 = arith.constant 0 : i32
    %c0_i32_0 = arith.constant 0 : i32
    %c0_i32_1 = arith.constant 0 : i32
    %c0_i32_2 = arith.constant 0 : i32
    return %c0_i32, %c0_i32_0, %c0_i32_1 : i32, i32, i32
  }
  func.func @transform_9(%arg0: i32) -> (i32, i32, i32) {
    %c0_i32 = arith.constant 0 : i32
    %c0_i32_0 = arith.constant 0 : i32
    %c0_i32_1 = arith.constant 0 : i32
    %c0_i32_2 = arith.constant 0 : i32
    return %c0_i32, %c0_i32_0, %c0_i32_1 : i32, i32, i32
  }
  func.func @transform_10(%arg0: i32) -> (i32, i32, i32) {
    %c0_i32 = arith.constant 0 : i32
    %c0_i32_0 = arith.constant 0 : i32
    %c0_i32_1 = arith.constant 0 : i32
    %c0_i32_2 = arith.constant 0 : i32
    return %c0_i32, %c0_i32_0, %c0_i32_1 : i32, i32, i32
  }
  func.func @transform_11(%arg0: i32) -> (i32, i32, i32) {
    %c0_i32 = arith.constant 0 : i32
    %c0_i32_0 = arith.constant 0 : i32
    %c0_i32_1 = arith.constant 0 : i32
    %c0_i32_2 = arith.constant 0 : i32
    return %c0_i32, %c0_i32_0, %c0_i32_1 : i32, i32, i32
  }
  func.func @transform_12(%arg0: i32) -> (i32, i32, i32) {
    %c0_i32 = arith.constant 0 : i32
    %c0_i32_0 = arith.constant 0 : i32
    %c0_i32_1 = arith.constant 0 : i32
    %c0_i32_2 = arith.constant 0 : i32
    return %c0_i32, %c0_i32_0, %c0_i32_1 : i32, i32, i32
  }
  func.func @transform_13(%arg0: i32) -> (i32, i32, i32) {
    %c0_i32 = arith.constant 0 : i32
    %c0_i32_0 = arith.constant 0 : i32
    %c0_i32_1 = arith.constant 0 : i32
    %c0_i32_2 = arith.constant 0 : i32
    return %c0_i32, %c0_i32_0, %c0_i32_1 : i32, i32, i32
  }
  func.func @transform_14(%arg0: i32) -> (i32, i32, i32) {
    %c0_i32 = arith.constant 0 : i32
    %c0_i32_0 = arith.constant 0 : i32
    %c0_i32_1 = arith.constant 0 : i32
    %c0_i32_2 = arith.constant 0 : i32
    return %c0_i32, %c0_i32_0, %c0_i32_1 : i32, i32, i32
  }
  func.func @transform_15(%arg0: i32) -> (i32, i32) {
    %c0_i32 = arith.constant 0 : i32
    %c0_i32_0 = arith.constant 0 : i32
    %c0_i32_1 = arith.constant 0 : i32
    return %c0_i32, %c0_i32_0 : i32, i32
  }
  func.func @transform_16(%arg0: i32) -> (i32, i32) {
    %c0_i32 = arith.constant 0 : i32
    %c0_i32_0 = arith.constant 0 : i32
    %c0_i32_1 = arith.constant 0 : i32
    return %c0_i32, %c0_i32_0 : i32, i32
  }
  func.func @transform_17(%arg0: i32) -> (i32, i32) {
    %c0_i32 = arith.constant 0 : i32
    %c0_i32_0 = arith.constant 0 : i32
    %c0_i32_1 = arith.constant 0 : i32
    return %c0_i32, %c0_i32_0 : i32, i32
  }
  func.func @transform_18(%arg0: i32) -> (i32, i32) {
    %c0_i32 = arith.constant 0 : i32
    %c0_i32_0 = arith.constant 0 : i32
    %c0_i32_1 = arith.constant 0 : i32
    return %c0_i32, %c0_i32_0 : i32, i32
  }
}

</mosaic_0001>

<llo_original>
// kernel: tpu_custom_call.1
$region0: #{tpu_custom_call.1}
  #allocation0 [shape = 'u32[]', space=smem, size = 0x4, offset = 0x4, fixed_abs, tag = 'smem constant byte address 0x4 - core index']
  #allocation1 [shape = 'u32[144,128]{1,0:T(1,128)}', space=vmem, size = 0x12000, scoped, tag = 'internal scratch']
  %s0 = inlined_call_operand.vmem [shape: s32[16,1], index: 0, kind: input, shape index: {}]
  %s1 = inlined_call_operand.vmem [shape: f32[16,64], index: 1, kind: input, shape index: {}]
  %s2 = inlined_call_operand.vmem [shape: f32[128,64], index: 2, kind: input, shape index: {}]
  %s3 = inlined_call_operand.vmem [shape: f32[2,1,64], index: 3, kind: input, shape index: {}]
  %s4 = inlined_call_operand.vmem [shape: f32[2,1,64], index: 4, kind: input, shape index: {}]
  %s5 = inlined_call_operand.vmem [shape: f32[2,192,64], index: 5, kind: input, shape index: {}]
  %s6 = inlined_call_operand.vmem [shape: f32[2,1,192], index: 6, kind: input, shape index: {}]
  %s7 = inlined_call_operand.vmem [shape: f32[2,64,64], index: 7, kind: input, shape index: {}]
  %s8 = inlined_call_operand.vmem [shape: f32[2,1,64], index: 8, kind: input, shape index: {}]
  %s9 = inlined_call_operand.vmem [shape: f32[2,1,64], index: 9, kind: input, shape index: {}]
  %s10 = inlined_call_operand.vmem [shape: f32[2,1,64], index: 10, kind: input, shape index: {}]
  %s11 = inlined_call_operand.vmem [shape: f32[2,256,64], index: 11, kind: input, shape index: {}]
  %s12 = inlined_call_operand.vmem [shape: f32[2,1,256], index: 12, kind: input, shape index: {}]
  %s13 = inlined_call_operand.vmem [shape: f32[2,64,256], index: 13, kind: input, shape index: {}]
  %s14 = inlined_call_operand.vmem [shape: f32[2,1,64], index: 14, kind: input, shape index: {}]
  %s15 = inlined_call_operand.vmem [shape: f32[1,64], index: 15, kind: input, shape index: {}]
  %s16 = inlined_call_operand.vmem [shape: f32[1,64], index: 16, kind: input, shape index: {}]
  %s17 = inlined_call_operand.vmem [shape: f32[128,64], index: 17, kind: input, shape index: {}]
  %s18 = inlined_call_operand.hbm [shape: f32[16,128], index: 18, kind: output, shape index: {}]
  %s19 = sld [smem:[#allocation0]]
  $region82: #{tpu_custom_call.1} parent=0
    _
  %s21 = ssub.s32 1, %s19
  %s22 = scalar_select 0, %s21, %s19
  $region1: #{tpu_custom_call.1} parent=0
    #allocation2 [shape = 'u8[8192]{0}', space=vmem, size = 0x2000, scoped, tag = 'output window, operand 0, single buffered']
    #allocation3 [shape = 's32[1]{0}', space=sflag, size = 0x4, scoped, tag = 'scoped memory for tpu_custom_call.1']
    %23 = vsyncpa [#allocation3], 0
    // Predicated region
    $region2: #{tpu_custom_call.1} parent=1 // pred_check
      _
    $region3: #{tpu_custom_call.1} parent=1 // pred_check_branch
      %25 = sbr.rel (0) target = $region5
    $region4: #{tpu_custom_call.1} parent=1 // pred_region
      _
    $region5: #{tpu_custom_call.1} parent=1 // pred_fallthru
      _
    // Predicated region
    $region6: #{tpu_custom_call.1} parent=1 // pred_check
      _
    $region7: #{tpu_custom_call.1} parent=1 // pred_check_branch
      %27 = sbr.rel (0) target = $region9
    $region8: #{tpu_custom_call.1} parent=1 // pred_region
      _
    $region9: #{tpu_custom_call.1} parent=1 // pred_fallthru
      _
    // Predicated region
    $region10: #{tpu_custom_call.1} parent=1 // pred_check
      _
    $region11: #{tpu_custom_call.1} parent=1 // pred_check_branch
      %29 = sbr.rel (0) target = $region13
    $region12: #{tpu_custom_call.1} parent=1 // pred_region
      _
    $region13: #{tpu_custom_call.1} parent=1 // pred_fallthru
      _
    // Predicated region
    $region14: #{tpu_custom_call.1} parent=1 // pred_check
      _
    $region15: #{tpu_custom_call.1} parent=1 // pred_check_branch
      %31 = sbr.rel (0) target = $region17
    $region16: #{tpu_custom_call.1} parent=1 // pred_region
      _
    $region17: #{tpu_custom_call.1} parent=1 // pred_fallthru
      _
    // Predicated region
    $region18: #{tpu_custom_call.1} parent=1 // pred_check
      _
    $region19: #{tpu_custom_call.1} parent=1 // pred_check_branch
      %33 = sbr.rel (0) target = $region21
    $region20: #{tpu_custom_call.1} parent=1 // pred_region
      _
    $region21: #{tpu_custom_call.1} parent=1 // pred_fallthru
      _
    // Predicated region
    $region22: #{tpu_custom_call.1} parent=1 // pred_check
      _
    $region23: #{tpu_custom_call.1} parent=1 // pred_check_branch
      %35 = sbr.rel (0) target = $region25
    $region24: #{tpu_custom_call.1} parent=1 // pred_region
      _
    $region25: #{tpu_custom_call.1} parent=1 // pred_fallthru
      _
    // Predicated region
    $region26: #{tpu_custom_call.1} parent=1 // pred_check
      _
    $region27: #{tpu_custom_call.1} parent=1 // pred_check_branch
      %37 = sbr.rel (0) target = $region29
    $region28: #{tpu_custom_call.1} parent=1 // pred_region
      _
    $region29: #{tpu_custom_call.1} parent=1 // pred_fallthru
      _
    // Predicated region
    $region30: #{tpu_custom_call.1} parent=1 // pred_check
      _
    $region31: #{tpu_custom_call.1} parent=1 // pred_check_branch
      %39 = sbr.rel (0) target = $region33
    $region32: #{tpu_custom_call.1} parent=1 // pred_region
      _
    $region33: #{tpu_custom_call.1} parent=1 // pred_fallthru
      _
    // Predicated region
    $region34: #{tpu_custom_call.1} parent=1 // pred_check
      _
    $region35: #{tpu_custom_call.1} parent=1 // pred_check_branch
      %41 = sbr.rel (0) target = $region37
    $region36: #{tpu_custom_call.1} parent=1 // pred_region
      _
    $region37: #{tpu_custom_call.1} parent=1 // pred_fallthru
      _
    // Predicated region
    $region38: #{tpu_custom_call.1} parent=1 // pred_check
      _
    $region39: #{tpu_custom_call.1} parent=1 // pred_check_branch
      %43 = sbr.rel (0) target = $region41
    $region40: #{tpu_custom_call.1} parent=1 // pred_region
      _
    $region41: #{tpu_custom_call.1} parent=1 // pred_fallthru
      _
    // Predicated region
    $region42: #{tpu_custom_call.1} parent=1 // pred_check
      _
    $region43: #{tpu_custom_call.1} parent=1 // pred_check_branch
      %45 = sbr.rel (0) target = $region45
    $region44: #{tpu_custom_call.1} parent=1 // pred_region
      _
    $region45: #{tpu_custom_call.1} parent=1 // pred_fallthru
      _
    // Predicated region
    $region46: #{tpu_custom_call.1} parent=1 // pred_check
      _
    $region47: #{tpu_custom_call.1} parent=1 // pred_check_branch
      %47 = sbr.rel (0) target = $region49
    $region48: #{tpu_custom_call.1} parent=1 // pred_region
      _
    $region49: #{tpu_custom_call.1} parent=1 // pred_fallthru
      _
    // Predicated region
    $region50: #{tpu_custom_call.1} parent=1 // pred_check
      _
    $region51: #{tpu_custom_call.1} parent=1 // pred_check_branch
      %49 = sbr.rel (0) target = $region53
    $region52: #{tpu_custom_call.1} parent=1 // pred_region
      _
    $region53: #{tpu_custom_call.1} parent=1 // pred_fallthru
      _
    // Predicated region
    $region54: #{tpu_custom_call.1} parent=1 // pred_check
      _
    $region55: #{tpu_custom_call.1} parent=1 // pred_check_branch
      %51 = sbr.rel (0) target = $region57
    $region56: #{tpu_custom_call.1} parent=1 // pred_region
      _
    $region57: #{tpu_custom_call.1} parent=1 // pred_fallthru
      _
    // Predicated region
    $region58: #{tpu_custom_call.1} parent=1 // pred_check
      _
    $region59: #{tpu_custom_call.1} parent=1 // pred_check_branch
      %53 = sbr.rel (0) target = $region61
    $region60: #{tpu_custom_call.1} parent=1 // pred_region
      _
    $region61: #{tpu_custom_call.1} parent=1 // pred_fallthru
      _
    // Predicated region
    $region62: #{tpu_custom_call.1} parent=1 // pred_check
      _
    $region63: #{tpu_custom_call.1} parent=1 // pred_check_branch
      %55 = sbr.rel (0) target = $region65
    $region64: #{tpu_custom_call.1} parent=1 // pred_region
      _
    $region65: #{tpu_custom_call.1} parent=1 // pred_fallthru
      _
    // Predicated region
    $region66: #{tpu_custom_call.1} parent=1 // pred_check
      _
    $region67: #{tpu_custom_call.1} parent=1 // pred_check_branch
      %57 = sbr.rel (0) target = $region69
    $region68: #{tpu_custom_call.1} parent=1 // pred_region
      _
    $region69: #{tpu_custom_call.1} parent=1 // pred_fallthru
      _
    // Predicated region
    $region70: #{tpu_custom_call.1} parent=1 // pred_check
      _
    $region71: #{tpu_custom_call.1} parent=1 // pred_check_branch
      %59 = sbr.rel (0) target = $region73
    $region72: #{tpu_custom_call.1} parent=1 // pred_region
      _
    $region73: #{tpu_custom_call.1} parent=1 // pred_fallthru
      _
    %v60 = vld [vmem:[%s0] sm:$0xff]
    %v61 = vld [vmem:[%s0 + $0x8] sm:$0xff]
    %v62 = vlaneseq
    %v63 = vand.u32 %v62, 127
    %64 = vset.pattern.permute.xlu0 0
    %65 = vperm.xlu0 %64, %v60
    %v66 = vpop.permute.xlu0 %65
    %67 = vset.pattern.permute.xlu0 0
    %68 = vperm.xlu0 %67, %v61
    %v69 = vpop.permute.xlu0 %68
    %vm70 = vcmp.eq.s32.totalorder %v63, %v66
    %vm71 = vcmp.eq.s32.totalorder %v63, %v69
    %v72 = vsel %vm70, 1, 0
    %v73 = vsel %vm71, 1, 0
    %v74 = vcvt.s32.f32 %v72
    %v75 = vcvt.s32.f32 %v73
    %v76 = vld [vmem:[%s2] sm:$0xff]
    %v77 = vld [vmem:[%s2 + $0x8] sm:$0xff]
    %v78 = vld [vmem:[%s2 + $0x10] sm:$0xff]
    %v79 = vld [vmem:[%s2 + $0x18] sm:$0xff]
    %v80 = vld [vmem:[%s2 + $0x20] sm:$0xff]
    %v81 = vld [vmem:[%s2 + $0x28] sm:$0xff]
    %v82 = vld [vmem:[%s2 + $0x30] sm:$0xff]
    %v83 = vld [vmem:[%s2 + $0x38] sm:$0xff]
    %v84 = vld [vmem:[%s2 + $0x40] sm:$0xff]
    %v85 = vld [vmem:[%s2 + $0x48] sm:$0xff]
    %v86 = vld [vmem:[%s2 + $0x50] sm:$0xff]
    %v87 = vld [vmem:[%s2 + $0x58] sm:$0xff]
    %v88 = vld [vmem:[%s2 + $0x60] sm:$0xff]
    %v89 = vld [vmem:[%s2 + $0x68] sm:$0xff]
    %v90 = vld [vmem:[%s2 + $0x70] sm:$0xff]
    %v91 = vld [vmem:[%s2 + $0x78] sm:$0xff]
    %v92 = vld [vmem:[%s1] sm:$0xff]
    %v93 = vld [vmem:[%s1 + $0x8] sm:$0xff]
    %94 = vmatprep.subr.mxu0 0.0
    %95 = vmatpush1.msra.mxu0 %v76
    %96 = vmatprep.subr.mxu0 0.0
    %97 = vmatpush1.msra.mxu0 %v77
    %98 = vmatprep.subr.mxu0 0.0
    %99 = vmatpush1.msra.mxu0 %v78
    %100 = vmatprep.subr.mxu0 0.0
    %101 = vmatpush1.msra.mxu0 %v79
    %102 = vmatprep.subr.mxu0 0.0
    %103 = vmatpush1.msra.mxu0 %v80
    %104 = vmatprep.subr.mxu0 0.0
    %105 = vmatpush1.msra.mxu0 %v81
    %106 = vmatprep.subr.mxu0 0.0
    %107 = vmatpush1.msra.mxu0 %v82
    %108 = vmatprep.subr.mxu0 0.0
    %109 = vmatpush1.msra.mxu0 %v83
    %110 = vmatprep.subr.mxu0 0.0
    %111 = vmatpush1.msra.mxu0 %v84
    %112 = vmatprep.subr.mxu0 0.0
    %113 = vmatpush1.msra.mxu0 %v85
    %114 = vmatprep.subr.mxu0 0.0
    %115 = vmatpush1.msra.mxu0 %v86
    %116 = vmatprep.subr.mxu0 0.0
    %117 = vmatpush1.msra.mxu0 %v87
    %118 = vmatprep.subr.mxu0 0.0
    %119 = vmatpush1.msra.mxu0 %v88
    %120 = vmatprep.subr.mxu0 0.0
    %121 = vmatpush1.msra.mxu0 %v89
    %122 = vmatprep.subr.mxu0 0.0
    %123 = vmatpush1.msra.mxu0 %v90
    %124 = vmatprep.subr.mxu0 0.0
    %125 = vmatpush1.msra.mxu0 %v91
    %126 = vmatprep.subr.mxu0 0.0
    %127 = vmatpush1.msra.mxu0 0.0
    %128 = vmatprep.subr.mxu0 0.0
    %129 = vmatpush1.msra.mxu0 0.0
    %130 = vmatprep.subr.mxu0 0.0
    %131 = vmatpush1.msra.mxu0 0.0
    %132 = vmatprep.subr.mxu0 0.0
    %133 = vmatpush1.msra.mxu0 0.0
    %134 = vmatprep.subr.mxu0 0.0
    %135 = vmatpush1.msra.mxu0 0.0
    %136 = vmatprep.subr.mxu0 0.0
    %137 = vmatpush1.msra.mxu0 0.0
    %138 = vmatprep.subr.mxu0 0.0
    %139 = vmatpush1.msra.mxu0 0.0
    %140 = vmatprep.subr.mxu0 0.0
    %141 = vmatpush1.msra.mxu0 0.0
    %142 = vmatprep.subr.mxu0 0.0
    %143 = vmatpush1.msra.mxu0 0.0
    %144 = vmatprep.subr.mxu0 0.0
    %145 = vmatpush1.msra.mxu0 0.0
    %146 = vmatprep.subr.mxu0 0.0
    %147 = vmatpush1.msra.mxu0 0.0
    %148 = vmatprep.subr.mxu0 0.0
    %149 = vmatpush1.msra.mxu0 0.0
    %150 = vmatprep.subr.mxu0 0.0
    %151 = vmatpush1.msra.mxu0 0.0
    %152 = vmatprep.subr.mxu0 0.0
    %153 = vmatpush1.msra.mxu0 0.0
    %154 = vmatprep.subr.mxu0 0.0
    %155 = vmatpush1.msra.mxu0 0.0
    %156 = vmatprep.subr.mxu0 0.0
    %157 = vmatpush1.msra.mxu0 0.0
    %158 = vmatprep.mubr.f32.mxu0 0.0
    %159 = vmatmul.mubr.f32.gmra.mrb[0].mxu0 %v74
    %v160 = vpop.f32.mrb[0].mxu0
    %v161 = vadd.f32 %v92, %v160
    %v162 = vpop.f32.mrb[0].mxu0
    %163 = vmatprep.mubr.f32.mxu0 0.0
    %164 = vmatmul.mubr.f32.gmra.mrb[0].mxu0 %v75
    %v165 = vpop.f32.mrb[0].mxu0
    %v166 = vadd.f32 %v93, %v165
    %v167 = vpop.f32.mrb[0].mxu0
    %168 = vdwg.mxu0
    %v169 = vlaneseq
    %v170 = vshrl.u32 %v169, 7
    %vm171 = vcmp.ge.s32.totalorder %v170, %v63
    %v172 = vld [vmem:[%s3] sm:$0x1]
    %v173 = vld [vmem:[%s4] sm:$0x1]
    %vm174 = vcmask 523264
    %v175 = vsel %vm174, %v161, 0.0
    %176 = vadd.xlane.f32.xlu0 %v175
    %v177 = vpop.xlane.xlu0 %176
    %v178 = vsel %vm174, %v166, 0.0
    %179 = vadd.xlane.f32.xlu0 %v178
    %v180 = vpop.xlane.xlu0 %179
    %v181 = vrcp.pop 64.0
    %v182 = vmul.f32 %v177, %v181
    %v183 = vmul.f32 %v180, %v181
    %v184 = vsub.f32 %v161, %v182
    %v185 = vsub.f32 %v166, %v183
    %v186 = vmul.f32 %v184, %v184
    %v187 = vmul.f32 %v185, %v185
    %v188 = vsel %vm174, %v186, 0.0
    %189 = vadd.xlane.f32.xlu0 %v188
    %v190 = vpop.xlane.xlu0 %189
    %v191 = vsel %vm174, %v187, 0.0
    %192 = vadd.xlane.f32.xlu0 %v191
    %v193 = vpop.xlane.xlu0 %192
    %v194 = vmul.f32 %v190, %v181
    %v195 = vmul.f32 %v193, %v181
    %v196 = vadd.f32 %v194, 1e-05
    %v197 = vadd.f32 %v195, 1e-05
    %v198 = vrsqrt.pop %v196
    %v199 = vrsqrt.pop %v197
    %v200 = vmul.f32 %v184, %v198
    %v201 = vmul.f32 %v185, %v199
    %v203 = vlaneseq
    %v204 = vshrl.u32 %v203, 7
    %v205 = vsub.s32 0, %v204
    %v206 = vrot.slane %v172, %v205
    %v208 = vmul.f32 %v200, %v206
    %v209 = vmul.f32 %v201, %v206
    %v211 = vlaneseq
    %v212 = vshrl.u32 %v211, 7
    %v213 = vsub.s32 0, %v212
    %v214 = vrot.slane %v173, %v213
    %v216 = vadd.f32 %v208, %v214
    %v217 = vadd.f32 %v209, %v214
    %v218 = vld [vmem:[%s5] sm:$0xff]
    %v219 = vld [vmem:[%s5 + $0x8] sm:$0xff]
    %v220 = vld [vmem:[%s5 + $0x10] sm:$0xff]
    %v221 = vld [vmem:[%s5 + $0x18] sm:$0xff]
    %v222 = vld [vmem:[%s5 + $0x20] sm:$0xff]
    %v223 = vld [vmem:[%s5 + $0x28] sm:$0xff]
    %v224 = vld [vmem:[%s5 + $0x30] sm:$0xff]
    %v225 = vld [vmem:[%s5 + $0x38] sm:$0xff]
    %v226 = vld [vmem:[%s5 + $0x40] sm:$0xff]
    %v227 = vld [vmem:[%s5 + $0x48] sm:$0xff]
    %v228 = vld [vmem:[%s5 + $0x50] sm:$0xff]
    %v229 = vld [vmem:[%s5 + $0x58] sm:$0xff]
    %v230 = vld [vmem:[%s5 + $0x60] sm:$0xff]
    %v231 = vld [vmem:[%s5 + $0x68] sm:$0xff]
    %v232 = vld [vmem:[%s5 + $0x70] sm:$0xff]
    %v233 = vld [vmem:[%s5 + $0x78] sm:$0xff]
    %v234 = vld [vmem:[%s5 + $0x80] sm:$0xff]
    %v235 = vld [vmem:[%s5 + $0x88] sm:$0xff]
    %v236 = vld [vmem:[%s5 + $0x90] sm:$0xff]
    %v237 = vld [vmem:[%s5 + $0x98] sm:$0xff]
    %v238 = vld [vmem:[%s5 + $0xa0] sm:$0xff]
    %v239 = vld [vmem:[%s5 + $0xa8] sm:$0xff]
    %v240 = vld [vmem:[%s5 + $0xb0] sm:$0xff]
    %v241 = vld [vmem:[%s5 + $0xb8] sm:$0xff]
    %v242 = vld [vmem:[%s6] sm:$0x3]
    %v244 = vlaneseq
    %v245 = vshrl.u32 %v244, 7
    %v246 = vsub.s32 0, %v245
    %v247 = vrot.slane %v242, %v246
    %v248 = vlaneseq
    %v249 = vshrl.u32 %v248, 7
    %v250 = vsub.s32 1, %v249
    %v251 = vrot.slane %v242, %v250
    %v255 = vsel %vm174, %v216, 0
    %v258 = vsel %vm174, %v217, 0
    %v261 = vsel %vm174, %v218, 0
    %v264 = vsel %vm174, %v219, 0
    %v267 = vsel %vm174, %v220, 0
    %v270 = vsel %vm174, %v221, 0
    %v273 = vsel %vm174, %v222, 0
    %v276 = vsel %vm174, %v223, 0
    %v279 = vsel %vm174, %v224, 0
    %v282 = vsel %vm174, %v225, 0
    %v285 = vsel %vm174, %v226, 0
    %v288 = vsel %vm174, %v227, 0
    %v291 = vsel %vm174, %v228, 0
    %v294 = vsel %vm174, %v229, 0
    %v297 = vsel %vm174, %v230, 0
    %v300 = vsel %vm174, %v231, 0
    %v303 = vsel %vm174, %v232, 0
    %v306 = vsel %vm174, %v233, 0
    %v309 = vsel %vm174, %v234, 0
    %v312 = vsel %vm174, %v235, 0
    %v315 = vsel %vm174, %v236, 0
    %v318 = vsel %vm174, %v237, 0
    %v321 = vsel %vm174, %v238, 0
    %v324 = vsel %vm174, %v239, 0
    %v327 = vsel %vm174, %v240, 0
    %v330 = vsel %vm174, %v241, 0
    %332 = vmatprep.subr.mxu0 0.0
    %333 = vmatpush1.xpose.msra.mxu0 %v261
    %334 = vmatprep.subr.mxu0 0.0
    %335 = vmatpush1.xpose.msra.mxu0 %v264
    %336 = vmatprep.subr.mxu0 0.0
    %337 = vmatpush1.xpose.msra.mxu0 %v267
    %338 = vmatprep.subr.mxu0 0.0
    %339 = vmatpush1.xpose.msra.mxu0 %v270
    %340 = vmatprep.subr.mxu0 0.0
    %341 = vmatpush1.xpose.msra.mxu0 %v273
    %342 = vmatprep.subr.mxu0 0.0
    %343 = vmatpush1.xpose.msra.mxu0 %v276
    %344 = vmatprep.subr.mxu0 0.0
    %345 = vmatpush1.xpose.msra.mxu0 %v279
    %346 = vmatprep.subr.mxu0 0.0
    %347 = vmatpush1.xpose.msra.mxu0 %v282
    %348 = vmatprep.subr.mxu0 0.0
    %349 = vmatpush1.xpose.msra.mxu0 %v285
    %350 = vmatprep.subr.mxu0 0.0
    %351 = vmatpush1.xpose.msra.mxu0 %v288
    %352 = vmatprep.subr.mxu0 0.0
    %353 = vmatpush1.xpose.msra.mxu0 %v291
    %354 = vmatprep.subr.mxu0 0.0
    %355 = vmatpush1.xpose.msra.mxu0 %v294
    %356 = vmatprep.subr.mxu0 0.0
    %357 = vmatpush1.xpose.msra.mxu0 %v297
    %358 = vmatprep.subr.mxu0 0.0
    %359 = vmatpush1.xpose.msra.mxu0 %v300
    %360 = vmatprep.subr.mxu0 0.0
    %361 = vmatpush1.xpose.msra.mxu0 %v303
    %362 = vmatprep.subr.mxu0 0.0
    %363 = vmatpush1.xpose.msra.mxu0 %v306
    %364 = vmatprep.subr.mxu0 0.0
    %365 = vmatpush1.xpose.msra.mxu0 %v309
    %366 = vmatprep.subr.mxu0 0.0
    %367 = vmatpush1.xpose.msra.mxu0 %v312
    %368 = vmatprep.subr.mxu0 0.0
    %369 = vmatpush1.xpose.msra.mxu0 %v315
    %370 = vmatprep.subr.mxu0 0.0
    %371 = vmatpush1.xpose.msra.mxu0 %v318
    %372 = vmatprep.subr.mxu0 0.0
    %373 = vmatpush1.xpose.msra.mxu0 %v321
    %374 = vmatprep.subr.mxu0 0.0
    %375 = vmatpush1.xpose.msra.mxu0 %v324
    %376 = vmatprep.subr.mxu0 0.0
    %377 = vmatpush1.xpose.msra.mxu0 %v327
    %378 = vmatprep.subr.mxu0 0.0
    %379 = vmatpush1.xpose.msra.mxu0 %v330
    %380 = vmatprep.subr.mxu0 0.0
    %381 = vmatpush1.xpose.msra.mxu0 0.0
    %382 = vmatprep.subr.mxu0 0.0
    %383 = vmatpush1.xpose.msra.mxu0 0.0
    %384 = vmatprep.subr.mxu0 0.0
    %385 = vmatpush1.xpose.msra.mxu0 0.0
    %386 = vmatprep.subr.mxu0 0.0
    %387 = vmatpush1.xpose.msra.mxu0 0.0
    %388 = vmatprep.subr.mxu0 0.0
    %389 = vmatpush1.xpose.msra.mxu0 0.0
    %390 = vmatprep.subr.mxu0 0.0
    %391 = vmatpush1.xpose.msra.mxu0 0.0
    %392 = vmatprep.subr.mxu0 0.0
    %393 = vmatpush1.xpose.msra.mxu0 0.0
    %394 = vmatprep.subr.mxu0 0.0
    %395 = vmatpush1.xpose.msra.mxu0 0.0
    %396 = vmatprep.mubr.f32.mxu0 0.0
    %397 = vmatmul.mubr.f32.gmra.mrb[0].mxu0 %v255
    %v398 = vpop.f32.mrb[0].mxu0
    %v399 = vadd.f32 %v247, %v398
    %v400 = vpop.f32.mrb[0].mxu0
    %v401 = vadd.f32 %v251, %v400
    %402 = vmatprep.mubr.f32.mxu0 0.0
    %403 = vmatmul.mubr.f32.gmra.mrb[0].mxu0 %v258
    %v404 = vpop.f32.mrb[0].mxu0
    %v405 = vadd.f32 %v247, %v404
    %v406 = vpop.f32.mrb[0].mxu0
    %v407 = vadd.f32 %v251, %v406
    %408 = vdwg.mxu0
    %v409 = vmul.f32 %v399, 0.25
    %411 = vrot.lane.b32.xlu0 %v399, 64
    %v412 = vpop.permute.xlu0 %411
    %vm413 = vcmask 130048
    %v415 = vsel %vm413, %v409, 0
    %v417 = vsel %vm413, %v412, 0
    %419 = vmatprep.subr.mxu0 0.0
    %420 = vmatpush1.xpose.msra.mxu0 %v417
    %421 = vmatprep.subr.mxu0 0.0
    %422 = vmatpush1.xpose.msra.mxu0 0.0
    %423 = vmatprep.subr.mxu0 0.0
    %424 = vmatpush1.xpose.msra.mxu0 0.0
    %425 = vmatprep.subr.mxu0 0.0
    %426 = vmatpush1.xpose.msra.mxu0 0.0
    %427 = vmatprep.subr.mxu0 0.0
    %428 = vmatpush1.xpose.msra.mxu0 0.0
    %429 = vmatprep.subr.mxu0 0.0
    %430 = vmatpush1.xpose.msra.mxu0 0.0
    %431 = vmatprep.subr.mxu0 0.0
    %432 = vmatpush1.xpose.msra.mxu0 0.0
    %433 = vmatprep.subr.mxu0 0.0
    %434 = vmatpush1.xpose.msra.mxu0 0.0
    %435 = vmatprep.subr.mxu0 0.0
    %436 = vmatpush1.xpose.msra.mxu0 0.0
    %437 = vmatprep.subr.mxu0 0.0
    %438 = vmatpush1.xpose.msra.mxu0 0.0
    %439 = vmatprep.subr.mxu0 0.0
    %440 = vmatpush1.xpose.msra.mxu0 0.0
    %441 = vmatprep.subr.mxu0 0.0
    %442 = vmatpush1.xpose.msra.mxu0 0.0
    %443 = vmatprep.subr.mxu0 0.0
    %444 = vmatpush1.xpose.msra.mxu0 0.0
    %445 = vmatprep.subr.mxu0 0.0
    %446 = vmatpush1.xpose.msra.mxu0 0.0
    %447 = vmatprep.subr.mxu0 0.0
    %448 = vmatpush1.xpose.msra.mxu0 0.0
    %449 = vmatprep.subr.mxu0 0.0
    %450 = vmatpush1.xpose.msra.mxu0 0.0
    %451 = vmatprep.subr.mxu0 0.0
    %452 = vmatpush1.xpose.msra.mxu0 0.0
    %453 = vmatprep.subr.mxu0 0.0
    %454 = vmatpush1.xpose.msra.mxu0 0.0
    %455 = vmatprep.subr.mxu0 0.0
    %456 = vmatpush1.xpose.msra.mxu0 0.0
    %457 = vmatprep.subr.mxu0 0.0
    %458 = vmatpush1.xpose.msra.mxu0 0.0
    %459 = vmatprep.subr.mxu0 0.0
    %460 = vmatpush1.xpose.msra.mxu0 0.0
    %461 = vmatprep.subr.mxu0 0.0
    %462 = vmatpush1.xpose.msra.mxu0 0.0
    %463 = vmatprep.subr.mxu0 0.0
    %464 = vmatpush1.xpose.msra.mxu0 0.0
    %465 = vmatprep.subr.mxu0 0.0
    %466 = vmatpush1.xpose.msra.mxu0 0.0
    %467 = vmatprep.subr.mxu0 0.0
    %468 = vmatpush1.xpose.msra.mxu0 0.0
    %469 = vmatprep.subr.mxu0 0.0
    %470 = vmatpush1.xpose.msra.mxu0 0.0
    %471 = vmatprep.subr.mxu0 0.0
    %472 = vmatpush1.xpose.msra.mxu0 0.0
    %473 = vmatprep.subr.mxu0 0.0
    %474 = vmatpush1.xpose.msra.mxu0 0.0
    %475 = vmatprep.subr.mxu0 0.0
    %476 = vmatpush1.xpose.msra.mxu0 0.0
    %477 = vmatprep.subr.mxu0 0.0
    %478 = vmatpush1.xpose.msra.mxu0 0.0
    %479 = vmatprep.subr.mxu0 0.0
    %480 = vmatpush1.xpose.msra.mxu0 0.0
    %481 = vmatprep.subr.mxu0 0.0
    %482 = vmatpush1.xpose.msra.mxu0 0.0
    %483 = vmatprep.mubr.f32.mxu0 0.0
    %484 = vmatmul.mubr.f32.gmra.mrb[0].mxu0 %v415
    %v485 = vpop.f32.mrb[0].mxu0
    %v486 = vadd.f32 0.0, %v485
    %v487 = vpop.f32.mrb[0].mxu0
    %488 = vdwg.mxu0
    %v489 = vsel %vm171, %v486, -1e+30
    %vm490 = vcmask 64512
    %v491 = vsel %vm490, %v489, -inf
    %492 = vmax.xlane.f32.xlu0 %v491
    %v493 = vpop.xlane.xlu0 %492
    %v494 = vsub.f32 %v489, %v493
    %v495 = vmul.f32 %v494, 1.442695
    %v496 = vpow.pop %v495
    %v497 = vsel %vm490, %v496, 0.0
    %498 = vadd.xlane.f32.xlu0 %v497
    %v499 = vpop.xlane.xlu0 %498
    %v500 = vrcp.pop %v499
    %v501 = vmul.f32 %v496, %v500
    %v503 = vsel %vm490, %v501, 0
    %505 = vmatprep.subr.mxu0 0.0
    %506 = vmatpush1.msra.mxu0 %v401
    %507 = vmatprep.subr.mxu0 0.0
    %508 = vmatpush1.msra.mxu0 0.0
    %509 = vmatprep.subr.mxu0 0.0
    %510 = vmatpush1.msra.mxu0 0.0
    %511 = vmatprep.subr.mxu0 0.0
    %512 = vmatpush1.msra.mxu0 0.0
    %513 = vmatprep.subr.mxu0 0.0
    %514 = vmatpush1.msra.mxu0 0.0
    %515 = vmatprep.subr.mxu0 0.0
    %516 = vmatpush1.msra.mxu0 0.0
    %517 = vmatprep.subr.mxu0 0.0
    %518 = vmatpush1.msra.mxu0 0.0
    %519 = vmatprep.subr.mxu0 0.0
    %520 = vmatpush1.msra.mxu0 0.0
    %521 = vmatprep.subr.mxu0 0.0
    %522 = vmatpush1.msra.mxu0 0.0
    %523 = vmatprep.subr.mxu0 0.0
    %524 = vmatpush1.msra.mxu0 0.0
    %525 = vmatprep.subr.mxu0 0.0
    %526 = vmatpush1.msra.mxu0 0.0
    %527 = vmatprep.subr.mxu0 0.0
    %528 = vmatpush1.msra.mxu0 0.0
    %529 = vmatprep.subr.mxu0 0.0
    %530 = vmatpush1.msra.mxu0 0.0
    %531 = vmatprep.subr.mxu0 0.0
    %532 = vmatpush1.msra.mxu0 0.0
    %533 = vmatprep.subr.mxu0 0.0
    %534 = vmatpush1.msra.mxu0 0.0
    %535 = vmatprep.subr.mxu0 0.0
    %536 = vmatpush1.msra.mxu0 0.0
    %537 = vmatprep.subr.mxu0 0.0
    %538 = vmatpush1.msra.mxu0 0.0
    %539 = vmatprep.subr.mxu0 0.0
    %540 = vmatpush1.msra.mxu0 0.0
    %541 = vmatprep.subr.mxu0 0.0
    %542 = vmatpush1.msra.mxu0 0.0
    %543 = vmatprep.subr.mxu0 0.0
    %544 = vmatpush1.msra.mxu0 0.0
    %545 = vmatprep.subr.mxu0 0.0
    %546 = vmatpush1.msra.mxu0 0.0
    %547 = vmatprep.subr.mxu0 0.0
    %548 = vmatpush1.msra.mxu0 0.0
    %549 = vmatprep.subr.mxu0 0.0
    %550 = vmatpush1.msra.mxu0 0.0
    %551 = vmatprep.subr.mxu0 0.0
    %552 = vmatpush1.msra.mxu0 0.0
    %553 = vmatprep.subr.mxu0 0.0
    %554 = vmatpush1.msra.mxu0 0.0
    %555 = vmatprep.subr.mxu0 0.0
    %556 = vmatpush1.msra.mxu0 0.0
    %557 = vmatprep.subr.mxu0 0.0
    %558 = vmatpush1.msra.mxu0 0.0
    %559 = vmatprep.subr.mxu0 0.0
    %560 = vmatpush1.msra.mxu0 0.0
    %561 = vmatprep.subr.mxu0 0.0
    %562 = vmatpush1.msra.mxu0 0.0
    %563 = vmatprep.subr.mxu0 0.0
    %564 = vmatpush1.msra.mxu0 0.0
    %565 = vmatprep.subr.mxu0 0.0
    %566 = vmatpush1.msra.mxu0 0.0
    %567 = vmatprep.subr.mxu0 0.0
    %568 = vmatpush1.msra.mxu0 0.0
    %569 = vmatprep.mubr.f32.mxu0 0.0
    %570 = vmatmul.mubr.f32.gmra.mrb[0].mxu0 %v503
    %v571 = vpop.f32.mrb[0].mxu0
    %v572 = vadd.f32 0.0, %v571
    %v573 = vpop.f32.mrb[0].mxu0
    %574 = vdwg.mxu0
    %575 = vrot.lane.b32.xlu0 %v409, 112
    %v576 = vpop.permute.xlu0 %575
    %577 = vrot.lane.b32.xlu0 %v399, 48
    %v578 = vpop.permute.xlu0 %577
    %v579 = vsel %vm413, %v576, 0
    %v581 = vsel %vm413, %v578, 0
    %583 = vmatprep.subr.mxu0 0.0
    %584 = vmatpush1.xpose.msra.mxu0 %v581
    %585 = vmatprep.subr.mxu0 0.0
    %586 = vmatpush1.xpose.msra.mxu0 0.0
    %587 = vmatprep.subr.mxu0 0.0
    %588 = vmatpush1.xpose.msra.mxu0 0.0
    %589 = vmatprep.subr.mxu0 0.0
    %590 = vmatpush1.xpose.msra.mxu0 0.0
    %591 = vmatprep.subr.mxu0 0.0
    %592 = vmatpush1.xpose.msra.mxu0 0.0
    %593 = vmatprep.subr.mxu0 0.0
    %594 = vmatpush1.xpose.msra.mxu0 0.0
    %595 = vmatprep.subr.mxu0 0.0
    %596 = vmatpush1.xpose.msra.mxu0 0.0
    %597 = vmatprep.subr.mxu0 0.0
    %598 = vmatpush1.xpose.msra.mxu0 0.0
    %599 = vmatprep.subr.mxu0 0.0
    %600 = vmatpush1.xpose.msra.mxu0 0.0
    %601 = vmatprep.subr.mxu0 0.0
    %602 = vmatpush1.xpose.msra.mxu0 0.0
    %603 = vmatprep.subr.mxu0 0.0
    %604 = vmatpush1.xpose.msra.mxu0 0.0
    %605 = vmatprep.subr.mxu0 0.0
    %606 = vmatpush1.xpose.msra.mxu0 0.0
    %607 = vmatprep.subr.mxu0 0.0
    %608 = vmatpush1.xpose.msra.mxu0 0.0
    %609 = vmatprep.subr.mxu0 0.0
    %610 = vmatpush1.xpose.msra.mxu0 0.0
    %611 = vmatprep.subr.mxu0 0.0
    %612 = vmatpush1.xpose.msra.mxu0 0.0
    %613 = vmatprep.subr.mxu0 0.0
    %614 = vmatpush1.xpose.msra.mxu0 0.0
    %615 = vmatprep.subr.mxu0 0.0
    %616 = vmatpush1.xpose.msra.mxu0 0.0
    %617 = vmatprep.subr.mxu0 0.0
    %618 = vmatpush1.xpose.msra.mxu0 0.0
    %619 = vmatprep.subr.mxu0 0.0
    %620 = vmatpush1.xpose.msra.mxu0 0.0
    %621 = vmatprep.subr.mxu0 0.0
    %622 = vmatpush1.xpose.msra.mxu0 0.0
    %623 = vmatprep.subr.mxu0 0.0
    %624 = vmatpush1.xpose.msra.mxu0 0.0
    %625 = vmatprep.subr.mxu0 0.0
    %626 = vmatpush1.xpose.msra.mxu0 0.0
    %627 = vmatprep.subr.mxu0 0.0
    %628 = vmatpush1.xpose.msra.mxu0 0.0
    %629 = vmatprep.subr.mxu0 0.0
    %630 = vmatpush1.xpose.msra.mxu0 0.0
    %631 = vmatprep.subr.mxu0 0.0
    %632 = vmatpush1.xpose.msra.mxu0 0.0
    %633 = vmatprep.subr.mxu0 0.0
    %634 = vmatpush1.xpose.msra.mxu0 0.0
    %635 = vmatprep.subr.mxu0 0.0
    %636 = vmatpush1.xpose.msra.mxu0 0.0
    %637 = vmatprep.subr.mxu0 0.0
    %638 = vmatpush1.xpose.msra.mxu0 0.0
    %639 = vmatprep.subr.mxu0 0.0
    %640 = vmatpush1.xpose.msra.mxu0 0.0
    %641 = vmatprep.subr.mxu0 0.0
    %642 = vmatpush1.xpose.msra.mxu0 0.0
    %643 = vmatprep.subr.mxu0 0.0
    %644 = vmatpush1.xpose.msra.mxu0 0.0
    %645 = vmatprep.subr.mxu0 0.0
    %646 = vmatpush1.xpose.msra.mxu0 0.0
    %647 = vmatprep.mubr.f32.mxu0 0.0
    %648 = vmatmul.mubr.f32.gmra.mrb[0].mxu0 %v579
    %v649 = vpop.f32.mrb[0].mxu0
    %v650 = vadd.f32 0.0, %v649
    %v651 = vpop.f32.mrb[0].mxu0
    %652 = vdwg.mxu0
    %v653 = vsel %vm171, %v650, -1e+30
    %v654 = vsel %vm490, %v653, -inf
    %655 = vmax.xlane.f32.xlu0 %v654
    %v656 = vpop.xlane.xlu0 %655
    %v657 = vsub.f32 %v653, %v656
    %v658 = vmul.f32 %v657, 1.442695
    %v659 = vpow.pop %v658
    %v660 = vsel %vm490, %v659, 0.0
    %661 = vadd.xlane.f32.xlu0 %v660
    %v662 = vpop.xlane.xlu0 %661
    %v663 = vrcp.pop %v662
    %v664 = vmul.f32 %v659, %v663
    %666 = vrot.lane.b32.xlu0 %v401, 112
    %v667 = vpop.permute.xlu0 %666
    %v670 = vsel %vm490, %v664, 0
    %672 = vmatprep.subr.mxu0 0.0
    %673 = vmatpush1.msra.mxu0 %v667
    %674 = vmatprep.subr.mxu0 0.0
    %675 = vmatpush1.msra.mxu0 0.0
    %676 = vmatprep.subr.mxu0 0.0
    %677 = vmatpush1.msra.mxu0 0.0
    %678 = vmatprep.subr.mxu0 0.0
    %679 = vmatpush1.msra.mxu0 0.0
    %680 = vmatprep.subr.mxu0 0.0
    %681 = vmatpush1.msra.mxu0 0.0
    %682 = vmatprep.subr.mxu0 0.0
    %683 = vmatpush1.msra.mxu0 0.0
    %684 = vmatprep.subr.mxu0 0.0
    %685 = vmatpush1.msra.mxu0 0.0
    %686 = vmatprep.subr.mxu0 0.0
    %687 = vmatpush1.msra.mxu0 0.0
    %688 = vmatprep.subr.mxu0 0.0
    %689 = vmatpush1.msra.mxu0 0.0
    %690 = vmatprep.subr.mxu0 0.0
    %691 = vmatpush1.msra.mxu0 0.0
    %692 = vmatprep.subr.mxu0 0.0
    %693 = vmatpush1.msra.mxu0 0.0
    %694 = vmatprep.subr.mxu0 0.0
    %695 = vmatpush1.msra.mxu0 0.0
    %696 = vmatprep.subr.mxu0 0.0
    %697 = vmatpush1.msra.mxu0 0.0
    %698 = vmatprep.subr.mxu0 0.0
    %699 = vmatpush1.msra.mxu0 0.0
    %700 = vmatprep.subr.mxu0 0.0
    %701 = vmatpush1.msra.mxu0 0.0
    %702 = vmatprep.subr.mxu0 0.0
    %703 = vmatpush1.msra.mxu0 0.0
    %704 = vmatprep.subr.mxu0 0.0
    %705 = vmatpush1.msra.mxu0 0.0
    %706 = vmatprep.subr.mxu0 0.0
    %707 = vmatpush1.msra.mxu0 0.0
    %708 = vmatprep.subr.mxu0 0.0
    %709 = vmatpush1.msra.mxu0 0.0
    %710 = vmatprep.subr.mxu0 0.0
    %711 = vmatpush1.msra.mxu0 0.0
    %712 = vmatprep.subr.mxu0 0.0
    %713 = vmatpush1.msra.mxu0 0.0
    %714 = vmatprep.subr.mxu0 0.0
    %715 = vmatpush1.msra.mxu0 0.0
    %716 = vmatprep.subr.mxu0 0.0
    %717 = vmatpush1.msra.mxu0 0.0
    %718 = vmatprep.subr.mxu0 0.0
    %719 = vmatpush1.msra.mxu0 0.0
    %720 = vmatprep.subr.mxu0 0.0
    %721 = vmatpush1.msra.mxu0 0.0
    %722 = vmatprep.subr.mxu0 0.0
    %723 = vmatpush1.msra.mxu0 0.0
    %724 = vmatprep.subr.mxu0 0.0
    %725 = vmatpush1.msra.mxu0 0.0
    %726 = vmatprep.subr.mxu0 0.0
    %727 = vmatpush1.msra.mxu0 0.0
    %728 = vmatprep.subr.mxu0 0.0
    %729 = vmatpush1.msra.mxu0 0.0
    %730 = vmatprep.subr.mxu0 0.0
    %731 = vmatpush1.msra.mxu0 0.0
    %732 = vmatprep.subr.mxu0 0.0
    %733 = vmatpush1.msra.mxu0 0.0
    %734 = vmatprep.subr.mxu0 0.0
    %735 = vmatpush1.msra.mxu0 0.0
    %736 = vmatprep.mubr.f32.mxu0 0.0
    %737 = vmatmul.mubr.f32.gmra.mrb[0].mxu0 %v670
    %v738 = vpop.f32.mrb[0].mxu0
    %v739 = vadd.f32 0.0, %v738
    %v740 = vpop.f32.mrb[0].mxu0
    %741 = vdwg.mxu0
    %742 = vrot.lane.b32.xlu0 %v409, 96
    %v743 = vpop.permute.xlu0 %742
    %744 = vrot.lane.b32.xlu0 %v399, 32
    %v745 = vpop.permute.xlu0 %744
    %v746 = vsel %vm413, %v743, 0
    %v748 = vsel %vm413, %v745, 0
    %750 = vmatprep.subr.mxu0 0.0
    %751 = vmatpush1.xpose.msra.mxu0 %v748
    %752 = vmatprep.subr.mxu0 0.0
    %753 = vmatpush1.xpose.msra.mxu0 0.0
    %754 = vmatprep.subr.mxu0 0.0
    %755 = vmatpush1.xpose.msra.mxu0 0.0
    %756 = vmatprep.subr.mxu0 0.0
    %757 = vmatpush1.xpose.msra.mxu0 0.0
    %758 = vmatprep.subr.mxu0 0.0
    %759 = vmatpush1.xpose.msra.mxu0 0.0
    %760 = vmatprep.subr.mxu0 0.0
    %761 = vmatpush1.xpose.msra.mxu0 0.0
    %762 = vmatprep.subr.mxu0 0.0
    %763 = vmatpush1.xpose.msra.mxu0 0.0
    %764 = vmatprep.subr.mxu0 0.0
    %765 = vmatpush1.xpose.msra.mxu0 0.0
    %766 = vmatprep.subr.mxu0 0.0
    %767 = vmatpush1.xpose.msra.mxu0 0.0
    %768 = vmatprep.subr.mxu0 0.0
    %769 = vmatpush1.xpose.msra.mxu0 0.0
    %770 = vmatprep.subr.mxu0 0.0
    %771 = vmatpush1.xpose.msra.mxu0 0.0
    %772 = vmatprep.subr.mxu0 0.0
    %773 = vmatpush1.xpose.msra.mxu0 0.0
    %774 = vmatprep.subr.mxu0 0.0
    %775 = vmatpush1.xpose.msra.mxu0 0.0
    %776 = vmatprep.subr.mxu0 0.0
    %777 = vmatpush1.xpose.msra.mxu0 0.0
    %778 = vmatprep.subr.mxu0 0.0
    %779 = vmatpush1.xpose.msra.mxu0 0.0
    %780 = vmatprep.subr.mxu0 0.0
    %781 = vmatpush1.xpose.msra.mxu0 0.0
    %782 = vmatprep.subr.mxu0 0.0
    %783 = vmatpush1.xpose.msra.mxu0 0.0
    %784 = vmatprep.subr.mxu0 0.0
    %785 = vmatpush1.xpose.msra.mxu0 0.0
    %786 = vmatprep.subr.mxu0 0.0
    %787 = vmatpush1.xpose.msra.mxu0 0.0
    %788 = vmatprep.subr.mxu0 0.0
    %789 = vmatpush1.xpose.msra.mxu0 0.0
    %790 = vmatprep.subr.mxu0 0.0
    %791 = vmatpush1.xpose.msra.mxu0 0.0
    %792 = vmatprep.subr.mxu0 0.0
    %793 = vmatpush1.xpose.msra.mxu0 0.0
    %794 = vmatprep.subr.mxu0 0.0
    %795 = vmatpush1.xpose.msra.mxu0 0.0
    %796 = vmatprep.subr.mxu0 0.0
    %797 = vmatpush1.xpose.msra.mxu0 0.0
    %798 = vmatprep.subr.mxu0 0.0
    %799 = vmatpush1.xpose.msra.mxu0 0.0
    %800 = vmatprep.subr.mxu0 0.0
    %801 = vmatpush1.xpose.msra.mxu0 0.0
    %802 = vmatprep.subr.mxu0 0.0
    %803 = vmatpush1.xpose.msra.mxu0 0.0
    %804 = vmatprep.subr.mxu0 0.0
    %805 = vmatpush1.xpose.msra.mxu0 0.0
    %806 = vmatprep.subr.mxu0 0.0
    %807 = vmatpush1.xpose.msra.mxu0 0.0
    %808 = vmatprep.subr.mxu0 0.0
    %809 = vmatpush1.xpose.msra.mxu0 0.0
    %810 = vmatprep.subr.mxu0 0.0
    %811 = vmatpush1.xpose.msra.mxu0 0.0
    %812 = vmatprep.subr.mxu0 0.0
    %813 = vmatpush1.xpose.msra.mxu0 0.0
    %814 = vmatprep.mubr.f32.mxu0 0.0
    %815 = vmatmul.mubr.f32.gmra.mrb[0].mxu0 %v746
    %v816 = vpop.f32.mrb[0].mxu0
    %v817 = vadd.f32 0.0, %v816
    %v818 = vpop.f32.mrb[0].mxu0
    %819 = vdwg.mxu0
    %v820 = vsel %vm171, %v817, -1e+30
    %v821 = vsel %vm490, %v820, -inf
    %822 = vmax.xlane.f32.xlu0 %v821
    %v823 = vpop.xlane.xlu0 %822
    %v824 = vsub.f32 %v820, %v823
    %v825 = vmul.f32 %v824, 1.442695
    %v826 = vpow.pop %v825
    %v827 = vsel %vm490, %v826, 0.0
    %828 = vadd.xlane.f32.xlu0 %v827
    %v829 = vpop.xlane.xlu0 %828
    %v830 = vrcp.pop %v829
    %v831 = vmul.f32 %v826, %v830
    %832 = vrot.lane.b32.xlu0 %v401, 96
    %v833 = vpop.permute.xlu0 %832
    %v836 = vsel %vm490, %v831, 0
    %838 = vmatprep.subr.mxu0 0.0
    %839 = vmatpush1.msra.mxu0 %v833
    %840 = vmatprep.subr.mxu0 0.0
    %841 = vmatpush1.msra.mxu0 0.0
    %842 = vmatprep.subr.mxu0 0.0
    %843 = vmatpush1.msra.mxu0 0.0
    %844 = vmatprep.subr.mxu0 0.0
    %845 = vmatpush1.msra.mxu0 0.0
    %846 = vmatprep.subr.mxu0 0.0
    %847 = vmatpush1.msra.mxu0 0.0
    %848 = vmatprep.subr.mxu0 0.0
    %849 = vmatpush1.msra.mxu0 0.0
    %850 = vmatprep.subr.mxu0 0.0
    %851 = vmatpush1.msra.mxu0 0.0
    %852 = vmatprep.subr.mxu0 0.0
    %853 = vmatpush1.msra.mxu0 0.0
    %854 = vmatprep.subr.mxu0 0.0
    %855 = vmatpush1.msra.mxu0 0.0
    %856 = vmatprep.subr.mxu0 0.0
    %857 = vmatpush1.msra.mxu0 0.0
    %858 = vmatprep.subr.mxu0 0.0
    %859 = vmatpush1.msra.mxu0 0.0
    %860 = vmatprep.subr.mxu0 0.0
    %861 = vmatpush1.msra.mxu0 0.0
    %862 = vmatprep.subr.mxu0 0.0
    %863 = vmatpush1.msra.mxu0 0.0
    %864 = vmatprep.subr.mxu0 0.0
    %865 = vmatpush1.msra.mxu0 0.0
    %866 = vmatprep.subr.mxu0 0.0
    %867 = vmatpush1.msra.mxu0 0.0
    %868 = vmatprep.subr.mxu0 0.0
    %869 = vmatpush1.msra.mxu0 0.0
    %870 = vmatprep.subr.mxu0 0.0
    %871 = vmatpush1.msra.mxu0 0.0
    %872 = vmatprep.subr.mxu0 0.0
    %873 = vmatpush1.msra.mxu0 0.0
    %874 = vmatprep.subr.mxu0 0.0
    %875 = vmatpush1.msra.mxu0 0.0
    %876 = vmatprep.subr.mxu0 0.0
    %877 = vmatpush1.msra.mxu0 0.0
    %878 = vmatprep.subr.mxu0 0.0
    %879 = vmatpush1.msra.mxu0 0.0
    %880 = vmatprep.subr.mxu0 0.0
    %881 = vmatpush1.msra.mxu0 0.0
    %882 = vmatprep.subr.mxu0 0.0
    %883 = vmatpush1.msra.mxu0 0.0
    %884 = vmatprep.subr.mxu0 0.0
    %885 = vmatpush1.msra.mxu0 0.0
    %886 = vmatprep.subr.mxu0 0.0
    %887 = vmatpush1.msra.mxu0 0.0
    %888 = vmatprep.subr.mxu0 0.0
    %889 = vmatpush1.msra.mxu0 0.0
    %890 = vmatprep.subr.mxu0 0.0
    %891 = vmatpush1.msra.mxu0 0.0
    %892 = vmatprep.subr.mxu0 0.0
    %893 = vmatpush1.msra.mxu0 0.0
    %894 = vmatprep.subr.mxu0 0.0
    %895 = vmatpush1.msra.mxu0 0.0
    %896 = vmatprep.subr.mxu0 0.0
    %897 = vmatpush1.msra.mxu0 0.0
    %898 = vmatprep.subr.mxu0 0.0
    %899 = vmatpush1.msra.mxu0 0.0
    %900 = vmatprep.subr.mxu0 0.0
    %901 = vmatpush1.msra.mxu0 0.0
    %902 = vmatprep.mubr.f32.mxu0 0.0
    %903 = vmatmul.mubr.f32.gmra.mrb[0].mxu0 %v836
    %v904 = vpop.f32.mrb[0].mxu0
    %v905 = vadd.f32 0.0, %v904
    %v906 = vpop.f32.mrb[0].mxu0
    %907 = vdwg.mxu0
    %908 = vrot.lane.b32.xlu0 %v409, 80
    %v909 = vpop.permute.xlu0 %908
    %910 = vrot.lane.b32.xlu0 %v399, 16
    %v911 = vpop.permute.xlu0 %910
    %v912 = vsel %vm413, %v909, 0
    %v914 = vsel %vm413, %v911, 0
    %916 = vmatprep.subr.mxu0 0.0
    %917 = vmatpush1.xpose.msra.mxu0 %v914
    %918 = vmatprep.subr.mxu0 0.0
    %919 = vmatpush1.xpose.msra.mxu0 0.0
    %920 = vmatprep.subr.mxu0 0.0
    %921 = vmatpush1.xpose.msra.mxu0 0.0
    %922 = vmatprep.subr.mxu0 0.0
    %923 = vmatpush1.xpose.msra.mxu0 0.0
    %924 = vmatprep.subr.mxu0 0.0
    %925 = vmatpush1.xpose.msra.mxu0 0.0
    %926 = vmatprep.subr.mxu0 0.0
    %927 = vmatpush1.xpose.msra.mxu0 0.0
    %928 = vmatprep.subr.mxu0 0.0
    %929 = vmatpush1.xpose.msra.mxu0 0.0
    %930 = vmatprep.subr.mxu0 0.0
    %931 = vmatpush1.xpose.msra.mxu0 0.0
    %932 = vmatprep.subr.mxu0 0.0
    %933 = vmatpush1.xpose.msra.mxu0 0.0
    %934 = vmatprep.subr.mxu0 0.0
    %935 = vmatpush1.xpose.msra.mxu0 0.0
    %936 = vmatprep.subr.mxu0 0.0
    %937 = vmatpush1.xpose.msra.mxu0 0.0
    %938 = vmatprep.subr.mxu0 0.0
    %939 = vmatpush1.xpose.msra.mxu0 0.0
    %940 = vmatprep.subr.mxu0 0.0
    %941 = vmatpush1.xpose.msra.mxu0 0.0
    %942 = vmatprep.subr.mxu0 0.0
    %943 = vmatpush1.xpose.msra.mxu0 0.0
    %944 = vmatprep.subr.mxu0 0.0
    %945 = vmatpush1.xpose.msra.mxu0 0.0
    %946 = vmatprep.subr.mxu0 0.0
    %947 = vmatpush1.xpose.msra.mxu0 0.0
    %948 = vmatprep.subr.mxu0 0.0
    %949 = vmatpush1.xpose.msra.mxu0 0.0
    %950 = vmatprep.subr.mxu0 0.0
    %951 = vmatpush1.xpose.msra.mxu0 0.0
    %952 = vmatprep.subr.mxu0 0.0
    %953 = vmatpush1.xpose.msra.mxu0 0.0
    %954 = vmatprep.subr.mxu0 0.0
    %955 = vmatpush1.xpose.msra.mxu0 0.0
    %956 = vmatprep.subr.mxu0 0.0
    %957 = vmatpush1.xpose.msra.mxu0 0.0
    %958 = vmatprep.subr.mxu0 0.0
    %959 = vmatpush1.xpose.msra.mxu0 0.0
    %960 = vmatprep.subr.mxu0 0.0
    %961 = vmatpush1.xpose.msra.mxu0 0.0
    %962 = vmatprep.subr.mxu0 0.0
    %963 = vmatpush1.xpose.msra.mxu0 0.0
    %964 = vmatprep.subr.mxu0 0.0
    %965 = vmatpush1.xpose.msra.mxu0 0.0
    %966 = vmatprep.subr.mxu0 0.0
    %967 = vmatpush1.xpose.msra.mxu0 0.0
    %968 = vmatprep.subr.mxu0 0.0
    %969 = vmatpush1.xpose.msra.mxu0 0.0
    %970 = vmatprep.subr.mxu0 0.0
    %971 = vmatpush1.xpose.msra.mxu0 0.0
    %972 = vmatprep.subr.mxu0 0.0
    %973 = vmatpush1.xpose.msra.mxu0 0.0
    %974 = vmatprep.subr.mxu0 0.0
    %975 = vmatpush1.xpose.msra.mxu0 0.0
    %976 = vmatprep.subr.mxu0 0.0
    %977 = vmatpush1.xpose.msra.mxu0 0.0
    %978 = vmatprep.subr.mxu0 0.0
    %979 = vmatpush1.xpose.msra.mxu0 0.0
    %980 = vmatprep.mubr.f32.mxu0 0.0
    %981 = vmatmul.mubr.f32.gmra.mrb[0].mxu0 %v912
    %v982 = vpop.f32.mrb[0].mxu0
    %v983 = vadd.f32 0.0, %v982
    %v984 = vpop.f32.mrb[0].mxu0
    %985 = vdwg.mxu0
    %v986 = vsel %vm171, %v983, -1e+30
    %v987 = vsel %vm490, %v986, -inf
    %988 = vmax.xlane.f32.xlu0 %v987
    %v989 = vpop.xlane.xlu0 %988
    %v990 = vsub.f32 %v986, %v989
    %v991 = vmul.f32 %v990, 1.442695
    %v992 = vpow.pop %v991
    %v993 = vsel %vm490, %v992, 0.0
    %994 = vadd.xlane.f32.xlu0 %v993
    %v995 = vpop.xlane.xlu0 %994
    %v996 = vrcp.pop %v995
    %v997 = vmul.f32 %v992, %v996
    %998 = vrot.lane.b32.xlu0 %v401, 80
    %v999 = vpop.permute.xlu0 %998
    %v1002 = vsel %vm490, %v997, 0
    %1004 = vmatprep.subr.mxu0 0.0
    %1005 = vmatpush1.msra.mxu0 %v999
    %1006 = vmatprep.subr.mxu0 0.0
    %1007 = vmatpush1.msra.mxu0 0.0
    %1008 = vmatprep.subr.mxu0 0.0
    %1009 = vmatpush1.msra.mxu0 0.0
    %1010 = vmatprep.subr.mxu0 0.0
    %1011 = vmatpush1.msra.mxu0 0.0
    %1012 = vmatprep.subr.mxu0 0.0
    %1013 = vmatpush1.msra.mxu0 0.0
    %1014 = vmatprep.subr.mxu0 0.0
    %1015 = vmatpush1.msra.mxu0 0.0
    %1016 = vmatprep.subr.mxu0 0.0
    %1017 = vmatpush1.msra.mxu0 0.0
    %1018 = vmatprep.subr.mxu0 0.0
    %1019 = vmatpush1.msra.mxu0 0.0
    %1020 = vmatprep.subr.mxu0 0.0
    %1021 = vmatpush1.msra.mxu0 0.0
    %1022 = vmatprep.subr.mxu0 0.0
    %1023 = vmatpush1.msra.mxu0 0.0
    %1024 = vmatprep.subr.mxu0 0.0
    %1025 = vmatpush1.msra.mxu0 0.0
    %1026 = vmatprep.subr.mxu0 0.0
    %1027 = vmatpush1.msra.mxu0 0.0
    %1028 = vmatprep.subr.mxu0 0.0
    %1029 = vmatpush1.msra.mxu0 0.0
    %1030 = vmatprep.subr.mxu0 0.0
    %1031 = vmatpush1.msra.mxu0 0.0
    %1032 = vmatprep.subr.mxu0 0.0
    %1033 = vmatpush1.msra.mxu0 0.0
    %1034 = vmatprep.subr.mxu0 0.0
    %1035 = vmatpush1.msra.mxu0 0.0
    %1036 = vmatprep.subr.mxu0 0.0
    %1037 = vmatpush1.msra.mxu0 0.0
    %1038 = vmatprep.subr.mxu0 0.0
    %1039 = vmatpush1.msra.mxu0 0.0
    %1040 = vmatprep.subr.mxu0 0.0
    %1041 = vmatpush1.msra.mxu0 0.0
    %1042 = vmatprep.subr.mxu0 0.0
    %1043 = vmatpush1.msra.mxu0 0.0
    %1044 = vmatprep.subr.mxu0 0.0
    %1045 = vmatpush1.msra.mxu0 0.0
    %1046 = vmatprep.subr.mxu0 0.0
    %1047 = vmatpush1.msra.mxu0 0.0
    %1048 = vmatprep.subr.mxu0 0.0
    %1049 = vmatpush1.msra.mxu0 0.0
    %1050 = vmatprep.subr.mxu0 0.0
    %1051 = vmatpush1.msra.mxu0 0.0
    %1052 = vmatprep.subr.mxu0 0.0
    %1053 = vmatpush1.msra.mxu0 0.0
    %1054 = vmatprep.subr.mxu0 0.0
    %1055 = vmatpush1.msra.mxu0 0.0
    %1056 = vmatprep.subr.mxu0 0.0
    %1057 = vmatpush1.msra.mxu0 0.0
    %1058 = vmatprep.subr.mxu0 0.0
    %1059 = vmatpush1.msra.mxu0 0.0
    %1060 = vmatprep.subr.mxu0 0.0
    %1061 = vmatpush1.msra.mxu0 0.0
    %1062 = vmatprep.subr.mxu0 0.0
    %1063 = vmatpush1.msra.mxu0 0.0
    %1064 = vmatprep.subr.mxu0 0.0
    %1065 = vmatpush1.msra.mxu0 0.0
    %1066 = vmatprep.subr.mxu0 0.0
    %1067 = vmatpush1.msra.mxu0 0.0
    %1068 = vmatprep.mubr.f32.mxu0 0.0
    %1069 = vmatmul.mubr.f32.gmra.mrb[0].mxu0 %v1002
    %v1070 = vpop.f32.mrb[0].mxu0
    %v1071 = vadd.f32 0.0, %v1070
    %v1072 = vpop.f32.mrb[0].mxu0
    %1073 = vdwg.mxu0
    %1075 = vrot.lane.b32.xlu0 %v739, 16
    %v1076 = vpop.permute.xlu0 %1075
    %1079 = vrot.lane.b32.xlu0 %v905, 32
    %v1080 = vpop.permute.xlu0 %1079
    %1083 = vrot.lane.b32.xlu0 %v1071, 48
    %v1084 = vpop.permute.xlu0 %1083
    %v1086 = vsel %vm413, %v572, %v1076
    %vm1087 = vcmask 261120
    %v1088 = vsel %vm1087, %v1086, %v1080
    %vm1089 = vcmask 392192
    %v1090 = vsel %vm1089, %v1088, %v1084
    %v1091 = vmul.f32 %v405, 0.25
    %1093 = vrot.lane.b32.xlu0 %v405, 64
    %v1094 = vpop.permute.xlu0 %1093
    %v1096 = vsel %vm413, %v1091, 0
    %v1098 = vsel %vm413, %v1094, 0
    %1100 = vmatprep.subr.mxu0 0.0
    %1101 = vmatpush1.xpose.msra.mxu0 %v1098
    %1102 = vmatprep.subr.mxu0 0.0
    %1103 = vmatpush1.xpose.msra.mxu0 0.0
    %1104 = vmatprep.subr.mxu0 0.0
    %1105 = vmatpush1.xpose.msra.mxu0 0.0
    %1106 = vmatprep.subr.mxu0 0.0
    %1107 = vmatpush1.xpose.msra.mxu0 0.0
    %1108 = vmatprep.subr.mxu0 0.0
    %1109 = vmatpush1.xpose.msra.mxu0 0.0
    %1110 = vmatprep.subr.mxu0 0.0
    %1111 = vmatpush1.xpose.msra.mxu0 0.0
    %1112 = vmatprep.subr.mxu0 0.0
    %1113 = vmatpush1.xpose.msra.mxu0 0.0
    %1114 = vmatprep.subr.mxu0 0.0
    %1115 = vmatpush1.xpose.msra.mxu0 0.0
    %1116 = vmatprep.subr.mxu0 0.0
    %1117 = vmatpush1.xpose.msra.mxu0 0.0
    %1118 = vmatprep.subr.mxu0 0.0
    %1119 = vmatpush1.xpose.msra.mxu0 0.0
    %1120 = vmatprep.subr.mxu0 0.0
    %1121 = vmatpush1.xpose.msra.mxu0 0.0
    %1122 = vmatprep.subr.mxu0 0.0
    %1123 = vmatpush1.xpose.msra.mxu0 0.0
    %1124 = vmatprep.subr.mxu0 0.0
    %1125 = vmatpush1.xpose.msra.mxu0 0.0
    %1126 = vmatprep.subr.mxu0 0.0
    %1127 = vmatpush1.xpose.msra.mxu0 0.0
    %1128 = vmatprep.subr.mxu0 0.0
    %1129 = vmatpush1.xpose.msra.mxu0 0.0
    %1130 = vmatprep.subr.mxu0 0.0
    %1131 = vmatpush1.xpose.msra.mxu0 0.0
    %1132 = vmatprep.subr.mxu0 0.0
    %1133 = vmatpush1.xpose.msra.mxu0 0.0
    %1134 = vmatprep.subr.mxu0 0.0
    %1135 = vmatpush1.xpose.msra.mxu0 0.0
    %1136 = vmatprep.subr.mxu0 0.0
    %1137 = vmatpush1.xpose.msra.mxu0 0.0
    %1138 = vmatprep.subr.mxu0 0.0
    %1139 = vmatpush1.xpose.msra.mxu0 0.0
    %1140 = vmatprep.subr.mxu0 0.0
    %1141 = vmatpush1.xpose.msra.mxu0 0.0
    %1142 = vmatprep.subr.mxu0 0.0
    %1143 = vmatpush1.xpose.msra.mxu0 0.0
    %1144 = vmatprep.subr.mxu0 0.0
    %1145 = vmatpush1.xpose.msra.mxu0 0.0
    %1146 = vmatprep.subr.mxu0 0.0
    %1147 = vmatpush1.xpose.msra.mxu0 0.0
    %1148 = vmatprep.subr.mxu0 0.0
    %1149 = vmatpush1.xpose.msra.mxu0 0.0
    %1150 = vmatprep.subr.mxu0 0.0
    %1151 = vmatpush1.xpose.msra.mxu0 0.0
    %1152 = vmatprep.subr.mxu0 0.0
    %1153 = vmatpush1.xpose.msra.mxu0 0.0
    %1154 = vmatprep.subr.mxu0 0.0
    %1155 = vmatpush1.xpose.msra.mxu0 0.0
    %1156 = vmatprep.subr.mxu0 0.0
    %1157 = vmatpush1.xpose.msra.mxu0 0.0
    %1158 = vmatprep.subr.mxu0 0.0
    %1159 = vmatpush1.xpose.msra.mxu0 0.0
    %1160 = vmatprep.subr.mxu0 0.0
    %1161 = vmatpush1.xpose.msra.mxu0 0.0
    %1162 = vmatprep.subr.mxu0 0.0
    %1163 = vmatpush1.xpose.msra.mxu0 0.0
    %1164 = vmatprep.mubr.f32.mxu0 0.0
    %1165 = vmatmul.mubr.f32.gmra.mrb[0].mxu0 %v1096
    %v1166 = vpop.f32.mrb[0].mxu0
    %v1167 = vadd.f32 0.0, %v1166
    %v1168 = vpop.f32.mrb[0].mxu0
    %1169 = vdwg.mxu0
    %v1170 = vsel %vm171, %v1167, -1e+30
    %v1171 = vsel %vm490, %v1170, -inf
    %1172 = vmax.xlane.f32.xlu0 %v1171
    %v1173 = vpop.xlane.xlu0 %1172
    %v1174 = vsub.f32 %v1170, %v1173
    %v1175 = vmul.f32 %v1174, 1.442695
    %v1176 = vpow.pop %v1175
    %v1177 = vsel %vm490, %v1176, 0.0
    %1178 = vadd.xlane.f32.xlu0 %v1177
    %v1179 = vpop.xlane.xlu0 %1178
    %v1180 = vrcp.pop %v1179
    %v1181 = vmul.f32 %v1176, %v1180
    %v1183 = vsel %vm490, %v1181, 0
    %1185 = vmatprep.subr.mxu0 0.0
    %1186 = vmatpush1.msra.mxu0 %v407
    %1187 = vmatprep.subr.mxu0 0.0
    %1188 = vmatpush1.msra.mxu0 0.0
    %1189 = vmatprep.subr.mxu0 0.0
    %1190 = vmatpush1.msra.mxu0 0.0
    %1191 = vmatprep.subr.mxu0 0.0
    %1192 = vmatpush1.msra.mxu0 0.0
    %1193 = vmatprep.subr.mxu0 0.0
    %1194 = vmatpush1.msra.mxu0 0.0
    %1195 = vmatprep.subr.mxu0 0.0
    %1196 = vmatpush1.msra.mxu0 0.0
    %1197 = vmatprep.subr.mxu0 0.0
    %1198 = vmatpush1.msra.mxu0 0.0
    %1199 = vmatprep.subr.mxu0 0.0
    %1200 = vmatpush1.msra.mxu0 0.0
    %1201 = vmatprep.subr.mxu0 0.0
    %1202 = vmatpush1.msra.mxu0 0.0
    %1203 = vmatprep.subr.mxu0 0.0
    %1204 = vmatpush1.msra.mxu0 0.0
    %1205 = vmatprep.subr.mxu0 0.0
    %1206 = vmatpush1.msra.mxu0 0.0
    %1207 = vmatprep.subr.mxu0 0.0
    %1208 = vmatpush1.msra.mxu0 0.0
    %1209 = vmatprep.subr.mxu0 0.0
    %1210 = vmatpush1.msra.mxu0 0.0
    %1211 = vmatprep.subr.mxu0 0.0
    %1212 = vmatpush1.msra.mxu0 0.0
    %1213 = vmatprep.subr.mxu0 0.0
    %1214 = vmatpush1.msra.mxu0 0.0
    %1215 = vmatprep.subr.mxu0 0.0
    %1216 = vmatpush1.msra.mxu0 0.0
    %1217 = vmatprep.subr.mxu0 0.0
    %1218 = vmatpush1.msra.mxu0 0.0
    %1219 = vmatprep.subr.mxu0 0.0
    %1220 = vmatpush1.msra.mxu0 0.0
    %1221 = vmatprep.subr.mxu0 0.0
    %1222 = vmatpush1.msra.mxu0 0.0
    %1223 = vmatprep.subr.mxu0 0.0
    %1224 = vmatpush1.msra.mxu0 0.0
    %1225 = vmatprep.subr.mxu0 0.0
    %1226 = vmatpush1.msra.mxu0 0.0
    %1227 = vmatprep.subr.mxu0 0.0
    %1228 = vmatpush1.msra.mxu0 0.0
    %1229 = vmatprep.subr.mxu0 0.0
    %1230 = vmatpush1.msra.mxu0 0.0
    %1231 = vmatprep.subr.mxu0 0.0
    %1232 = vmatpush1.msra.mxu0 0.0
    %1233 = vmatprep.subr.mxu0 0.0
    %1234 = vmatpush1.msra.mxu0 0.0
    %1235 = vmatprep.subr.mxu0 0.0
    %1236 = vmatpush1.msra.mxu0 0.0
    %1237 = vmatprep.subr.mxu0 0.0
    %1238 = vmatpush1.msra.mxu0 0.0
    %1239 = vmatprep.subr.mxu0 0.0
    %1240 = vmatpush1.msra.mxu0 0.0
    %1241 = vmatprep.subr.mxu0 0.0
    %1242 = vmatpush1.msra.mxu0 0.0
    %1243 = vmatprep.subr.mxu0 0.0
    %1244 = vmatpush1.msra.mxu0 0.0
    %1245 = vmatprep.subr.mxu0 0.0
    %1246 = vmatpush1.msra.mxu0 0.0
    %1247 = vmatprep.subr.mxu0 0.0
    %1248 = vmatpush1.msra.mxu0 0.0
    %1249 = vmatprep.mubr.f32.mxu0 0.0
    %1250 = vmatmul.mubr.f32.gmra.mrb[0].mxu0 %v1183
    %v1251 = vpop.f32.mrb[0].mxu0
    %v1252 = vadd.f32 0.0, %v1251
    %v1253 = vpop.f32.mrb[0].mxu0
    %1254 = vdwg.mxu0
    %1255 = vrot.lane.b32.xlu0 %v1091, 112
    %v1256 = vpop.permute.xlu0 %1255
    %1257 = vrot.lane.b32.xlu0 %v405, 48
    %v1258 = vpop.permute.xlu0 %1257
    %v1259 = vsel %vm413, %v1256, 0
    %v1261 = vsel %vm413, %v1258, 0
    %1263 = vmatprep.subr.mxu0 0.0
    %1264 = vmatpush1.xpose.msra.mxu0 %v1261
    %1265 = vmatprep.subr.mxu0 0.0
    %1266 = vmatpush1.xpose.msra.mxu0 0.0
    %1267 = vmatprep.subr.mxu0 0.0
    %1268 = vmatpush1.xpose.msra.mxu0 0.0
    %1269 = vmatprep.subr.mxu0 0.0
    %1270 = vmatpush1.xpose.msra.mxu0 0.0
    %1271 = vmatprep.subr.mxu0 0.0
    %1272 = vmatpush1.xpose.msra.mxu0 0.0
    %1273 = vmatprep.subr.mxu0 0.0
    %1274 = vmatpush1.xpose.msra.mxu0 0.0
    %1275 = vmatprep.subr.mxu0 0.0
    %1276 = vmatpush1.xpose.msra.mxu0 0.0
    %1277 = vmatprep.subr.mxu0 0.0
    %1278 = vmatpush1.xpose.msra.mxu0 0.0
    %1279 = vmatprep.subr.mxu0 0.0
    %1280 = vmatpush1.xpose.msra.mxu0 0.0
    %1281 = vmatprep.subr.mxu0 0.0
    %1282 = vmatpush1.xpose.msra.mxu0 0.0
    %1283 = vmatprep.subr.mxu0 0.0
    %1284 = vmatpush1.xpose.msra.mxu0 0.0
    %1285 = vmatprep.subr.mxu0 0.0
    %1286 = vmatpush1.xpose.msra.mxu0 0.0
    %1287 = vmatprep.subr.mxu0 0.0
    %1288 = vmatpush1.xpose.msra.mxu0 0.0
    %1289 = vmatprep.subr.mxu0 0.0
    %1290 = vmatpush1.xpose.msra.mxu0 0.0
    %1291 = vmatprep.subr.mxu0 0.0
    %1292 = vmatpush1.xpose.msra.mxu0 0.0
    %1293 = vmatprep.subr.mxu0 0.0
    %1294 = vmatpush1.xpose.msra.mxu0 0.0
    %1295 = vmatprep.subr.mxu0 0.0
    %1296 = vmatpush1.xpose.msra.mxu0 0.0
    %1297 = vmatprep.subr.mxu0 0.0
    %1298 = vmatpush1.xpose.msra.mxu0 0.0
    %1299 = vmatprep.subr.mxu0 0.0
    %1300 = vmatpush1.xpose.msra.mxu0 0.0
    %1301 = vmatprep.subr.mxu0 0.0
    %1302 = vmatpush1.xpose.msra.mxu0 0.0
    %1303 = vmatprep.subr.mxu0 0.0
    %1304 = vmatpush1.xpose.msra.mxu0 0.0
    %1305 = vmatprep.subr.mxu0 0.0
    %1306 = vmatpush1.xpose.msra.mxu0 0.0
    %1307 = vmatprep.subr.mxu0 0.0
    %1308 = vmatpush1.xpose.msra.mxu0 0.0
    %1309 = vmatprep.subr.mxu0 0.0
    %1310 = vmatpush1.xpose.msra.mxu0 0.0
    %1311 = vmatprep.subr.mxu0 0.0
    %1312 = vmatpush1.xpose.msra.mxu0 0.0
    %1313 = vmatprep.subr.mxu0 0.0
    %1314 = vmatpush1.xpose.msra.mxu0 0.0
    %1315 = vmatprep.subr.mxu0 0.0
    %1316 = vmatpush1.xpose.msra.mxu0 0.0
    %1317 = vmatprep.subr.mxu0 0.0
    %1318 = vmatpush1.xpose.msra.mxu0 0.0
    %1319 = vmatprep.subr.mxu0 0.0
    %1320 = vmatpush1.xpose.msra.mxu0 0.0
    %1321 = vmatprep.subr.mxu0 0.0
    %1322 = vmatpush1.xpose.msra.mxu0 0.0
    %1323 = vmatprep.subr.mxu0 0.0
    %1324 = vmatpush1.xpose.msra.mxu0 0.0
    %1325 = vmatprep.subr.mxu0 0.0
    %1326 = vmatpush1.xpose.msra.mxu0 0.0
    %1327 = vmatprep.mubr.f32.mxu0 0.0
    %1328 = vmatmul.mubr.f32.gmra.mrb[0].mxu0 %v1259
    %v1329 = vpop.f32.mrb[0].mxu0
    %v1330 = vadd.f32 0.0, %v1329
    %v1331 = vpop.f32.mrb[0].mxu0
    %1332 = vdwg.mxu0
    %v1333 = vsel %vm171, %v1330, -1e+30
    %v1334 = vsel %vm490, %v1333, -inf
    %1335 = vmax.xlane.f32.xlu0 %v1334
    %v1336 = vpop.xlane.xlu0 %1335
    %v1337 = vsub.f32 %v1333, %v1336
    %v1338 = vmul.f32 %v1337, 1.442695
    %v1339 = vpow.pop %v1338
    %v1340 = vsel %vm490, %v1339, 0.0
    %1341 = vadd.xlane.f32.xlu0 %v1340
    %v1342 = vpop.xlane.xlu0 %1341
    %v1343 = vrcp.pop %v1342
    %v1344 = vmul.f32 %v1339, %v1343
    %1346 = vrot.lane.b32.xlu0 %v407, 112
    %v1347 = vpop.permute.xlu0 %1346
    %v1350 = vsel %vm490, %v1344, 0
    %1352 = vmatprep.subr.mxu0 0.0
    %1353 = vmatpush1.msra.mxu0 %v1347
    %1354 = vmatprep.subr.mxu0 0.0
    %1355 = vmatpush1.msra.mxu0 0.0
    %1356 = vmatprep.subr.mxu0 0.0
    %1357 = vmatpush1.msra.mxu0 0.0
    %1358 = vmatprep.subr.mxu0 0.0
    %1359 = vmatpush1.msra.mxu0 0.0
    %1360 = vmatprep.subr.mxu0 0.0
    %1361 = vmatpush1.msra.mxu0 0.0
    %1362 = vmatprep.subr.mxu0 0.0
    %1363 = vmatpush1.msra.mxu0 0.0
    %1364 = vmatprep.subr.mxu0 0.0
    %1365 = vmatpush1.msra.mxu0 0.0
    %1366 = vmatprep.subr.mxu0 0.0
    %1367 = vmatpush1.msra.mxu0 0.0
    %1368 = vmatprep.subr.mxu0 0.0
    %1369 = vmatpush1.msra.mxu0 0.0
    %1370 = vmatprep.subr.mxu0 0.0
    %1371 = vmatpush1.msra.mxu0 0.0
    %1372 = vmatprep.subr.mxu0 0.0
    %1373 = vmatpush1.msra.mxu0 0.0
    %1374 = vmatprep.subr.mxu0 0.0
    %1375 = vmatpush1.msra.mxu0 0.0
    %1376 = vmatprep.subr.mxu0 0.0
    %1377 = vmatpush1.msra.mxu0 0.0
    %1378 = vmatprep.subr.mxu0 0.0
    %1379 = vmatpush1.msra.mxu0 0.0
    %1380 = vmatprep.subr.mxu0 0.0
    %1381 = vmatpush1.msra.mxu0 0.0
    %1382 = vmatprep.subr.mxu0 0.0
    %1383 = vmatpush1.msra.mxu0 0.0
    %1384 = vmatprep.subr.mxu0 0.0
    %1385 = vmatpush1.msra.mxu0 0.0
    %1386 = vmatprep.subr.mxu0 0.0
    %1387 = vmatpush1.msra.mxu0 0.0
    %1388 = vmatprep.subr.mxu0 0.0
    %1389 = vmatpush1.msra.mxu0 0.0
    %1390 = vmatprep.subr.mxu0 0.0
    %1391 = vmatpush1.msra.mxu0 0.0
    %1392 = vmatprep.subr.mxu0 0.0
    %1393 = vmatpush1.msra.mxu0 0.0
    %1394 = vmatprep.subr.mxu0 0.0
    %1395 = vmatpush1.msra.mxu0 0.0
    %1396 = vmatprep.subr.mxu0 0.0
    %1397 = vmatpush1.msra.mxu0 0.0
    %1398 = vmatprep.subr.mxu0 0.0
    %1399 = vmatpush1.msra.mxu0 0.0
    %1400 = vmatprep.subr.mxu0 0.0
    %1401 = vmatpush1.msra.mxu0 0.0
    %1402 = vmatprep.subr.mxu0 0.0
    %1403 = vmatpush1.msra.mxu0 0.0
    %1404 = vmatprep.subr.mxu0 0.0
    %1405 = vmatpush1.msra.mxu0 0.0
    %1406 = vmatprep.subr.mxu0 0.0
    %1407 = vmatpush1.msra.mxu0 0.0
    %1408 = vmatprep.subr.mxu0 0.0
    %1409 = vmatpush1.msra.mxu0 0.0
    %1410 = vmatprep.subr.mxu0 0.0
    %1411 = vmatpush1.msra.mxu0 0.0
    %1412 = vmatprep.subr.mxu0 0.0
    %1413 = vmatpush1.msra.mxu0 0.0
    %1414 = vmatprep.subr.mxu0 0.0
    %1415 = vmatpush1.msra.mxu0 0.0
    %1416 = vmatprep.mubr.f32.mxu0 0.0
    %1417 = vmatmul.mubr.f32.gmra.mrb[0].mxu0 %v1350
    %v1418 = vpop.f32.mrb[0].mxu0
    %v1419 = vadd.f32 0.0, %v1418
    %v1420 = vpop.f32.mrb[0].mxu0
    %1421 = vdwg.mxu0
    %1422 = vrot.lane.b32.xlu0 %v1091, 96
    %v1423 = vpop.permute.xlu0 %1422
    %1424 = vrot.lane.b32.xlu0 %v405, 32
    %v1425 = vpop.permute.xlu0 %1424
    %v1426 = vsel %vm413, %v1423, 0
    %v1428 = vsel %vm413, %v1425, 0
    %1430 = vmatprep.subr.mxu0 0.0
    %1431 = vmatpush1.xpose.msra.mxu0 %v1428
    %1432 = vmatprep.subr.mxu0 0.0
    %1433 = vmatpush1.xpose.msra.mxu0 0.0
    %1434 = vmatprep.subr.mxu0 0.0
    %1435 = vmatpush1.xpose.msra.mxu0 0.0
    %1436 = vmatprep.subr.mxu0 0.0
    %1437 = vmatpush1.xpose.msra.mxu0 0.0
    %1438 = vmatprep.subr.mxu0 0.0
    %1439 = vmatpush1.xpose.msra.mxu0 0.0
    %1440 = vmatprep.subr.mxu0 0.0
    %1441 = vmatpush1.xpose.msra.mxu0 0.0
    %1442 = vmatprep.subr.mxu0 0.0
    %1443 = vmatpush1.xpose.msra.mxu0 0.0
    %1444 = vmatprep.subr.mxu0 0.0
    %1445 = vmatpush1.xpose.msra.mxu0 0.0
    %1446 = vmatprep.subr.mxu0 0.0
    %1447 = vmatpush1.xpose.msra.mxu0 0.0
    %1448 = vmatprep.subr.mxu0 0.0
    %1449 = vmatpush1.xpose.msra.mxu0 0.0
    %1450 = vmatprep.subr.mxu0 0.0
    %1451 = vmatpush1.xpose.msra.mxu0 0.0
    %1452 = vmatprep.subr.mxu0 0.0
    %1453 = vmatpush1.xpose.msra.mxu0 0.0
    %1454 = vmatprep.subr.mxu0 0.0
    %1455 = vmatpush1.xpose.msra.mxu0 0.0
    %1456 = vmatprep.subr.mxu0 0.0
    %1457 = vmatpush1.xpose.msra.mxu0 0.0
    %1458 = vmatprep.subr.mxu0 0.0
    %1459 = vmatpush1.xpose.msra.mxu0 0.0
    %1460 = vmatprep.subr.mxu0 0.0
    %1461 = vmatpush1.xpose.msra.mxu0 0.0
    %1462 = vmatprep.subr.mxu0 0.0
    %1463 = vmatpush1.xpose.msra.mxu0 0.0
    %1464 = vmatprep.subr.mxu0 0.0
    %1465 = vmatpush1.xpose.msra.mxu0 0.0
    %1466 = vmatprep.subr.mxu0 0.0
    %1467 = vmatpush1.xpose.msra.mxu0 0.0
    %1468 = vmatprep.subr.mxu0 0.0
    %1469 = vmatpush1.xpose.msra.mxu0 0.0
    %1470 = vmatprep.subr.mxu0 0.0
    %1471 = vmatpush1.xpose.msra.mxu0 0.0
    %1472 = vmatprep.subr.mxu0 0.0
    %1473 = vmatpush1.xpose.msra.mxu0 0.0
    %1474 = vmatprep.subr.mxu0 0.0
    %1475 = vmatpush1.xpose.msra.mxu0 0.0
    %1476 = vmatprep.subr.mxu0 0.0
    %1477 = vmatpush1.xpose.msra.mxu0 0.0
    %1478 = vmatprep.subr.mxu0 0.0
    %1479 = vmatpush1.xpose.msra.mxu0 0.0
    %1480 = vmatprep.subr.mxu0 0.0
    %1481 = vmatpush1.xpose.msra.mxu0 0.0
    %1482 = vmatprep.subr.mxu0 0.0
    %1483 = vmatpush1.xpose.msra.mxu0 0.0
    %1484 = vmatprep.subr.mxu0 0.0
    %1485 = vmatpush1.xpose.msra.mxu0 0.0
    %1486 = vmatprep.subr.mxu0 0.0
    %1487 = vmatpush1.xpose.msra.mxu0 0.0
    %1488 = vmatprep.subr.mxu0 0.0
    %1489 = vmatpush1.xpose.msra.mxu0 0.0
    %1490 = vmatprep.subr.mxu0 0.0
    %1491 = vmatpush1.xpose.msra.mxu0 0.0
    %1492 = vmatprep.subr.mxu0 0.0
    %1493 = vmatpush1.xpose.msra.mxu0 0.0
    %1494 = vmatprep.mubr.f32.mxu0 0.0
    %1495 = vmatmul.mubr.f32.gmra.mrb[0].mxu0 %v1426
    %v1496 = vpop.f32.mrb[0].mxu0
    %v1497 = vadd.f32 0.0, %v1496
    %v1498 = vpop.f32.mrb[0].mxu0
    %1499 = vdwg.mxu0
    %v1500 = vsel %vm171, %v1497, -1e+30
    %v1501 = vsel %vm490, %v1500, -inf
    %1502 = vmax.xlane.f32.xlu0 %v1501
    %v1503 = vpop.xlane.xlu0 %1502
    %v1504 = vsub.f32 %v1500, %v1503
    %v1505 = vmul.f32 %v1504, 1.442695
    %v1506 = vpow.pop %v1505
    %v1507 = vsel %vm490, %v1506, 0.0
    %1508 = vadd.xlane.f32.xlu0 %v1507
    %v1509 = vpop.xlane.xlu0 %1508
    %v1510 = vrcp.pop %v1509
    %v1511 = vmul.f32 %v1506, %v1510
    %1512 = vrot.lane.b32.xlu0 %v407, 96
    %v1513 = vpop.permute.xlu0 %1512
    %v1516 = vsel %vm490, %v1511, 0
    %1518 = vmatprep.subr.mxu0 0.0
    %1519 = vmatpush1.msra.mxu0 %v1513
    %1520 = vmatprep.subr.mxu0 0.0
    %1521 = vmatpush1.msra.mxu0 0.0
    %1522 = vmatprep.subr.mxu0 0.0
    %1523 = vmatpush1.msra.mxu0 0.0
    %1524 = vmatprep.subr.mxu0 0.0
    %1525 = vmatpush1.msra.mxu0 0.0
    %1526 = vmatprep.subr.mxu0 0.0
    %1527 = vmatpush1.msra.mxu0 0.0
    %1528 = vmatprep.subr.mxu0 0.0
    %1529 = vmatpush1.msra.mxu0 0.0
    %1530 = vmatprep.subr.mxu0 0.0
    %1531 = vmatpush1.msra.mxu0 0.0
    %1532 = vmatprep.subr.mxu0 0.0
    %1533 = vmatpush1.msra.mxu0 0.0
    %1534 = vmatprep.subr.mxu0 0.0
    %1535 = vmatpush1.msra.mxu0 0.0
    %1536 = vmatprep.subr.mxu0 0.0
    %1537 = vmatpush1.msra.mxu0 0.0
    %1538 = vmatprep.subr.mxu0 0.0
    %1539 = vmatpush1.msra.mxu0 0.0
    %1540 = vmatprep.subr.mxu0 0.0
    %1541 = vmatpush1.msra.mxu0 0.0
    %1542 = vmatprep.subr.mxu0 0.0
    %1543 = vmatpush1.msra.mxu0 0.0
    %1544 = vmatprep.subr.mxu0 0.0
    %1545 = vmatpush1.msra.mxu0 0.0
    %1546 = vmatprep.subr.mxu0 0.0
    %1547 = vmatpush1.msra.mxu0 0.0
    %1548 = vmatprep.subr.mxu0 0.0
    %1549 = vmatpush1.msra.mxu0 0.0
    %1550 = vmatprep.subr.mxu0 0.0
    %1551 = vmatpush1.msra.mxu0 0.0
    %1552 = vmatprep.subr.mxu0 0.0
    %1553 = vmatpush1.msra.mxu0 0.0
    %1554 = vmatprep.subr.mxu0 0.0
    %1555 = vmatpush1.msra.mxu0 0.0
    %1556 = vmatprep.subr.mxu0 0.0
    %1557 = vmatpush1.msra.mxu0 0.0
    %1558 = vmatprep.subr.mxu0 0.0
    %1559 = vmatpush1.msra.mxu0 0.0
    %1560 = vmatprep.subr.mxu0 0.0
    %1561 = vmatpush1.msra.mxu0 0.0
    %1562 = vmatprep.subr.mxu0 0.0
    %1563 = vmatpush1.msra.mxu0 0.0
    %1564 = vmatprep.subr.mxu0 0.0
    %1565 = vmatpush1.msra.mxu0 0.0
    %1566 = vmatprep.subr.mxu0 0.0
    %1567 = vmatpush1.msra.mxu0 0.0
    %1568 = vmatprep.subr.mxu0 0.0
    %1569 = vmatpush1.msra.mxu0 0.0
    %1570 = vmatprep.subr.mxu0 0.0
    %1571 = vmatpush1.msra.mxu0 0.0
    %1572 = vmatprep.subr.mxu0 0.0
    %1573 = vmatpush1.msra.mxu0 0.0
    %1574 = vmatprep.subr.mxu0 0.0
    %1575 = vmatpush1.msra.mxu0 0.0
    %1576 = vmatprep.subr.mxu0 0.0
    %1577 = vmatpush1.msra.mxu0 0.0
    %1578 = vmatprep.subr.mxu0 0.0
    %1579 = vmatpush1.msra.mxu0 0.0
    %1580 = vmatprep.subr.mxu0 0.0
    %1581 = vmatpush1.msra.mxu0 0.0
    %1582 = vmatprep.mubr.f32.mxu0 0.0
    %1583 = vmatmul.mubr.f32.gmra.mrb[0].mxu0 %v1516
    %v1584 = vpop.f32.mrb[0].mxu0
    %v1585 = vadd.f32 0.0, %v1584
    %v1586 = vpop.f32.mrb[0].mxu0
    %1587 = vdwg.mxu0
    %1588 = vrot.lane.b32.xlu0 %v1091, 80
    %v1589 = vpop.permute.xlu0 %1588
    %1590 = vrot.lane.b32.xlu0 %v405, 16
    %v1591 = vpop.permute.xlu0 %1590
    %v1592 = vsel %vm413, %v1589, 0
    %v1594 = vsel %vm413, %v1591, 0
    %1596 = vmatprep.subr.mxu0 0.0
    %1597 = vmatpush1.xpose.msra.mxu0 %v1594
    %1598 = vmatprep.subr.mxu0 0.0
    %1599 = vmatpush1.xpose.msra.mxu0 0.0
    %1600 = vmatprep.subr.mxu0 0.0
    %1601 = vmatpush1.xpose.msra.mxu0 0.0
    %1602 = vmatprep.subr.mxu0 0.0
    %1603 = vmatpush1.xpose.msra.mxu0 0.0
    %1604 = vmatprep.subr.mxu0 0.0
    %1605 = vmatpush1.xpose.msra.mxu0 0.0
    %1606 = vmatprep.subr.mxu0 0.0
    %1607 = vmatpush1.xpose.msra.mxu0 0.0
    %1608 = vmatprep.subr.mxu0 0.0
    %1609 = vmatpush1.xpose.msra.mxu0 0.0
    %1610 = vmatprep.subr.mxu0 0.0
    %1611 = vmatpush1.xpose.msra.mxu0 0.0
    %1612 = vmatprep.subr.mxu0 0.0
    %1613 = vmatpush1.xpose.msra.mxu0 0.0
    %1614 = vmatprep.subr.mxu0 0.0
    %1615 = vmatpush1.xpose.msra.mxu0 0.0
    %1616 = vmatprep.subr.mxu0 0.0
    %1617 = vmatpush1.xpose.msra.mxu0 0.0
    %1618 = vmatprep.subr.mxu0 0.0
    %1619 = vmatpush1.xpose.msra.mxu0 0.0
    %1620 = vmatprep.subr.mxu0 0.0
    %1621 = vmatpush1.xpose.msra.mxu0 0.0
    %1622 = vmatprep.subr.mxu0 0.0
    %1623 = vmatpush1.xpose.msra.mxu0 0.0
    %1624 = vmatprep.subr.mxu0 0.0
    %1625 = vmatpush1.xpose.msra.mxu0 0.0
    %1626 = vmatprep.subr.mxu0 0.0
    %1627 = vmatpush1.xpose.msra.mxu0 0.0
    %1628 = vmatprep.subr.mxu0 0.0
    %1629 = vmatpush1.xpose.msra.mxu0 0.0
    %1630 = vmatprep.subr.mxu0 0.0
    %1631 = vmatpush1.xpose.msra.mxu0 0.0
    %1632 = vmatprep.subr.mxu0 0.0
    %1633 = vmatpush1.xpose.msra.mxu0 0.0
    %1634 = vmatprep.subr.mxu0 0.0
    %1635 = vmatpush1.xpose.msra.mxu0 0.0
    %1636 = vmatprep.subr.mxu0 0.0
    %1637 = vmatpush1.xpose.msra.mxu0 0.0
    %1638 = vmatprep.subr.mxu0 0.0
    %1639 = vmatpush1.xpose.msra.mxu0 0.0
    %1640 = vmatprep.subr.mxu0 0.0
    %1641 = vmatpush1.xpose.msra.mxu0 0.0
    %1642 = vmatprep.subr.mxu0 0.0
    %1643 = vmatpush1.xpose.msra.mxu0 0.0
    %1644 = vmatprep.subr.mxu0 0.0
    %1645 = vmatpush1.xpose.msra.mxu0 0.0
    %1646 = vmatprep.subr.mxu0 0.0
    %1647 = vmatpush1.xpose.msra.mxu0 0.0
    %1648 = vmatprep.subr.mxu0 0.0
    %1649 = vmatpush1.xpose.msra.mxu0 0.0
    %1650 = vmatprep.subr.mxu0 0.0
    %1651 = vmatpush1.xpose.msra.mxu0 0.0
    %1652 = vmatprep.subr.mxu0 0.0
    %1653 = vmatpush1.xpose.msra.mxu0 0.0
    %1654 = vmatprep.subr.mxu0 0.0
    %1655 = vmatpush1.xpose.msra.mxu0 0.0
    %1656 = vmatprep.subr.mxu0 0.0
    %1657 = vmatpush1.xpose.msra.mxu0 0.0
    %1658 = vmatprep.subr.mxu0 0.0
    %1659 = vmatpush1.xpose.msra.mxu0 0.0
    %1660 = vmatprep.mubr.f32.mxu0 0.0
    %1661 = vmatmul.mubr.f32.gmra.mrb[0].mxu0 %v1592
    %v1662 = vpop.f32.mrb[0].mxu0
    %v1663 = vadd.f32 0.0, %v1662
    %v1664 = vpop.f32.mrb[0].mxu0
    %1665 = vdwg.mxu0
    %v1666 = vsel %vm171, %v1663, -1e+30
    %v1667 = vsel %vm490, %v1666, -inf
    %1668 = vmax.xlane.f32.xlu0 %v1667
    %v1669 = vpop.xlane.xlu0 %1668
    %v1670 = vsub.f32 %v1666, %v1669
    %v1671 = vmul.f32 %v1670, 1.442695
    %v1672 = vpow.pop %v1671
    %v1673 = vsel %vm490, %v1672, 0.0
    %1674 = vadd.xlane.f32.xlu0 %v1673
    %v1675 = vpop.xlane.xlu0 %1674
    %v1676 = vrcp.pop %v1675
    %v1677 = vmul.f32 %v1672, %v1676
    %1678 = vrot.lane.b32.xlu0 %v407, 80
    %v1679 = vpop.permute.xlu0 %1678
    %v1682 = vsel %vm490, %v1677, 0
    %1684 = vmatprep.subr.mxu0 0.0
    %1685 = vmatpush1.msra.mxu0 %v1679
    %1686 = vmatprep.subr.mxu0 0.0
    %1687 = vmatpush1.msra.mxu0 0.0
    %1688 = vmatprep.subr.mxu0 0.0
    %1689 = vmatpush1.msra.mxu0 0.0
    %1690 = vmatprep.subr.mxu0 0.0
    %1691 = vmatpush1.msra.mxu0 0.0
    %1692 = vmatprep.subr.mxu0 0.0
    %1693 = vmatpush1.msra.mxu0 0.0
    %1694 = vmatprep.subr.mxu0 0.0
    %1695 = vmatpush1.msra.mxu0 0.0
    %1696 = vmatprep.subr.mxu0 0.0
    %1697 = vmatpush1.msra.mxu0 0.0
    %1698 = vmatprep.subr.mxu0 0.0
    %1699 = vmatpush1.msra.mxu0 0.0
    %1700 = vmatprep.subr.mxu0 0.0
    %1701 = vmatpush1.msra.mxu0 0.0
    %1702 = vmatprep.subr.mxu0 0.0
    %1703 = vmatpush1.msra.mxu0 0.0
    %1704 = vmatprep.subr.mxu0 0.0
    %1705 = vmatpush1.msra.mxu0 0.0
    %1706 = vmatprep.subr.mxu0 0.0
    %1707 = vmatpush1.msra.mxu0 0.0
    %1708 = vmatprep.subr.mxu0 0.0
    %1709 = vmatpush1.msra.mxu0 0.0
    %1710 = vmatprep.subr.mxu0 0.0
    %1711 = vmatpush1.msra.mxu0 0.0
    %1712 = vmatprep.subr.mxu0 0.0
    %1713 = vmatpush1.msra.mxu0 0.0
    %1714 = vmatprep.subr.mxu0 0.0
    %1715 = vmatpush1.msra.mxu0 0.0
    %1716 = vmatprep.subr.mxu0 0.0
    %1717 = vmatpush1.msra.mxu0 0.0
    %1718 = vmatprep.subr.mxu0 0.0
    %1719 = vmatpush1.msra.mxu0 0.0
    %1720 = vmatprep.subr.mxu0 0.0
    %1721 = vmatpush1.msra.mxu0 0.0
    %1722 = vmatprep.subr.mxu0 0.0
    %1723 = vmatpush1.msra.mxu0 0.0
    %1724 = vmatprep.subr.mxu0 0.0
    %1725 = vmatpush1.msra.mxu0 0.0
    %1726 = vmatprep.subr.mxu0 0.0
    %1727 = vmatpush1.msra.mxu0 0.0
    %1728 = vmatprep.subr.mxu0 0.0
    %1729 = vmatpush1.msra.mxu0 0.0
    %1730 = vmatprep.subr.mxu0 0.0
    %1731 = vmatpush1.msra.mxu0 0.0
    %1732 = vmatprep.subr.mxu0 0.0
    %1733 = vmatpush1.msra.mxu0 0.0
    %1734 = vmatprep.subr.mxu0 0.0
    %1735 = vmatpush1.msra.mxu0 0.0
    %1736 = vmatprep.subr.mxu0 0.0
    %1737 = vmatpush1.msra.mxu0 0.0
    %1738 = vmatprep.subr.mxu0 0.0
    %1739 = vmatpush1.msra.mxu0 0.0
    %1740 = vmatprep.subr.mxu0 0.0
    %1741 = vmatpush1.msra.mxu0 0.0
    %1742 = vmatprep.subr.mxu0 0.0
    %1743 = vmatpush1.msra.mxu0 0.0
    %1744 = vmatprep.subr.mxu0 0.0
    %1745 = vmatpush1.msra.mxu0 0.0
    %1746 = vmatprep.subr.mxu0 0.0
    %1747 = vmatpush1.msra.mxu0 0.0
    %1748 = vmatprep.mubr.f32.mxu0 0.0
    %1749 = vmatmul.mubr.f32.gmra.mrb[0].mxu0 %v1682
    %v1750 = vpop.f32.mrb[0].mxu0
    %v1751 = vadd.f32 0.0, %v1750
    %v1752 = vpop.f32.mrb[0].mxu0
    %1753 = vdwg.mxu0
    %1755 = vrot.lane.b32.xlu0 %v1419, 16
    %v1756 = vpop.permute.xlu0 %1755
    %1759 = vrot.lane.b32.xlu0 %v1585, 32
    %v1760 = vpop.permute.xlu0 %1759
    %1763 = vrot.lane.b32.xlu0 %v1751, 48
    %v1764 = vpop.permute.xlu0 %1763
    %v1766 = vsel %vm413, %v1252, %v1756
    %v1767 = vsel %vm1087, %v1766, %v1760
    %v1768 = vsel %vm1089, %v1767, %v1764
    %v1769 = vld [vmem:[%s7] sm:$0xff]
    %v1770 = vld [vmem:[%s7 + $0x8] sm:$0xff]
    %v1771 = vld [vmem:[%s7 + $0x10] sm:$0xff]
    %v1772 = vld [vmem:[%s7 + $0x18] sm:$0xff]
    %v1773 = vld [vmem:[%s7 + $0x20] sm:$0xff]
    %v1774 = vld [vmem:[%s7 + $0x28] sm:$0xff]
    %v1775 = vld [vmem:[%s7 + $0x30] sm:$0xff]
    %v1776 = vld [vmem:[%s7 + $0x38] sm:$0xff]
    %v1778 = vsel %vm174, %v1090, 0
    %v1781 = vsel %vm174, %v1768, 0
    %v1784 = vsel %vm174, %v1769, 0
    %v1787 = vsel %vm174, %v1770, 0
    %v1790 = vsel %vm174, %v1771, 0
    %v1793 = vsel %vm174, %v1772, 0
    %v1796 = vsel %vm174, %v1773, 0
    %v1799 = vsel %vm174, %v1774, 0
    %v1802 = vsel %vm174, %v1775, 0
    %v1805 = vsel %vm174, %v1776, 0
    %1807 = vmatprep.subr.mxu0 0.0
    %1808 = vmatpush1.xpose.msra.mxu0 %v1784
    %1809 = vmatprep.subr.mxu0 0.0
    %1810 = vmatpush1.xpose.msra.mxu0 %v1787
    %1811 = vmatprep.subr.mxu0 0.0
    %1812 = vmatpush1.xpose.msra.mxu0 %v1790
    %1813 = vmatprep.subr.mxu0 0.0
    %1814 = vmatpush1.xpose.msra.mxu0 %v1793
    %1815 = vmatprep.subr.mxu0 0.0
    %1816 = vmatpush1.xpose.msra.mxu0 %v1796
    %1817 = vmatprep.subr.mxu0 0.0
    %1818 = vmatpush1.xpose.msra.mxu0 %v1799
    %1819 = vmatprep.subr.mxu0 0.0
    %1820 = vmatpush1.xpose.msra.mxu0 %v1802
    %1821 = vmatprep.subr.mxu0 0.0
    %1822 = vmatpush1.xpose.msra.mxu0 %v1805
    %1823 = vmatprep.subr.mxu0 0.0
    %1824 = vmatpush1.xpose.msra.mxu0 0.0
    %1825 = vmatprep.subr.mxu0 0.0
    %1826 = vmatpush1.xpose.msra.mxu0 0.0
    %1827 = vmatprep.subr.mxu0 0.0
    %1828 = vmatpush1.xpose.msra.mxu0 0.0
    %1829 = vmatprep.subr.mxu0 0.0
    %1830 = vmatpush1.xpose.msra.mxu0 0.0
    %1831 = vmatprep.subr.mxu0 0.0
    %1832 = vmatpush1.xpose.msra.mxu0 0.0
    %1833 = vmatprep.subr.mxu0 0.0
    %1834 = vmatpush1.xpose.msra.mxu0 0.0
    %1835 = vmatprep.subr.mxu0 0.0
    %1836 = vmatpush1.xpose.msra.mxu0 0.0
    %1837 = vmatprep.subr.mxu0 0.0
    %1838 = vmatpush1.xpose.msra.mxu0 0.0
    %1839 = vmatprep.subr.mxu0 0.0
    %1840 = vmatpush1.xpose.msra.mxu0 0.0
    %1841 = vmatprep.subr.mxu0 0.0
    %1842 = vmatpush1.xpose.msra.mxu0 0.0
    %1843 = vmatprep.subr.mxu0 0.0
    %1844 = vmatpush1.xpose.msra.mxu0 0.0
    %1845 = vmatprep.subr.mxu0 0.0
    %1846 = vmatpush1.xpose.msra.mxu0 0.0
    %1847 = vmatprep.subr.mxu0 0.0
    %1848 = vmatpush1.xpose.msra.mxu0 0.0
    %1849 = vmatprep.subr.mxu0 0.0
    %1850 = vmatpush1.xpose.msra.mxu0 0.0
    %1851 = vmatprep.subr.mxu0 0.0
    %1852 = vmatpush1.xpose.msra.mxu0 0.0
    %1853 = vmatprep.subr.mxu0 0.0
    %1854 = vmatpush1.xpose.msra.mxu0 0.0
    %1855 = vmatprep.subr.mxu0 0.0
    %1856 = vmatpush1.xpose.msra.mxu0 0.0
    %1857 = vmatprep.subr.mxu0 0.0
    %1858 = vmatpush1.xpose.msra.mxu0 0.0
    %1859 = vmatprep.subr.mxu0 0.0
    %1860 = vmatpush1.xpose.msra.mxu0 0.0
    %1861 = vmatprep.subr.mxu0 0.0
    %1862 = vmatpush1.xpose.msra.mxu0 0.0
    %1863 = vmatprep.subr.mxu0 0.0
    %1864 = vmatpush1.xpose.msra.mxu0 0.0
    %1865 = vmatprep.subr.mxu0 0.0
    %1866 = vmatpush1.xpose.msra.mxu0 0.0
    %1867 = vmatprep.subr.mxu0 0.0
    %1868 = vmatpush1.xpose.msra.mxu0 0.0
    %1869 = vmatprep.subr.mxu0 0.0
    %1870 = vmatpush1.xpose.msra.mxu0 0.0
    %1871 = vmatprep.mubr.f32.mxu0 0.0
    %1872 = vmatmul.mubr.f32.gmra.mrb[0].mxu0 %v1778
    %v1873 = vpop.f32.mrb[0].mxu0
    %v1874 = vadd.f32 0.0, %v1873
    %v1875 = vpop.f32.mrb[0].mxu0
    %1876 = vmatprep.mubr.f32.mxu0 0.0
    %1877 = vmatmul.mubr.f32.gmra.mrb[0].mxu0 %v1781
    %v1878 = vpop.f32.mrb[0].mxu0
    %v1879 = vadd.f32 0.0, %v1878
    %v1880 = vpop.f32.mrb[0].mxu0
    %1881 = vdwg.mxu0
    %v1882 = vadd.f32 %v161, %v1874
    %v1883 = vadd.f32 %v166, %v1879
    %v1884 = vld [vmem:[%s8] sm:$0x1]
    %v1886 = vlaneseq
    %v1887 = vshrl.u32 %v1886, 7
    %v1888 = vsub.s32 0, %v1887
    %v1889 = vrot.slane %v1884, %v1888
    %v1891 = vadd.f32 %v1882, %v1889
    %v1892 = vadd.f32 %v1883, %v1889
    %v1893 = vld [vmem:[%s9] sm:$0x1]
    %v1894 = vld [vmem:[%s10] sm:$0x1]
    %v1895 = vsel %vm174, %v1891, 0.0
    %1896 = vadd.xlane.f32.xlu0 %v1895
    %v1897 = vpop.xlane.xlu0 %1896
    %v1898 = vsel %vm174, %v1892, 0.0
    %1899 = vadd.xlane.f32.xlu0 %v1898
    %v1900 = vpop.xlane.xlu0 %1899
    %v1901 = vmul.f32 %v1897, %v181
    %v1902 = vmul.f32 %v1900, %v181
    %v1903 = vsub.f32 %v1891, %v1901
    %v1904 = vsub.f32 %v1892, %v1902
    %v1905 = vmul.f32 %v1903, %v1903
    %v1906 = vmul.f32 %v1904, %v1904
    %v1907 = vsel %vm174, %v1905, 0.0
    %1908 = vadd.xlane.f32.xlu0 %v1907
    %v1909 = vpop.xlane.xlu0 %1908
    %v1910 = vsel %vm174, %v1906, 0.0
    %1911 = vadd.xlane.f32.xlu0 %v1910
    %v1912 = vpop.xlane.xlu0 %1911
    %v1913 = vmul.f32 %v1909, %v181
    %v1914 = vmul.f32 %v1912, %v181
    %v1915 = vadd.f32 %v1913, 1e-05
    %v1916 = vadd.f32 %v1914, 1e-05
    %v1917 = vrsqrt.pop %v1915
    %v1918 = vrsqrt.pop %v1916
    %v1919 = vmul.f32 %v1903, %v1917
    %v1920 = vmul.f32 %v1904, %v1918
    %v1922 = vlaneseq
    %v1923 = vshrl.u32 %v1922, 7
    %v1924 = vsub.s32 0, %v1923
    %v1925 = vrot.slane %v1893, %v1924
    %v1927 = vmul.f32 %v1919, %v1925
    %v1928 = vmul.f32 %v1920, %v1925
    %v1930 = vlaneseq
    %v1931 = vshrl.u32 %v1930, 7
    %v1932 = vsub.s32 0, %v1931
    %v1933 = vrot.slane %v1894, %v1932
    %v1935 = vadd.f32 %v1927, %v1933
    %v1936 = vadd.f32 %v1928, %v1933
    %v1937 = vld [vmem:[%s11] sm:$0xff]
    %v1938 = vld [vmem:[%s11 + $0x8] sm:$0xff]
    %v1939 = vld [vmem:[%s11 + $0x10] sm:$0xff]
    %v1940 = vld [vmem:[%s11 + $0x18] sm:$0xff]
    %v1941 = vld [vmem:[%s11 + $0x20] sm:$0xff]
    %v1942 = vld [vmem:[%s11 + $0x28] sm:$0xff]
    %v1943 = vld [vmem:[%s11 + $0x30] sm:$0xff]
    %v1944 = vld [vmem:[%s11 + $0x38] sm:$0xff]
    %v1945 = vld [vmem:[%s11 + $0x40] sm:$0xff]
    %v1946 = vld [vmem:[%s11 + $0x48] sm:$0xff]
    %v1947 = vld [vmem:[%s11 + $0x50] sm:$0xff]
    %v1948 = vld [vmem:[%s11 + $0x58] sm:$0xff]
    %v1949 = vld [vmem:[%s11 + $0x60] sm:$0xff]
    %v1950 = vld [vmem:[%s11 + $0x68] sm:$0xff]
    %v1951 = vld [vmem:[%s11 + $0x70] sm:$0xff]
    %v1952 = vld [vmem:[%s11 + $0x78] sm:$0xff]
    %v1953 = vld [vmem:[%s11 + $0x80] sm:$0xff]
    %v1954 = vld [vmem:[%s11 + $0x88] sm:$0xff]
    %v1955 = vld [vmem:[%s11 + $0x90] sm:$0xff]
    %v1956 = vld [vmem:[%s11 + $0x98] sm:$0xff]
    %v1957 = vld [vmem:[%s11 + $0xa0] sm:$0xff]
    %v1958 = vld [vmem:[%s11 + $0xa8] sm:$0xff]
    %v1959 = vld [vmem:[%s11 + $0xb0] sm:$0xff]
    %v1960 = vld [vmem:[%s11 + $0xb8] sm:$0xff]
    %v1961 = vld [vmem:[%s11 + $0xc0] sm:$0xff]
    %v1962 = vld [vmem:[%s11 + $0xc8] sm:$0xff]
    %v1963 = vld [vmem:[%s11 + $0xd0] sm:$0xff]
    %v1964 = vld [vmem:[%s11 + $0xd8] sm:$0xff]
    %v1965 = vld [vmem:[%s11 + $0xe0] sm:$0xff]
    %v1966 = vld [vmem:[%s11 + $0xe8] sm:$0xff]
    %v1967 = vld [vmem:[%s11 + $0xf0] sm:$0xff]
    %v1968 = vld [vmem:[%s11 + $0xf8] sm:$0xff]
    %v1969 = vld [vmem:[%s12] sm:$0x3]
    %v1971 = vlaneseq
    %v1972 = vshrl.u32 %v1971, 7
    %v1973 = vsub.s32 0, %v1972
    %v1974 = vrot.slane %v1969, %v1973
    %v1975 = vlaneseq
    %v1976 = vshrl.u32 %v1975, 7
    %v1977 = vsub.s32 1, %v1976
    %v1978 = vrot.slane %v1969, %v1977
    %v1982 = vsel %vm174, %v1935, 0
    %v1985 = vsel %vm174, %v1936, 0
    %v1988 = vsel %vm174, %v1937, 0
    %v1991 = vsel %vm174, %v1938, 0
    %v1994 = vsel %vm174, %v1939, 0
    %v1997 = vsel %vm174, %v1940, 0
    %v2000 = vsel %vm174, %v1941, 0
    %v2003 = vsel %vm174, %v1942, 0
    %v2006 = vsel %vm174, %v1943, 0
    %v2009 = vsel %vm174, %v1944, 0
    %v2012 = vsel %vm174, %v1945, 0
    %v2015 = vsel %vm174, %v1946, 0
    %v2018 = vsel %vm174, %v1947, 0
    %v2021 = vsel %vm174, %v1948, 0
    %v2024 = vsel %vm174, %v1949, 0
    %v2027 = vsel %vm174, %v1950, 0
    %v2030 = vsel %vm174, %v1951, 0
    %v2033 = vsel %vm174, %v1952, 0
    %v2036 = vsel %vm174, %v1953, 0
    %v2039 = vsel %vm174, %v1954, 0
    %v2042 = vsel %vm174, %v1955, 0
    %v2045 = vsel %vm174, %v1956, 0
    %v2048 = vsel %vm174, %v1957, 0
    %v2051 = vsel %vm174, %v1958, 0
    %v2054 = vsel %vm174, %v1959, 0
    %v2057 = vsel %vm174, %v1960, 0
    %v2060 = vsel %vm174, %v1961, 0
    %v2063 = vsel %vm174, %v1962, 0
    %v2066 = vsel %vm174, %v1963, 0
    %v2069 = vsel %vm174, %v1964, 0
    %v2072 = vsel %vm174, %v1965, 0
    %v2075 = vsel %vm174, %v1966, 0
    %v2078 = vsel %vm174, %v1967, 0
    %v2081 = vsel %vm174, %v1968, 0
    %2083 = vmatprep.subr.mxu0 0.0
    %2084 = vmatpush1.xpose.msra.mxu0 %v1988
    %2085 = vmatprep.subr.mxu0 0.0
    %2086 = vmatpush1.xpose.msra.mxu0 %v1991
    %2087 = vmatprep.subr.mxu0 0.0
    %2088 = vmatpush1.xpose.msra.mxu0 %v1994
    %2089 = vmatprep.subr.mxu0 0.0
    %2090 = vmatpush1.xpose.msra.mxu0 %v1997
    %2091 = vmatprep.subr.mxu0 0.0
    %2092 = vmatpush1.xpose.msra.mxu0 %v2000
    %2093 = vmatprep.subr.mxu0 0.0
    %2094 = vmatpush1.xpose.msra.mxu0 %v2003
    %2095 = vmatprep.subr.mxu0 0.0
    %2096 = vmatpush1.xpose.msra.mxu0 %v2006
    %2097 = vmatprep.subr.mxu0 0.0
    %2098 = vmatpush1.xpose.msra.mxu0 %v2009
    %2099 = vmatprep.subr.mxu0 0.0
    %2100 = vmatpush1.xpose.msra.mxu0 %v2012
    %2101 = vmatprep.subr.mxu0 0.0
    %2102 = vmatpush1.xpose.msra.mxu0 %v2015
    %2103 = vmatprep.subr.mxu0 0.0
    %2104 = vmatpush1.xpose.msra.mxu0 %v2018
    %2105 = vmatprep.subr.mxu0 0.0
    %2106 = vmatpush1.xpose.msra.mxu0 %v2021
    %2107 = vmatprep.subr.mxu0 0.0
    %2108 = vmatpush1.xpose.msra.mxu0 %v2024
    %2109 = vmatprep.subr.mxu0 0.0
    %2110 = vmatpush1.xpose.msra.mxu0 %v2027
    %2111 = vmatprep.subr.mxu0 0.0
    %2112 = vmatpush1.xpose.msra.mxu0 %v2030
    %2113 = vmatprep.subr.mxu0 0.0
    %2114 = vmatpush1.xpose.msra.mxu0 %v2033
    %2115 = vmatprep.subr.mxu0 0.0
    %2116 = vmatpush1.xpose.msra.mxu0 %v2036
    %2117 = vmatprep.subr.mxu0 0.0
    %2118 = vmatpush1.xpose.msra.mxu0 %v2039
    %2119 = vmatprep.subr.mxu0 0.0
    %2120 = vmatpush1.xpose.msra.mxu0 %v2042
    %2121 = vmatprep.subr.mxu0 0.0
    %2122 = vmatpush1.xpose.msra.mxu0 %v2045
    %2123 = vmatprep.subr.mxu0 0.0
    %2124 = vmatpush1.xpose.msra.mxu0 %v2048
    %2125 = vmatprep.subr.mxu0 0.0
    %2126 = vmatpush1.xpose.msra.mxu0 %v2051
    %2127 = vmatprep.subr.mxu0 0.0
    %2128 = vmatpush1.xpose.msra.mxu0 %v2054
    %2129 = vmatprep.subr.mxu0 0.0
    %2130 = vmatpush1.xpose.msra.mxu0 %v2057
    %2131 = vmatprep.subr.mxu0 0.0
    %2132 = vmatpush1.xpose.msra.mxu0 %v2060
    %2133 = vmatprep.subr.mxu0 0.0
    %2134 = vmatpush1.xpose.msra.mxu0 %v2063
    %2135 = vmatprep.subr.mxu0 0.0
    %2136 = vmatpush1.xpose.msra.mxu0 %v2066
    %2137 = vmatprep.subr.mxu0 0.0
    %2138 = vmatpush1.xpose.msra.mxu0 %v2069
    %2139 = vmatprep.subr.mxu0 0.0
    %2140 = vmatpush1.xpose.msra.mxu0 %v2072
    %2141 = vmatprep.subr.mxu0 0.0
    %2142 = vmatpush1.xpose.msra.mxu0 %v2075
    %2143 = vmatprep.subr.mxu0 0.0
    %2144 = vmatpush1.xpose.msra.mxu0 %v2078
    %2145 = vmatprep.subr.mxu0 0.0
    %2146 = vmatpush1.xpose.msra.mxu0 %v2081
    %2147 = vmatprep.mubr.f32.mxu0 0.0
    %2148 = vmatmul.mubr.f32.gmra.mrb[0].mxu0 %v1982
    %v2149 = vpop.f32.mrb[0].mxu0
    %v2150 = vadd.f32 %v1974, %v2149
    %v2151 = vpop.f32.mrb[0].mxu0
    %v2152 = vadd.f32 %v1978, %v2151
    %2153 = vmatprep.mubr.f32.mxu0 0.0
    %2154 = vmatmul.mubr.f32.gmra.mrb[0].mxu0 %v1985
    %v2155 = vpop.f32.mrb[0].mxu0
    %v2156 = vadd.f32 %v1974, %v2155
    %v2157 = vpop.f32.mrb[0].mxu0
    %v2158 = vadd.f32 %v1978, %v2157
    %2159 = vdwg.mxu0
    %v2160 = vmul.f32 %v2150, 0.5
    %v2161 = vmul.f32 %v2152, 0.5
    %v2162 = vmul.f32 %v2156, 0.5
    %v2163 = vmul.f32 %v2158, 0.5
    %v2164 = vmul.f32 %v2150, 0.70710677
    %v2165 = vmul.f32 %v2152, 0.70710677
    %v2166 = vmul.f32 %v2156, 0.70710677
    %v2167 = vmul.f32 %v2158, 0.70710677
    %vm2168 = vcmp.ge.f32.partialorder %v2164, 0.0
    %vm2169 = vcmp.ge.f32.partialorder %v2165, 0.0
    %vm2170 = vcmp.ge.f32.partialorder %v2166, 0.0
    %vm2171 = vcmp.ge.f32.partialorder %v2167, 0.0
    %v2172 = vsel %vm2168, 1.0, -1.0
    %v2173 = vsel %vm2169, 1.0, -1.0
    %v2174 = vsel %vm2170, 1.0, -1.0
    %v2175 = vsel %vm2171, 1.0, -1.0
    %v2176 = vand.u32 2147483647, %v2164
    %v2177 = vand.u32 2147483647, %v2165
    %v2178 = vand.u32 2147483647, %v2166
    %v2179 = vand.u32 2147483647, %v2167
    %v2180 = vmul.f32 %v2176, 0.3275911
    %v2181 = vmul.f32 %v2177, 0.3275911
    %v2182 = vmul.f32 %v2178, 0.3275911
    %v2183 = vmul.f32 %v2179, 0.3275911
    %v2184 = vadd.f32 %v2180, 1.0
    %v2185 = vadd.f32 %v2181, 1.0
    %v2186 = vadd.f32 %v2182, 1.0
    %v2187 = vadd.f32 %v2183, 1.0
    %v2188 = vrcp.pop %v2184
    %v2189 = vmul.f32 1.0, %v2188
    %v2190 = vrcp.pop %v2185
    %v2191 = vmul.f32 1.0, %v2190
    %v2192 = vrcp.pop %v2186
    %v2193 = vmul.f32 1.0, %v2192
    %v2194 = vrcp.pop %v2187
    %v2195 = vmul.f32 1.0, %v2194
    %v2196 = vmul.f32 %v2189, 1.0614054
    %v2197 = vmul.f32 %v2191, 1.0614054
    %v2198 = vmul.f32 %v2193, 1.0614054
    %v2199 = vmul.f32 %v2195, 1.0614054
    %v2200 = vadd.f32 %v2196, -1.4531521
    %v2201 = vadd.f32 %v2197, -1.4531521
    %v2202 = vadd.f32 %v2198, -1.4531521
    %v2203 = vadd.f32 %v2199, -1.4531521
    %v2204 = vmul.f32 %v2200, %v2189
    %v2205 = vmul.f32 %v2201, %v2191
    %v2206 = vmul.f32 %v2202, %v2193
    %v2207 = vmul.f32 %v2203, %v2195
    %v2208 = vadd.f32 %v2204, 1.4214138
    %v2209 = vadd.f32 %v2205, 1.4214138
    %v2210 = vadd.f32 %v2206, 1.4214138
    %v2211 = vadd.f32 %v2207, 1.4214138
    %v2212 = vmul.f32 %v2208, %v2189
    %v2213 = vmul.f32 %v2209, %v2191
    %v2214 = vmul.f32 %v2210, %v2193
    %v2215 = vmul.f32 %v2211, %v2195
    %v2216 = vadd.f32 %v2212, -0.28449672
    %v2217 = vadd.f32 %v2213, -0.28449672
    %v2218 = vadd.f32 %v2214, -0.28449672
    %v2219 = vadd.f32 %v2215, -0.28449672
    %v2220 = vmul.f32 %v2216, %v2189
    %v2221 = vmul.f32 %v2217, %v2191
    %v2222 = vmul.f32 %v2218, %v2193
    %v2223 = vmul.f32 %v2219, %v2195
    %v2224 = vadd.f32 %v2220, 0.2548296
    %v2225 = vadd.f32 %v2221, 0.2548296
    %v2226 = vadd.f32 %v2222, 0.2548296
    %v2227 = vadd.f32 %v2223, 0.2548296
    %v2228 = vmul.f32 %v2224, %v2189
    %v2229 = vmul.f32 %v2225, %v2191
    %v2230 = vmul.f32 %v2226, %v2193
    %v2231 = vmul.f32 %v2227, %v2195
    %v2232 = vsub.f32 0.0, %v2176
    %v2233 = vsub.f32 0.0, %v2177
    %v2234 = vsub.f32 0.0, %v2178
    %v2235 = vsub.f32 0.0, %v2179
    %v2236 = vmul.f32 %v2232, %v2176
    %v2237 = vmul.f32 %v2233, %v2177
    %v2238 = vmul.f32 %v2234, %v2178
    %v2239 = vmul.f32 %v2235, %v2179
    %v2240 = vmul.f32 %v2236, 1.442695
    %v2241 = vpow.pop %v2240
    %v2242 = vmul.f32 %v2237, 1.442695
    %v2243 = vpow.pop %v2242
    %v2244 = vmul.f32 %v2238, 1.442695
    %v2245 = vpow.pop %v2244
    %v2246 = vmul.f32 %v2239, 1.442695
    %v2247 = vpow.pop %v2246
    %v2248 = vmul.f32 %v2228, %v2241
    %v2249 = vmul.f32 %v2229, %v2243
    %v2250 = vmul.f32 %v2230, %v2245
    %v2251 = vmul.f32 %v2231, %v2247
    %v2252 = vsub.f32 1.0, %v2248
    %v2253 = vsub.f32 1.0, %v2249
    %v2254 = vsub.f32 1.0, %v2250
    %v2255 = vsub.f32 1.0, %v2251
    %v2256 = vmul.f32 %v2172, %v2252
    %v2257 = vmul.f32 %v2173, %v2253
    %v2258 = vmul.f32 %v2174, %v2254
    %v2259 = vmul.f32 %v2175, %v2255
    %v2260 = vadd.f32 %v2256, 1.0
    %v2261 = vadd.f32 %v2257, 1.0
    %v2262 = vadd.f32 %v2258, 1.0
    %v2263 = vadd.f32 %v2259, 1.0
    %v2264 = vmul.f32 %v2160, %v2260
    %v2265 = vmul.f32 %v2161, %v2261
    %v2266 = vmul.f32 %v2162, %v2262
    %v2267 = vmul.f32 %v2163, %v2263
    %v2268 = vld [vmem:[%s13] sm:$0xff]
    %v2269 = vld [vmem:[%s13 + $0x8] sm:$0xff]
    %v2270 = vld [vmem:[%s13 + $0x10] sm:$0xff]
    %v2271 = vld [vmem:[%s13 + $0x18] sm:$0xff]
    %v2272 = vld [vmem:[%s13 + $0x20] sm:$0xff]
    %v2273 = vld [vmem:[%s13 + $0x28] sm:$0xff]
    %v2274 = vld [vmem:[%s13 + $0x30] sm:$0xff]
    %v2275 = vld [vmem:[%s13 + $0x38] sm:$0xff]
    %v2276 = vld [vmem:[%s13 + $0x40] sm:$0xff]
    %v2277 = vld [vmem:[%s13 + $0x48] sm:$0xff]
    %v2278 = vld [vmem:[%s13 + $0x50] sm:$0xff]
    %v2279 = vld [vmem:[%s13 + $0x58] sm:$0xff]
    %v2280 = vld [vmem:[%s13 + $0x60] sm:$0xff]
    %v2281 = vld [vmem:[%s13 + $0x68] sm:$0xff]
    %v2282 = vld [vmem:[%s13 + $0x70] sm:$0xff]
    %v2283 = vld [vmem:[%s13 + $0x78] sm:$0xff]
    %2284 = vmatprep.subr.mxu0 %v2269
    %2285 = vmatpush1.xpose.msra.mxu0 %v2268
    %2286 = vmatprep.subr.mxu0 %v2271
    %2287 = vmatpush1.xpose.msra.mxu0 %v2270
    %2288 = vmatprep.subr.mxu0 %v2273
    %2289 = vmatpush1.xpose.msra.mxu0 %v2272
    %2290 = vmatprep.subr.mxu0 %v2275
    %2291 = vmatpush1.xpose.msra.mxu0 %v2274
    %2292 = vmatprep.subr.mxu0 %v2277
    %2293 = vmatpush1.xpose.msra.mxu0 %v2276
    %2294 = vmatprep.subr.mxu0 %v2279
    %2295 = vmatpush1.xpose.msra.mxu0 %v2278
    %2296 = vmatprep.subr.mxu0 %v2281
    %2297 = vmatpush1.xpose.msra.mxu0 %v2280
    %2298 = vmatprep.subr.mxu0 %v2283
    %2299 = vmatpush1.xpose.msra.mxu0 %v2282
    %2300 = vmatprep.subr.mxu0 0.0
    %2301 = vmatpush1.xpose.msra.mxu0 0.0
    %2302 = vmatprep.subr.mxu0 0.0
    %2303 = vmatpush1.xpose.msra.mxu0 0.0
    %2304 = vmatprep.subr.mxu0 0.0
    %2305 = vmatpush1.xpose.msra.mxu0 0.0
    %2306 = vmatprep.subr.mxu0 0.0
    %2307 = vmatpush1.xpose.msra.mxu0 0.0
    %2308 = vmatprep.subr.mxu0 0.0
    %2309 = vmatpush1.xpose.msra.mxu0 0.0
    %2310 = vmatprep.subr.mxu0 0.0
    %2311 = vmatpush1.xpose.msra.mxu0 0.0
    %2312 = vmatprep.subr.mxu0 0.0
    %2313 = vmatpush1.xpose.msra.mxu0 0.0
    %2314 = vmatprep.subr.mxu0 0.0
    %2315 = vmatpush1.xpose.msra.mxu0 0.0
    %2316 = vmatprep.subr.mxu0 0.0
    %2317 = vmatpush1.xpose.msra.mxu0 0.0
    %2318 = vmatprep.subr.mxu0 0.0
    %2319 = vmatpush1.xpose.msra.mxu0 0.0
    %2320 = vmatprep.subr.mxu0 0.0
    %2321 = vmatpush1.xpose.msra.mxu0 0.0
    %2322 = vmatprep.subr.mxu0 0.0
    %2323 = vmatpush1.xpose.msra.mxu0 0.0
    %2324 = vmatprep.subr.mxu0 0.0
    %2325 = vmatpush1.xpose.msra.mxu0 0.0
    %2326 = vmatprep.subr.mxu0 0.0
    %2327 = vmatpush1.xpose.msra.mxu0 0.0
    %2328 = vmatprep.subr.mxu0 0.0
    %2329 = vmatpush1.xpose.msra.mxu0 0.0
    %2330 = vmatprep.subr.mxu0 0.0
    %2331 = vmatpush1.xpose.msra.mxu0 0.0
    %2332 = vmatprep.subr.mxu0 0.0
    %2333 = vmatpush1.xpose.msra.mxu0 0.0
    %2334 = vmatprep.subr.mxu0 0.0
    %2335 = vmatpush1.xpose.msra.mxu0 0.0
    %2336 = vmatprep.subr.mxu0 0.0
    %2337 = vmatpush1.xpose.msra.mxu0 0.0
    %2338 = vmatprep.subr.mxu0 0.0
    %2339 = vmatpush1.xpose.msra.mxu0 0.0
    %2340 = vmatprep.subr.mxu0 0.0
    %2341 = vmatpush1.xpose.msra.mxu0 0.0
    %2342 = vmatprep.subr.mxu0 0.0
    %2343 = vmatpush1.xpose.msra.mxu0 0.0
    %2344 = vmatprep.subr.mxu0 0.0
    %2345 = vmatpush1.xpose.msra.mxu0 0.0
    %2346 = vmatprep.subr.mxu0 0.0
    %2347 = vmatpush1.xpose.msra.mxu0 0.0
    %2348 = vmatprep.mubr.f32.mxu0 %v2265
    %2349 = vmatmul.mubr.f32.gmra.mrb[0].mxu0 %v2264
    %v2350 = vpop.f32.mrb[0].mxu0
    %v2351 = vadd.f32 0.0, %v2350
    %v2352 = vpop.f32.mrb[0].mxu0
    %2353 = vmatprep.mubr.f32.mxu0 %v2267
    %2354 = vmatmul.mubr.f32.gmra.mrb[0].mxu0 %v2266
    %v2355 = vpop.f32.mrb[0].mxu0
    %v2356 = vadd.f32 0.0, %v2355
    %v2357 = vpop.f32.mrb[0].mxu0
    %2358 = vdwg.mxu0
    %v2359 = vadd.f32 %v1891, %v2351
    %v2360 = vadd.f32 %v1892, %v2356
    %v2361 = vld [vmem:[%s14] sm:$0x1]
    %v2363 = vlaneseq
    %v2364 = vshrl.u32 %v2363, 7
    %v2365 = vsub.s32 0, %v2364
    %v2366 = vrot.slane %v2361, %v2365
    %v2368 = vadd.f32 %v2359, %v2366
    %v2369 = vadd.f32 %v2360, %v2366
    %s2370 = scalar_lea.vmem %s3, 1
    %v2371 = vld [vmem:[%s2370] sm:$0x1]
    %s2372 = scalar_lea.vmem %s4, 1
    %v2373 = vld [vmem:[%s2372] sm:$0x1]
    %v2374 = vsel %vm174, %v2368, 0.0
    %2375 = vadd.xlane.f32.xlu0 %v2374
    %v2376 = vpop.xlane.xlu0 %2375
    %v2377 = vsel %vm174, %v2369, 0.0
    %2378 = vadd.xlane.f32.xlu0 %v2377
    %v2379 = vpop.xlane.xlu0 %2378
    %v2380 = vmul.f32 %v2376, %v181
    %v2381 = vmul.f32 %v2379, %v181
    %v2382 = vsub.f32 %v2368, %v2380
    %v2383 = vsub.f32 %v2369, %v2381
    %v2384 = vmul.f32 %v2382, %v2382
    %v2385 = vmul.f32 %v2383, %v2383
    %v2386 = vsel %vm174, %v2384, 0.0
    %2387 = vadd.xlane.f32.xlu0 %v2386
    %v2388 = vpop.xlane.xlu0 %2387
    %v2389 = vsel %vm174, %v2385, 0.0
    %2390 = vadd.xlane.f32.xlu0 %v2389
    %v2391 = vpop.xlane.xlu0 %2390
    %v2392 = vmul.f32 %v2388, %v181
    %v2393 = vmul.f32 %v2391, %v181
    %v2394 = vadd.f32 %v2392, 1e-05
    %v2395 = vadd.f32 %v2393, 1e-05
    %v2396 = vrsqrt.pop %v2394
    %v2397 = vrsqrt.pop %v2395
    %v2398 = vmul.f32 %v2382, %v2396
    %v2399 = vmul.f32 %v2383, %v2397
    %v2401 = vlaneseq
    %v2402 = vshrl.u32 %v2401, 7
    %v2403 = vsub.s32 0, %v2402
    %v2404 = vrot.slane %v2371, %v2403
    %v2406 = vmul.f32 %v2398, %v2404
    %v2407 = vmul.f32 %v2399, %v2404
    %v2409 = vlaneseq
    %v2410 = vshrl.u32 %v2409, 7
    %v2411 = vsub.s32 0, %v2410
    %v2412 = vrot.slane %v2373, %v2411
    %v2414 = vadd.f32 %v2406, %v2412
    %v2415 = vadd.f32 %v2407, %v2412
    %s2416 = scalar_lea.vmem %s5, 192
    %v2417 = vld [vmem:[%s2416] sm:$0xff]
    %v2418 = vld [vmem:[%s2416 + $0x8] sm:$0xff]
    %v2419 = vld [vmem:[%s2416 + $0x10] sm:$0xff]
    %v2420 = vld [vmem:[%s2416 + $0x18] sm:$0xff]
    %v2421 = vld [vmem:[%s2416 + $0x20] sm:$0xff]
    %v2422 = vld [vmem:[%s2416 + $0x28] sm:$0xff]
    %v2423 = vld [vmem:[%s2416 + $0x30] sm:$0xff]
    %v2424 = vld [vmem:[%s2416 + $0x38] sm:$0xff]
    %v2425 = vld [vmem:[%s2416 + $0x40] sm:$0xff]
    %v2426 = vld [vmem:[%s2416 + $0x48] sm:$0xff]
    %v2427 = vld [vmem:[%s2416 + $0x50] sm:$0xff]
    %v2428 = vld [vmem:[%s2416 + $0x58] sm:$0xff]
    %v2429 = vld [vmem:[%s2416 + $0x60] sm:$0xff]
    %v2430 = vld [vmem:[%s2416 + $0x68] sm:$0xff]
    %v2431 = vld [vmem:[%s2416 + $0x70] sm:$0xff]
    %v2432 = vld [vmem:[%s2416 + $0x78] sm:$0xff]
    %v2433 = vld [vmem:[%s2416 + $0x80] sm:$0xff]
    %v2434 = vld [vmem:[%s2416 + $0x88] sm:$0xff]
    %v2435 = vld [vmem:[%s2416 + $0x90] sm:$0xff]
    %v2436 = vld [vmem:[%s2416 + $0x98] sm:$0xff]
    %v2437 = vld [vmem:[%s2416 + $0xa0] sm:$0xff]
    %v2438 = vld [vmem:[%s2416 + $0xa8] sm:$0xff]
    %v2439 = vld [vmem:[%s2416 + $0xb0] sm:$0xff]
    %v2440 = vld [vmem:[%s2416 + $0xb8] sm:$0xff]
    %s2441 = scalar_lea.vmem %s6, 2
    %v2442 = vld [vmem:[%s2441] sm:$0x3]
    %v2444 = vlaneseq
    %v2445 = vshrl.u32 %v2444, 7
    %v2446 = vsub.s32 0, %v2445
    %v2447 = vrot.slane %v2442, %v2446
    %v2448 = vlaneseq
    %v2449 = vshrl.u32 %v2448, 7
    %v2450 = vsub.s32 1, %v2449
    %v2451 = vrot.slane %v2442, %v2450
    %v2455 = vsel %vm174, %v2414, 0
    %v2458 = vsel %vm174, %v2415, 0
    %v2461 = vsel %vm174, %v2417, 0
    %v2464 = vsel %vm174, %v2418, 0
    %v2467 = vsel %vm174, %v2419, 0
    %v2470 = vsel %vm174, %v2420, 0
    %v2473 = vsel %vm174, %v2421, 0
    %v2476 = vsel %vm174, %v2422, 0
    %v2479 = vsel %vm174, %v2423, 0
    %v2482 = vsel %vm174, %v2424, 0
    %v2485 = vsel %vm174, %v2425, 0
    %v2488 = vsel %vm174, %v2426, 0
    %v2491 = vsel %vm174, %v2427, 0
    %v2494 = vsel %vm174, %v2428, 0
    %v2497 = vsel %vm174, %v2429, 0
    %v2500 = vsel %vm174, %v2430, 0
    %v2503 = vsel %vm174, %v2431, 0
    %v2506 = vsel %vm174, %v2432, 0
    %v2509 = vsel %vm174, %v2433, 0
    %v2512 = vsel %vm174, %v2434, 0
    %v2515 = vsel %vm174, %v2435, 0
    %v2518 = vsel %vm174, %v2436, 0
    %v2521 = vsel %vm174, %v2437, 0
    %v2524 = vsel %vm174, %v2438, 0
    %v2527 = vsel %vm174, %v2439, 0
    %v2530 = vsel %vm174, %v2440, 0
    %2532 = vmatprep.subr.mxu0 0.0
    %2533 = vmatpush1.xpose.msra.mxu0 %v2461
    %2534 = vmatprep.subr.mxu0 0.0
    %2535 = vmatpush1.xpose.msra.mxu0 %v2464
    %2536 = vmatprep.subr.mxu0 0.0
    %2537 = vmatpush1.xpose.msra.mxu0 %v2467
    %2538 = vmatprep.subr.mxu0 0.0
    %2539 = vmatpush1.xpose.msra.mxu0 %v2470
    %2540 = vmatprep.subr.mxu0 0.0
    %2541 = vmatpush1.xpose.msra.mxu0 %v2473
    %2542 = vmatprep.subr.mxu0 0.0
    %2543 = vmatpush1.xpose.msra.mxu0 %v2476
    %2544 = vmatprep.subr.mxu0 0.0
    %2545 = vmatpush1.xpose.msra.mxu0 %v2479
    %2546 = vmatprep.subr.mxu0 0.0
    %2547 = vmatpush1.xpose.msra.mxu0 %v2482
    %2548 = vmatprep.subr.mxu0 0.0
    %2549 = vmatpush1.xpose.msra.mxu0 %v2485
    %2550 = vmatprep.subr.mxu0 0.0
    %2551 = vmatpush1.xpose.msra.mxu0 %v2488
    %2552 = vmatprep.subr.mxu0 0.0
    %2553 = vmatpush1.xpose.msra.mxu0 %v2491
    %2554 = vmatprep.subr.mxu0 0.0
    %2555 = vmatpush1.xpose.msra.mxu0 %v2494
    %2556 = vmatprep.subr.mxu0 0.0
    %2557 = vmatpush1.xpose.msra.mxu0 %v2497
    %2558 = vmatprep.subr.mxu0 0.0
    %2559 = vmatpush1.xpose.msra.mxu0 %v2500
    %2560 = vmatprep.subr.mxu0 0.0
    %2561 = vmatpush1.xpose.msra.mxu0 %v2503
    %2562 = vmatprep.subr.mxu0 0.0
    %2563 = vmatpush1.xpose.msra.mxu0 %v2506
    %2564 = vmatprep.subr.mxu0 0.0
    %2565 = vmatpush1.xpose.msra.mxu0 %v2509
    %2566 = vmatprep.subr.mxu0 0.0
    %2567 = vmatpush1.xpose.msra.mxu0 %v2512
    %2568 = vmatprep.subr.mxu0 0.0
    %2569 = vmatpush1.xpose.msra.mxu0 %v2515
    %2570 = vmatprep.subr.mxu0 0.0
    %2571 = vmatpush1.xpose.msra.mxu0 %v2518
    %2572 = vmatprep.subr.mxu0 0.0
    %2573 = vmatpush1.xpose.msra.mxu0 %v2521
    %2574 = vmatprep.subr.mxu0 0.0
    %2575 = vmatpush1.xpose.msra.mxu0 %v2524
    %2576 = vmatprep.subr.mxu0 0.0
    %2577 = vmatpush1.xpose.msra.mxu0 %v2527
    %2578 = vmatprep.subr.mxu0 0.0
    %2579 = vmatpush1.xpose.msra.mxu0 %v2530
    %2580 = vmatprep.subr.mxu0 0.0
    %2581 = vmatpush1.xpose.msra.mxu0 0.0
    %2582 = vmatprep.subr.mxu0 0.0
    %2583 = vmatpush1.xpose.msra.mxu0 0.0
    %2584 = vmatprep.subr.mxu0 0.0
    %2585 = vmatpush1.xpose.msra.mxu0 0.0
    %2586 = vmatprep.subr.mxu0 0.0
    %2587 = vmatpush1.xpose.msra.mxu0 0.0
    %2588 = vmatprep.subr.mxu0 0.0
    %2589 = vmatpush1.xpose.msra.mxu0 0.0
    %2590 = vmatprep.subr.mxu0 0.0
    %2591 = vmatpush1.xpose.msra.mxu0 0.0
    %2592 = vmatprep.subr.mxu0 0.0
    %2593 = vmatpush1.xpose.msra.mxu0 0.0
    %2594 = vmatprep.subr.mxu0 0.0
    %2595 = vmatpush1.xpose.msra.mxu0 0.0
    %2596 = vmatprep.mubr.f32.mxu0 0.0
    %2597 = vmatmul.mubr.f32.gmra.mrb[0].mxu0 %v2455
    %v2598 = vpop.f32.mrb[0].mxu0
    %v2599 = vadd.f32 %v2447, %v2598
    %v2600 = vpop.f32.mrb[0].mxu0
    %v2601 = vadd.f32 %v2451, %v2600
    %2602 = vmatprep.mubr.f32.mxu0 0.0
    %2603 = vmatmul.mubr.f32.gmra.mrb[0].mxu0 %v2458
    %v2604 = vpop.f32.mrb[0].mxu0
    %v2605 = vadd.f32 %v2447, %v2604
    %v2606 = vpop.f32.mrb[0].mxu0
    %v2607 = vadd.f32 %v2451, %v2606
    %2608 = vdwg.mxu0
    %v2609 = vmul.f32 %v2599, 0.25
    %2611 = vrot.lane.b32.xlu0 %v2599, 64
    %v2612 = vpop.permute.xlu0 %2611
    %v2614 = vsel %vm413, %v2609, 0
    %v2616 = vsel %vm413, %v2612, 0
    %2618 = vmatprep.subr.mxu0 0.0
    %2619 = vmatpush1.xpose.msra.mxu0 %v2616
    %2620 = vmatprep.subr.mxu0 0.0
    %2621 = vmatpush1.xpose.msra.mxu0 0.0
    %2622 = vmatprep.subr.mxu0 0.0
    %2623 = vmatpush1.xpose.msra.mxu0 0.0
    %2624 = vmatprep.subr.mxu0 0.0
    %2625 = vmatpush1.xpose.msra.mxu0 0.0
    %2626 = vmatprep.subr.mxu0 0.0
    %2627 = vmatpush1.xpose.msra.mxu0 0.0
    %2628 = vmatprep.subr.mxu0 0.0
    %2629 = vmatpush1.xpose.msra.mxu0 0.0
    %2630 = vmatprep.subr.mxu0 0.0
    %2631 = vmatpush1.xpose.msra.mxu0 0.0
    %2632 = vmatprep.subr.mxu0 0.0
    %2633 = vmatpush1.xpose.msra.mxu0 0.0
    %2634 = vmatprep.subr.mxu0 0.0
    %2635 = vmatpush1.xpose.msra.mxu0 0.0
    %2636 = vmatprep.subr.mxu0 0.0
    %2637 = vmatpush1.xpose.msra.mxu0 0.0
    %2638 = vmatprep.subr.mxu0 0.0
    %2639 = vmatpush1.xpose.msra.mxu0 0.0
    %2640 = vmatprep.subr.mxu0 0.0
    %2641 = vmatpush1.xpose.msra.mxu0 0.0
    %2642 = vmatprep.subr.mxu0 0.0
    %2643 = vmatpush1.xpose.msra.mxu0 0.0
    %2644 = vmatprep.subr.mxu0 0.0
    %2645 = vmatpush1.xpose.msra.mxu0 0.0
    %2646 = vmatprep.subr.mxu0 0.0
    %2647 = vmatpush1.xpose.msra.mxu0 0.0
    %2648 = vmatprep.subr.mxu0 0.0
    %2649 = vmatpush1.xpose.msra.mxu0 0.0
    %2650 = vmatprep.subr.mxu0 0.0
    %2651 = vmatpush1.xpose.msra.mxu0 0.0
    %2652 = vmatprep.subr.mxu0 0.0
    %2653 = vmatpush1.xpose.msra.mxu0 0.0
    %2654 = vmatprep.subr.mxu0 0.0
    %2655 = vmatpush1.xpose.msra.mxu0 0.0
    %2656 = vmatprep.subr.mxu0 0.0
    %2657 = vmatpush1.xpose.msra.mxu0 0.0
    %2658 = vmatprep.subr.mxu0 0.0
    %2659 = vmatpush1.xpose.msra.mxu0 0.0
    %2660 = vmatprep.subr.mxu0 0.0
    %2661 = vmatpush1.xpose.msra.mxu0 0.0
    %2662 = vmatprep.subr.mxu0 0.0
    %2663 = vmatpush1.xpose.msra.mxu0 0.0
    %2664 = vmatprep.subr.mxu0 0.0
    %2665 = vmatpush1.xpose.msra.mxu0 0.0
    %2666 = vmatprep.subr.mxu0 0.0
    %2667 = vmatpush1.xpose.msra.mxu0 0.0
    %2668 = vmatprep.subr.mxu0 0.0
    %2669 = vmatpush1.xpose.msra.mxu0 0.0
    %2670 = vmatprep.subr.mxu0 0.0
    %2671 = vmatpush1.xpose.msra.mxu0 0.0
    %2672 = vmatprep.subr.mxu0 0.0
    %2673 = vmatpush1.xpose.msra.mxu0 0.0
    %2674 = vmatprep.subr.mxu0 0.0
    %2675 = vmatpush1.xpose.msra.mxu0 0.0
    %2676 = vmatprep.subr.mxu0 0.0
    %2677 = vmatpush1.xpose.msra.mxu0 0.0
    %2678 = vmatprep.subr.mxu0 0.0
    %2679 = vmatpush1.xpose.msra.mxu0 0.0
    %2680 = vmatprep.subr.mxu0 0.0
    %2681 = vmatpush1.xpose.msra.mxu0 0.0
    %2682 = vmatprep.mubr.f32.mxu0 0.0
    %2683 = vmatmul.mubr.f32.gmra.mrb[0].mxu0 %v2614
    %v2684 = vpop.f32.mrb[0].mxu0
    %v2685 = vadd.f32 0.0, %v2684
    %v2686 = vpop.f32.mrb[0].mxu0
    %2687 = vdwg.mxu0
    %v2688 = vsel %vm171, %v2685, -1e+30
    %v2689 = vsel %vm490, %v2688, -inf
    %2690 = vmax.xlane.f32.xlu0 %v2689
    %v2691 = vpop.xlane.xlu0 %2690
    %v2692 = vsub.f32 %v2688, %v2691
    %v2693 = vmul.f32 %v2692, 1.442695
    %v2694 = vpow.pop %v2693
    %v2695 = vsel %vm490, %v2694, 0.0
    %2696 = vadd.xlane.f32.xlu0 %v2695
    %v2697 = vpop.xlane.xlu0 %2696
    %v2698 = vrcp.pop %v2697
    %v2699 = vmul.f32 %v2694, %v2698
    %v2701 = vsel %vm490, %v2699, 0
    %2703 = vmatprep.subr.mxu0 0.0
    %2704 = vmatpush1.msra.mxu0 %v2601
    %2705 = vmatprep.subr.mxu0 0.0
    %2706 = vmatpush1.msra.mxu0 0.0
    %2707 = vmatprep.subr.mxu0 0.0
    %2708 = vmatpush1.msra.mxu0 0.0
    %2709 = vmatprep.subr.mxu0 0.0
    %2710 = vmatpush1.msra.mxu0 0.0
    %2711 = vmatprep.subr.mxu0 0.0
    %2712 = vmatpush1.msra.mxu0 0.0
    %2713 = vmatprep.subr.mxu0 0.0
    %2714 = vmatpush1.msra.mxu0 0.0
    %2715 = vmatprep.subr.mxu0 0.0
    %2716 = vmatpush1.msra.mxu0 0.0
    %2717 = vmatprep.subr.mxu0 0.0
    %2718 = vmatpush1.msra.mxu0 0.0
    %2719 = vmatprep.subr.mxu0 0.0
    %2720 = vmatpush1.msra.mxu0 0.0
    %2721 = vmatprep.subr.mxu0 0.0
    %2722 = vmatpush1.msra.mxu0 0.0
    %2723 = vmatprep.subr.mxu0 0.0
    %2724 = vmatpush1.msra.mxu0 0.0
    %2725 = vmatprep.subr.mxu0 0.0
    %2726 = vmatpush1.msra.mxu0 0.0
    %2727 = vmatprep.subr.mxu0 0.0
    %2728 = vmatpush1.msra.mxu0 0.0
    %2729 = vmatprep.subr.mxu0 0.0
    %2730 = vmatpush1.msra.mxu0 0.0
    %2731 = vmatprep.subr.mxu0 0.0
    %2732 = vmatpush1.msra.mxu0 0.0
    %2733 = vmatprep.subr.mxu0 0.0
    %2734 = vmatpush1.msra.mxu0 0.0
    %2735 = vmatprep.subr.mxu0 0.0
    %2736 = vmatpush1.msra.mxu0 0.0
    %2737 = vmatprep.subr.mxu0 0.0
    %2738 = vmatpush1.msra.mxu0 0.0
    %2739 = vmatprep.subr.mxu0 0.0
    %2740 = vmatpush1.msra.mxu0 0.0
    %2741 = vmatprep.subr.mxu0 0.0
    %2742 = vmatpush1.msra.mxu0 0.0
    %2743 = vmatprep.subr.mxu0 0.0
    %2744 = vmatpush1.msra.mxu0 0.0
    %2745 = vmatprep.subr.mxu0 0.0
    %2746 = vmatpush1.msra.mxu0 0.0
    %2747 = vmatprep.subr.mxu0 0.0
    %2748 = vmatpush1.msra.mxu0 0.0
    %2749 = vmatprep.subr.mxu0 0.0
    %2750 = vmatpush1.msra.mxu0 0.0
    %2751 = vmatprep.subr.mxu0 0.0
    %2752 = vmatpush1.msra.mxu0 0.0
    %2753 = vmatprep.subr.mxu0 0.0
    %2754 = vmatpush1.msra.mxu0 0.0
    %2755 = vmatprep.subr.mxu0 0.0
    %2756 = vmatpush1.msra.mxu0 0.0
    %2757 = vmatprep.subr.mxu0 0.0
    %2758 = vmatpush1.msra.mxu0 0.0
    %2759 = vmatprep.subr.mxu0 0.0
    %2760 = vmatpush1.msra.mxu0 0.0
    %2761 = vmatprep.subr.mxu0 0.0
    %2762 = vmatpush1.msra.mxu0 0.0
    %2763 = vmatprep.subr.mxu0 0.0
    %2764 = vmatpush1.msra.mxu0 0.0
    %2765 = vmatprep.subr.mxu0 0.0
    %2766 = vmatpush1.msra.mxu0 0.0
    %2767 = vmatprep.mubr.f32.mxu0 0.0
    %2768 = vmatmul.mubr.f32.gmra.mrb[0].mxu0 %v2701
    %v2769 = vpop.f32.mrb[0].mxu0
    %v2770 = vadd.f32 0.0, %v2769
    %v2771 = vpop.f32.mrb[0].mxu0
    %2772 = vdwg.mxu0
    %2773 = vrot.lane.b32.xlu0 %v2609, 112
    %v2774 = vpop.permute.xlu0 %2773
    %2775 = vrot.lane.b32.xlu0 %v2599, 48
    %v2776 = vpop.permute.xlu0 %2775
    %v2777 = vsel %vm413, %v2774, 0
    %v2779 = vsel %vm413, %v2776, 0
    %2781 = vmatprep.subr.mxu0 0.0
    %2782 = vmatpush1.xpose.msra.mxu0 %v2779
    %2783 = vmatprep.subr.mxu0 0.0
    %2784 = vmatpush1.xpose.msra.mxu0 0.0
    %2785 = vmatprep.subr.mxu0 0.0
    %2786 = vmatpush1.xpose.msra.mxu0 0.0
    %2787 = vmatprep.subr.mxu0 0.0
    %2788 = vmatpush1.xpose.msra.mxu0 0.0
    %2789 = vmatprep.subr.mxu0 0.0
    %2790 = vmatpush1.xpose.msra.mxu0 0.0
    %2791 = vmatprep.subr.mxu0 0.0
    %2792 = vmatpush1.xpose.msra.mxu0 0.0
    %2793 = vmatprep.subr.mxu0 0.0
    %2794 = vmatpush1.xpose.msra.mxu0 0.0
    %2795 = vmatprep.subr.mxu0 0.0
    %2796 = vmatpush1.xpose.msra.mxu0 0.0
    %2797 = vmatprep.subr.mxu0 0.0
    %2798 = vmatpush1.xpose.msra.mxu0 0.0
    %2799 = vmatprep.subr.mxu0 0.0
    %2800 = vmatpush1.xpose.msra.mxu0 0.0
    %2801 = vmatprep.subr.mxu0 0.0
    %2802 = vmatpush1.xpose.msra.mxu0 0.0
    %2803 = vmatprep.subr.mxu0 0.0
    %2804 = vmatpush1.xpose.msra.mxu0 0.0
    %2805 = vmatprep.subr.mxu0 0.0
    %2806 = vmatpush1.xpose.msra.mxu0 0.0
    %2807 = vmatprep.subr.mxu0 0.0
    %2808 = vmatpush1.xpose.msra.mxu0 0.0
    %2809 = vmatprep.subr.mxu0 0.0
    %2810 = vmatpush1.xpose.msra.mxu0 0.0
    %2811 = vmatprep.subr.mxu0 0.0
    %2812 = vmatpush1.xpose.msra.mxu0 0.0
    %2813 = vmatprep.subr.mxu0 0.0
    %2814 = vmatpush1.xpose.msra.mxu0 0.0
    %2815 = vmatprep.subr.mxu0 0.0
    %2816 = vmatpush1.xpose.msra.mxu0 0.0
    %2817 = vmatprep.subr.mxu0 0.0
    %2818 = vmatpush1.xpose.msra.mxu0 0.0
    %2819 = vmatprep.subr.mxu0 0.0
    %2820 = vmatpush1.xpose.msra.mxu0 0.0
    %2821 = vmatprep.subr.mxu0 0.0
    %2822 = vmatpush1.xpose.msra.mxu0 0.0
    %2823 = vmatprep.subr.mxu0 0.0
    %2824 = vmatpush1.xpose.msra.mxu0 0.0
    %2825 = vmatprep.subr.mxu0 0.0
    %2826 = vmatpush1.xpose.msra.mxu0 0.0
    %2827 = vmatprep.subr.mxu0 0.0
    %2828 = vmatpush1.xpose.msra.mxu0 0.0
    %2829 = vmatprep.subr.mxu0 0.0
    %2830 = vmatpush1.xpose.msra.mxu0 0.0
    %2831 = vmatprep.subr.mxu0 0.0
    %2832 = vmatpush1.xpose.msra.mxu0 0.0
    %2833 = vmatprep.subr.mxu0 0.0
    %2834 = vmatpush1.xpose.msra.mxu0 0.0
    %2835 = vmatprep.subr.mxu0 0.0
    %2836 = vmatpush1.xpose.msra.mxu0 0.0
    %2837 = vmatprep.subr.mxu0 0.0
    %2838 = vmatpush1.xpose.msra.mxu0 0.0
    %2839 = vmatprep.subr.mxu0 0.0
    %2840 = vmatpush1.xpose.msra.mxu0 0.0
    %2841 = vmatprep.subr.mxu0 0.0
    %2842 = vmatpush1.xpose.msra.mxu0 0.0
    %2843 = vmatprep.subr.mxu0 0.0
    %2844 = vmatpush1.xpose.msra.mxu0 0.0
    %2845 = vmatprep.mubr.f32.mxu0 0.0
    %2846 = vmatmul.mubr.f32.gmra.mrb[0].mxu0 %v2777
    %v2847 = vpop.f32.mrb[0].mxu0
    %v2848 = vadd.f32 0.0, %v2847
    %v2849 = vpop.f32.mrb[0].mxu0
    %2850 = vdwg.mxu0
    %v2851 = vsel %vm171, %v2848, -1e+30
    %v2852 = vsel %vm490, %v2851, -inf
    %2853 = vmax.xlane.f32.xlu0 %v2852
    %v2854 = vpop.xlane.xlu0 %2853
    %v2855 = vsub.f32 %v2851, %v2854
    %v2856 = vmul.f32 %v2855, 1.442695
    %v2857 = vpow.pop %v2856
    %v2858 = vsel %vm490, %v2857, 0.0
    %2859 = vadd.xlane.f32.xlu0 %v2858
    %v2860 = vpop.xlane.xlu0 %2859
    %v2861 = vrcp.pop %v2860
    %v2862 = vmul.f32 %v2857, %v2861
    %2864 = vrot.lane.b32.xlu0 %v2601, 112
    %v2865 = vpop.permute.xlu0 %2864
    %v2868 = vsel %vm490, %v2862, 0
    %2870 = vmatprep.subr.mxu0 0.0
    %2871 = vmatpush1.msra.mxu0 %v2865
    %2872 = vmatprep.subr.mxu0 0.0
    %2873 = vmatpush1.msra.mxu0 0.0
    %2874 = vmatprep.subr.mxu0 0.0
    %2875 = vmatpush1.msra.mxu0 0.0
    %2876 = vmatprep.subr.mxu0 0.0
    %2877 = vmatpush1.msra.mxu0 0.0
    %2878 = vmatprep.subr.mxu0 0.0
    %2879 = vmatpush1.msra.mxu0 0.0
    %2880 = vmatprep.subr.mxu0 0.0
    %2881 = vmatpush1.msra.mxu0 0.0
    %2882 = vmatprep.subr.mxu0 0.0
    %2883 = vmatpush1.msra.mxu0 0.0
    %2884 = vmatprep.subr.mxu0 0.0
    %2885 = vmatpush1.msra.mxu0 0.0
    %2886 = vmatprep.subr.mxu0 0.0
    %2887 = vmatpush1.msra.mxu0 0.0
    %2888 = vmatprep.subr.mxu0 0.0
    %2889 = vmatpush1.msra.mxu0 0.0
    %2890 = vmatprep.subr.mxu0 0.0
    %2891 = vmatpush1.msra.mxu0 0.0
    %2892 = vmatprep.subr.mxu0 0.0
    %2893 = vmatpush1.msra.mxu0 0.0
    %2894 = vmatprep.subr.mxu0 0.0
    %2895 = vmatpush1.msra.mxu0 0.0
    %2896 = vmatprep.subr.mxu0 0.0
    %2897 = vmatpush1.msra.mxu0 0.0
    %2898 = vmatprep.subr.mxu0 0.0
    %2899 = vmatpush1.msra.mxu0 0.0
    %2900 = vmatprep.subr.mxu0 0.0
    %2901 = vmatpush1.msra.mxu0 0.0
    %2902 = vmatprep.subr.mxu0 0.0
    %2903 = vmatpush1.msra.mxu0 0.0
    %2904 = vmatprep.subr.mxu0 0.0
    %2905 = vmatpush1.msra.mxu0 0.0
    %2906 = vmatprep.subr.mxu0 0.0
    %2907 = vmatpush1.msra.mxu0 0.0
    %2908 = vmatprep.subr.mxu0 0.0
    %2909 = vmatpush1.msra.mxu0 0.0
    %2910 = vmatprep.subr.mxu0 0.0
    %2911 = vmatpush1.msra.mxu0 0.0
    %2912 = vmatprep.subr.mxu0 0.0
    %2913 = vmatpush1.msra.mxu0 0.0
    %2914 = vmatprep.subr.mxu0 0.0
    %2915 = vmatpush1.msra.mxu0 0.0
    %2916 = vmatprep.subr.mxu0 0.0
    %2917 = vmatpush1.msra.mxu0 0.0
    %2918 = vmatprep.subr.mxu0 0.0
    %2919 = vmatpush1.msra.mxu0 0.0
    %2920 = vmatprep.subr.mxu0 0.0
    %2921 = vmatpush1.msra.mxu0 0.0
    %2922 = vmatprep.subr.mxu0 0.0
    %2923 = vmatpush1.msra.mxu0 0.0
    %2924 = vmatprep.subr.mxu0 0.0
    %2925 = vmatpush1.msra.mxu0 0.0
    %2926 = vmatprep.subr.mxu0 0.0
    %2927 = vmatpush1.msra.mxu0 0.0
    %2928 = vmatprep.subr.mxu0 0.0
    %2929 = vmatpush1.msra.mxu0 0.0
    %2930 = vmatprep.subr.mxu0 0.0
    %2931 = vmatpush1.msra.mxu0 0.0
    %2932 = vmatprep.subr.mxu0 0.0
    %2933 = vmatpush1.msra.mxu0 0.0
    %2934 = vmatprep.mubr.f32.mxu0 0.0
    %2935 = vmatmul.mubr.f32.gmra.mrb[0].mxu0 %v2868
    %v2936 = vpop.f32.mrb[0].mxu0
    %v2937 = vadd.f32 0.0, %v2936
    %v2938 = vpop.f32.mrb[0].mxu0
    %2939 = vdwg.mxu0
    %2940 = vrot.lane.b32.xlu0 %v2609, 96
    %v2941 = vpop.permute.xlu0 %2940
    %2942 = vrot.lane.b32.xlu0 %v2599, 32
    %v2943 = vpop.permute.xlu0 %2942
    %v2944 = vsel %vm413, %v2941, 0
    %v2946 = vsel %vm413, %v2943, 0
    %2948 = vmatprep.subr.mxu0 0.0
    %2949 = vmatpush1.xpose.msra.mxu0 %v2946
    %2950 = vmatprep.subr.mxu0 0.0
    %2951 = vmatpush1.xpose.msra.mxu0 0.0
    %2952 = vmatprep.subr.mxu0 0.0
    %2953 = vmatpush1.xpose.msra.mxu0 0.0
    %2954 = vmatprep.subr.mxu0 0.0
    %2955 = vmatpush1.xpose.msra.mxu0 0.0
    %2956 = vmatprep.subr.mxu0 0.0
    %2957 = vmatpush1.xpose.msra.mxu0 0.0
    %2958 = vmatprep.subr.mxu0 0.0
    %2959 = vmatpush1.xpose.msra.mxu0 0.0
    %2960 = vmatprep.subr.mxu0 0.0
    %2961 = vmatpush1.xpose.msra.mxu0 0.0
    %2962 = vmatprep.subr.mxu0 0.0
    %2963 = vmatpush1.xpose.msra.mxu0 0.0
    %2964 = vmatprep.subr.mxu0 0.0
    %2965 = vmatpush1.xpose.msra.mxu0 0.0
    %2966 = vmatprep.subr.mxu0 0.0
    %2967 = vmatpush1.xpose.msra.mxu0 0.0
    %2968 = vmatprep.subr.mxu0 0.0
    %2969 = vmatpush1.xpose.msra.mxu0 0.0
    %2970 = vmatprep.subr.mxu0 0.0
    %2971 = vmatpush1.xpose.msra.mxu0 0.0
    %2972 = vmatprep.subr.mxu0 0.0
    %2973 = vmatpush1.xpose.msra.mxu0 0.0
    %2974 = vmatprep.subr.mxu0 0.0
    %2975 = vmatpush1.xpose.msra.mxu0 0.0
    %2976 = vmatprep.subr.mxu0 0.0
    %2977 = vmatpush1.xpose.msra.mxu0 0.0
    %2978 = vmatprep.subr.mxu0 0.0
    %2979 = vmatpush1.xpose.msra.mxu0 0.0
    %2980 = vmatprep.subr.mxu0 0.0
    %2981 = vmatpush1.xpose.msra.mxu0 0.0
    %2982 = vmatprep.subr.mxu0 0.0
    %2983 = vmatpush1.xpose.msra.mxu0 0.0
    %2984 = vmatprep.subr.mxu0 0.0
    %2985 = vmatpush1.xpose.msra.mxu0 0.0
    %2986 = vmatprep.subr.mxu0 0.0
    %2987 = vmatpush1.xpose.msra.mxu0 0.0
    %2988 = vmatprep.subr.mxu0 0.0
    %2989 = vmatpush1.xpose.msra.mxu0 0.0
    %2990 = vmatprep.subr.mxu0 0.0
    %2991 = vmatpush1.xpose.msra.mxu0 0.0
    %2992 = vmatprep.subr.mxu0 0.0
    %2993 = vmatpush1.xpose.msra.mxu0 0.0
    %2994 = vmatprep.subr.mxu0 0.0
    %2995 = vmatpush1.xpose.msra.mxu0 0.0
    %2996 = vmatprep.subr.mxu0 0.0
    %2997 = vmatpush1.xpose.msra.mxu0 0.0
    %2998 = vmatprep.subr.mxu0 0.0
    %2999 = vmatpush1.xpose.msra.mxu0 0.0
    %3000 = vmatprep.subr.mxu0 0.0
    %3001 = vmatpush1.xpose.msra.mxu0 0.0
    %3002 = vmatprep.subr.mxu0 0.0
    %3003 = vmatpush1.xpose.msra.mxu0 0.0
    %3004 = vmatprep.subr.mxu0 0.0
    %3005 = vmatpush1.xpose.msra.mxu0 0.0
    %3006 = vmatprep.subr.mxu0 0.0
    %3007 = vmatpush1.xpose.msra.mxu0 0.0
    %3008 = vmatprep.subr.mxu0 0.0
    %3009 = vmatpush1.xpose.msra.mxu0 0.0
    %3010 = vmatprep.subr.mxu0 0.0
    %3011 = vmatpush1.xpose.msra.mxu0 0.0
    %3012 = vmatprep.mubr.f32.mxu0 0.0
    %3013 = vmatmul.mubr.f32.gmra.mrb[0].mxu0 %v2944
    %v3014 = vpop.f32.mrb[0].mxu0
    %v3015 = vadd.f32 0.0, %v3014
    %v3016 = vpop.f32.mrb[0].mxu0
    %3017 = vdwg.mxu0
    %v3018 = vsel %vm171, %v3015, -1e+30
    %v3019 = vsel %vm490, %v3018, -inf
    %3020 = vmax.xlane.f32.xlu0 %v3019
    %v3021 = vpop.xlane.xlu0 %3020
    %v3022 = vsub.f32 %v3018, %v3021
    %v3023 = vmul.f32 %v3022, 1.442695
    %v3024 = vpow.pop %v3023
    %v3025 = vsel %vm490, %v3024, 0.0
    %3026 = vadd.xlane.f32.xlu0 %v3025
    %v3027 = vpop.xlane.xlu0 %3026
    %v3028 = vrcp.pop %v3027
    %v3029 = vmul.f32 %v3024, %v3028
    %3030 = vrot.lane.b32.xlu0 %v2601, 96
    %v3031 = vpop.permute.xlu0 %3030
    %v3034 = vsel %vm490, %v3029, 0
    %3036 = vmatprep.subr.mxu0 0.0
    %3037 = vmatpush1.msra.mxu0 %v3031
    %3038 = vmatprep.subr.mxu0 0.0
    %3039 = vmatpush1.msra.mxu0 0.0
    %3040 = vmatprep.subr.mxu0 0.0
    %3041 = vmatpush1.msra.mxu0 0.0
    %3042 = vmatprep.subr.mxu0 0.0
    %3043 = vmatpush1.msra.mxu0 0.0
    %3044 = vmatprep.subr.mxu0 0.0
    %3045 = vmatpush1.msra.mxu0 0.0
    %3046 = vmatprep.subr.mxu0 0.0
    %3047 = vmatpush1.msra.mxu0 0.0
    %3048 = vmatprep.subr.mxu0 0.0
    %3049 = vmatpush1.msra.mxu0 0.0
    %3050 = vmatprep.subr.mxu0 0.0
    %3051 = vmatpush1.msra.mxu0 0.0
    %3052 = vmatprep.subr.mxu0 0.0
    %3053 = vmatpush1.msra.mxu0 0.0
    %3054 = vmatprep.subr.mxu0 0.0
    %3055 = vmatpush1.msra.mxu0 0.0
    %3056 = vmatprep.subr.mxu0 0.0
    %3057 = vmatpush1.msra.mxu0 0.0
    %3058 = vmatprep.subr.mxu0 0.0
    %3059 = vmatpush1.msra.mxu0 0.0
    %3060 = vmatprep.subr.mxu0 0.0
    %3061 = vmatpush1.msra.mxu0 0.0
    %3062 = vmatprep.subr.mxu0 0.0
    %3063 = vmatpush1.msra.mxu0 0.0
    %3064 = vmatprep.subr.mxu0 0.0
    %3065 = vmatpush1.msra.mxu0 0.0
    %3066 = vmatprep.subr.mxu0 0.0
    %3067 = vmatpush1.msra.mxu0 0.0
    %3068 = vmatprep.subr.mxu0 0.0
    %3069 = vmatpush1.msra.mxu0 0.0
    %3070 = vmatprep.subr.mxu0 0.0
    %3071 = vmatpush1.msra.mxu0 0.0
    %3072 = vmatprep.subr.mxu0 0.0
    %3073 = vmatpush1.msra.mxu0 0.0
    %3074 = vmatprep.subr.mxu0 0.0
    %3075 = vmatpush1.msra.mxu0 0.0
    %3076 = vmatprep.subr.mxu0 0.0
    %3077 = vmatpush1.msra.mxu0 0.0
    %3078 = vmatprep.subr.mxu0 0.0
    %3079 = vmatpush1.msra.mxu0 0.0
    %3080 = vmatprep.subr.mxu0 0.0
    %3081 = vmatpush1.msra.mxu0 0.0
    %3082 = vmatprep.subr.mxu0 0.0
    %3083 = vmatpush1.msra.mxu0 0.0
    %3084 = vmatprep.subr.mxu0 0.0
    %3085 = vmatpush1.msra.mxu0 0.0
    %3086 = vmatprep.subr.mxu0 0.0
    %3087 = vmatpush1.msra.mxu0 0.0
    %3088 = vmatprep.subr.mxu0 0.0
    %3089 = vmatpush1.msra.mxu0 0.0
    %3090 = vmatprep.subr.mxu0 0.0
    %3091 = vmatpush1.msra.mxu0 0.0
    %3092 = vmatprep.subr.mxu0 0.0
    %3093 = vmatpush1.msra.mxu0 0.0
    %3094 = vmatprep.subr.mxu0 0.0
    %3095 = vmatpush1.msra.mxu0 0.0
    %3096 = vmatprep.subr.mxu0 0.0
    %3097 = vmatpush1.msra.mxu0 0.0
    %3098 = vmatprep.subr.mxu0 0.0
    %3099 = vmatpush1.msra.mxu0 0.0
    %3100 = vmatprep.mubr.f32.mxu0 0.0
    %3101 = vmatmul.mubr.f32.gmra.mrb[0].mxu0 %v3034
    %v3102 = vpop.f32.mrb[0].mxu0
    %v3103 = vadd.f32 0.0, %v3102
    %v3104 = vpop.f32.mrb[0].mxu0
    %3105 = vdwg.mxu0
    %3106 = vrot.lane.b32.xlu0 %v2609, 80
    %v3107 = vpop.permute.xlu0 %3106
    %3108 = vrot.lane.b32.xlu0 %v2599, 16
    %v3109 = vpop.permute.xlu0 %3108
    %v3110 = vsel %vm413, %v3107, 0
    %v3112 = vsel %vm413, %v3109, 0
    %3114 = vmatprep.subr.mxu0 0.0
    %3115 = vmatpush1.xpose.msra.mxu0 %v3112
    %3116 = vmatprep.subr.mxu0 0.0
    %3117 = vmatpush1.xpose.msra.mxu0 0.0
    %3118 = vmatprep.subr.mxu0 0.0
    %3119 = vmatpush1.xpose.msra.mxu0 0.0
    %3120 = vmatprep.subr.mxu0 0.0
    %3121 = vmatpush1.xpose.msra.mxu0 0.0
    %3122 = vmatprep.subr.mxu0 0.0
    %3123 = vmatpush1.xpose.msra.mxu0 0.0
    %3124 = vmatprep.subr.mxu0 0.0
    %3125 = vmatpush1.xpose.msra.mxu0 0.0
    %3126 = vmatprep.subr.mxu0 0.0
    %3127 = vmatpush1.xpose.msra.mxu0 0.0
    %3128 = vmatprep.subr.mxu0 0.0
    %3129 = vmatpush1.xpose.msra.mxu0 0.0
    %3130 = vmatprep.subr.mxu0 0.0
    %3131 = vmatpush1.xpose.msra.mxu0 0.0
    %3132 = vmatprep.subr.mxu0 0.0
    %3133 = vmatpush1.xpose.msra.mxu0 0.0
    %3134 = vmatprep.subr.mxu0 0.0
    %3135 = vmatpush1.xpose.msra.mxu0 0.0
    %3136 = vmatprep.subr.mxu0 0.0
    %3137 = vmatpush1.xpose.msra.mxu0 0.0
    %3138 = vmatprep.subr.mxu0 0.0
    %3139 = vmatpush1.xpose.msra.mxu0 0.0
    %3140 = vmatprep.subr.mxu0 0.0
    %3141 = vmatpush1.xpose.msra.mxu0 0.0
    %3142 = vmatprep.subr.mxu0 0.0
    %3143 = vmatpush1.xpose.msra.mxu0 0.0
    %3144 = vmatprep.subr.mxu0 0.0
    %3145 = vmatpush1.xpose.msra.mxu0 0.0
    %3146 = vmatprep.subr.mxu0 0.0
    %3147 = vmatpush1.xpose.msra.mxu0 0.0
    %3148 = vmatprep.subr.mxu0 0.0
    %3149 = vmatpush1.xpose.msra.mxu0 0.0
    %3150 = vmatprep.subr.mxu0 0.0
    %3151 = vmatpush1.xpose.msra.mxu0 0.0
    %3152 = vmatprep.subr.mxu0 0.0
    %3153 = vmatpush1.xpose.msra.mxu0 0.0
    %3154 = vmatprep.subr.mxu0 0.0
    %3155 = vmatpush1.xpose.msra.mxu0 0.0
    %3156 = vmatprep.subr.mxu0 0.0
    %3157 = vmatpush1.xpose.msra.mxu0 0.0
    %3158 = vmatprep.subr.mxu0 0.0
    %3159 = vmatpush1.xpose.msra.mxu0 0.0
    %3160 = vmatprep.subr.mxu0 0.0
    %3161 = vmatpush1.xpose.msra.mxu0 0.0
    %3162 = vmatprep.subr.mxu0 0.0
    %3163 = vmatpush1.xpose.msra.mxu0 0.0
    %3164 = vmatprep.subr.mxu0 0.0
    %3165 = vmatpush1.xpose.msra.mxu0 0.0
    %3166 = vmatprep.subr.mxu0 0.0
    %3167 = vmatpush1.xpose.msra.mxu0 0.0
    %3168 = vmatprep.subr.mxu0 0.0
    %3169 = vmatpush1.xpose.msra.mxu0 0.0
    %3170 = vmatprep.subr.mxu0 0.0
    %3171 = vmatpush1.xpose.msra.mxu0 0.0
    %3172 = vmatprep.subr.mxu0 0.0
    %3173 = vmatpush1.xpose.msra.mxu0 0.0
    %3174 = vmatprep.subr.mxu0 0.0
    %3175 = vmatpush1.xpose.msra.mxu0 0.0
    %3176 = vmatprep.subr.mxu0 0.0
    %3177 = vmatpush1.xpose.msra.mxu0 0.0
    %3178 = vmatprep.mubr.f32.mxu0 0.0
    %3179 = vmatmul.mubr.f32.gmra.mrb[0].mxu0 %v3110
    %v3180 = vpop.f32.mrb[0].mxu0
    %v3181 = vadd.f32 0.0, %v3180
    %v3182 = vpop.f32.mrb[0].mxu0
    %3183 = vdwg.mxu0
    %v3184 = vsel %vm171, %v3181, -1e+30
    %v3185 = vsel %vm490, %v3184, -inf
    %3186 = vmax.xlane.f32.xlu0 %v3185
    %v3187 = vpop.xlane.xlu0 %3186
    %v3188 = vsub.f32 %v3184, %v3187
    %v3189 = vmul.f32 %v3188, 1.442695
    %v3190 = vpow.pop %v3189
    %v3191 = vsel %vm490, %v3190, 0.0
    %3192 = vadd.xlane.f32.xlu0 %v3191
    %v3193 = vpop.xlane.xlu0 %3192
    %v3194 = vrcp.pop %v3193
    %v3195 = vmul.f32 %v3190, %v3194
    %3196 = vrot.lane.b32.xlu0 %v2601, 80
    %v3197 = vpop.permute.xlu0 %3196
    %v3200 = vsel %vm490, %v3195, 0
    %3202 = vmatprep.subr.mxu0 0.0
    %3203 = vmatpush1.msra.mxu0 %v3197
    %3204 = vmatprep.subr.mxu0 0.0
    %3205 = vmatpush1.msra.mxu0 0.0
    %3206 = vmatprep.subr.mxu0 0.0
    %3207 = vmatpush1.msra.mxu0 0.0
    %3208 = vmatprep.subr.mxu0 0.0
    %3209 = vmatpush1.msra.mxu0 0.0
    %3210 = vmatprep.subr.mxu0 0.0
    %3211 = vmatpush1.msra.mxu0 0.0
    %3212 = vmatprep.subr.mxu0 0.0
    %3213 = vmatpush1.msra.mxu0 0.0
    %3214 = vmatprep.subr.mxu0 0.0
    %3215 = vmatpush1.msra.mxu0 0.0
    %3216 = vmatprep.subr.mxu0 0.0
    %3217 = vmatpush1.msra.mxu0 0.0
    %3218 = vmatprep.subr.mxu0 0.0
    %3219 = vmatpush1.msra.mxu0 0.0
    %3220 = vmatprep.subr.mxu0 0.0
    %3221 = vmatpush1.msra.mxu0 0.0
    %3222 = vmatprep.subr.mxu0 0.0
    %3223 = vmatpush1.msra.mxu0 0.0
    %3224 = vmatprep.subr.mxu0 0.0
    %3225 = vmatpush1.msra.mxu0 0.0
    %3226 = vmatprep.subr.mxu0 0.0
    %3227 = vmatpush1.msra.mxu0 0.0
    %3228 = vmatprep.subr.mxu0 0.0
    %3229 = vmatpush1.msra.mxu0 0.0
    %3230 = vmatprep.subr.mxu0 0.0
    %3231 = vmatpush1.msra.mxu0 0.0
    %3232 = vmatprep.subr.mxu0 0.0
    %3233 = vmatpush1.msra.mxu0 0.0
    %3234 = vmatprep.subr.mxu0 0.0
    %3235 = vmatpush1.msra.mxu0 0.0
    %3236 = vmatprep.subr.mxu0 0.0
    %3237 = vmatpush1.msra.mxu0 0.0
    %3238 = vmatprep.subr.mxu0 0.0
    %3239 = vmatpush1.msra.mxu0 0.0
    %3240 = vmatprep.subr.mxu0 0.0
    %3241 = vmatpush1.msra.mxu0 0.0
    %3242 = vmatprep.subr.mxu0 0.0
    %3243 = vmatpush1.msra.mxu0 0.0
    %3244 = vmatprep.subr.mxu0 0.0
    %3245 = vmatpush1.msra.mxu0 0.0
    %3246 = vmatprep.subr.mxu0 0.0
    %3247 = vmatpush1.msra.mxu0 0.0
    %3248 = vmatprep.subr.mxu0 0.0
    %3249 = vmatpush1.msra.mxu0 0.0
    %3250 = vmatprep.subr.mxu0 0.0
    %3251 = vmatpush1.msra.mxu0 0.0
    %3252 = vmatprep.subr.mxu0 0.0
    %3253 = vmatpush1.msra.mxu0 0.0
    %3254 = vmatprep.subr.mxu0 0.0
    %3255 = vmatpush1.msra.mxu0 0.0
    %3256 = vmatprep.subr.mxu0 0.0
    %3257 = vmatpush1.msra.mxu0 0.0
    %3258 = vmatprep.subr.mxu0 0.0
    %3259 = vmatpush1.msra.mxu0 0.0
    %3260 = vmatprep.subr.mxu0 0.0
    %3261 = vmatpush1.msra.mxu0 0.0
    %3262 = vmatprep.subr.mxu0 0.0
    %3263 = vmatpush1.msra.mxu0 0.0
    %3264 = vmatprep.subr.mxu0 0.0
    %3265 = vmatpush1.msra.mxu0 0.0
    %3266 = vmatprep.mubr.f32.mxu0 0.0
    %3267 = vmatmul.mubr.f32.gmra.mrb[0].mxu0 %v3200
    %v3268 = vpop.f32.mrb[0].mxu0
    %v3269 = vadd.f32 0.0, %v3268
    %v3270 = vpop.f32.mrb[0].mxu0
    %3271 = vdwg.mxu0
    %3273 = vrot.lane.b32.xlu0 %v2937, 16
    %v3274 = vpop.permute.xlu0 %3273
    %3277 = vrot.lane.b32.xlu0 %v3103, 32
    %v3278 = vpop.permute.xlu0 %3277
    %3281 = vrot.lane.b32.xlu0 %v3269, 48
    %v3282 = vpop.permute.xlu0 %3281
    %v3284 = vsel %vm413, %v2770, %v3274
    %v3285 = vsel %vm1087, %v3284, %v3278
    %v3286 = vsel %vm1089, %v3285, %v3282
    %v3287 = vmul.f32 %v2605, 0.25
    %3289 = vrot.lane.b32.xlu0 %v2605, 64
    %v3290 = vpop.permute.xlu0 %3289
    %v3292 = vsel %vm413, %v3287, 0
    %v3294 = vsel %vm413, %v3290, 0
    %3296 = vmatprep.subr.mxu0 0.0
    %3297 = vmatpush1.xpose.msra.mxu0 %v3294
    %3298 = vmatprep.subr.mxu0 0.0
    %3299 = vmatpush1.xpose.msra.mxu0 0.0
    %3300 = vmatprep.subr.mxu0 0.0
    %3301 = vmatpush1.xpose.msra.mxu0 0.0
    %3302 = vmatprep.subr.mxu0 0.0
    %3303 = vmatpush1.xpose.msra.mxu0 0.0
    %3304 = vmatprep.subr.mxu0 0.0
    %3305 = vmatpush1.xpose.msra.mxu0 0.0
    %3306 = vmatprep.subr.mxu0 0.0
    %3307 = vmatpush1.xpose.msra.mxu0 0.0
    %3308 = vmatprep.subr.mxu0 0.0
    %3309 = vmatpush1.xpose.msra.mxu0 0.0
    %3310 = vmatprep.subr.mxu0 0.0
    %3311 = vmatpush1.xpose.msra.mxu0 0.0
    %3312 = vmatprep.subr.mxu0 0.0
    %3313 = vmatpush1.xpose.msra.mxu0 0.0
    %3314 = vmatprep.subr.mxu0 0.0
    %3315 = vmatpush1.xpose.msra.mxu0 0.0
    %3316 = vmatprep.subr.mxu0 0.0
    %3317 = vmatpush1.xpose.msra.mxu0 0.0
    %3318 = vmatprep.subr.mxu0 0.0
    %3319 = vmatpush1.xpose.msra.mxu0 0.0
    %3320 = vmatprep.subr.mxu0 0.0
    %3321 = vmatpush1.xpose.msra.mxu0 0.0
    %3322 = vmatprep.subr.mxu0 0.0
    %3323 = vmatpush1.xpose.msra.mxu0 0.0
    %3324 = vmatprep.subr.mxu0 0.0
    %3325 = vmatpush1.xpose.msra.mxu0 0.0
    %3326 = vmatprep.subr.mxu0 0.0
    %3327 = vmatpush1.xpose.msra.mxu0 0.0
    %3328 = vmatprep.subr.mxu0 0.0
    %3329 = vmatpush1.xpose.msra.mxu0 0.0
    %3330 = vmatprep.subr.mxu0 0.0
    %3331 = vmatpush1.xpose.msra.mxu0 0.0
    %3332 = vmatprep.subr.mxu0 0.0
    %3333 = vmatpush1.xpose.msra.mxu0 0.0
    %3334 = vmatprep.subr.mxu0 0.0
    %3335 = vmatpush1.xpose.msra.mxu0 0.0
    %3336 = vmatprep.subr.mxu0 0.0
    %3337 = vmatpush1.xpose.msra.mxu0 0.0
    %3338 = vmatprep.subr.mxu0 0.0
    %3339 = vmatpush1.xpose.msra.mxu0 0.0
    %3340 = vmatprep.subr.mxu0 0.0
    %3341 = vmatpush1.xpose.msra.mxu0 0.0
    %3342 = vmatprep.subr.mxu0 0.0
    %3343 = vmatpush1.xpose.msra.mxu0 0.0
    %3344 = vmatprep.subr.mxu0 0.0
    %3345 = vmatpush1.xpose.msra.mxu0 0.0
    %3346 = vmatprep.subr.mxu0 0.0
    %3347 = vmatpush1.xpose.msra.mxu0 0.0
    %3348 = vmatprep.subr.mxu0 0.0
    %3349 = vmatpush1.xpose.msra.mxu0 0.0
    %3350 = vmatprep.subr.mxu0 0.0
    %3351 = vmatpush1.xpose.msra.mxu0 0.0
    %3352 = vmatprep.subr.mxu0 0.0
    %3353 = vmatpush1.xpose.msra.mxu0 0.0
    %3354 = vmatprep.subr.mxu0 0.0
    %3355 = vmatpush1.xpose.msra.mxu0 0.0
    %3356 = vmatprep.subr.mxu0 0.0
    %3357 = vmatpush1.xpose.msra.mxu0 0.0
    %3358 = vmatprep.subr.mxu0 0.0
    %3359 = vmatpush1.xpose.msra.mxu0 0.0
    %3360 = vmatprep.mubr.f32.mxu0 0.0
    %3361 = vmatmul.mubr.f32.gmra.mrb[0].mxu0 %v3292
    %v3362 = vpop.f32.mrb[0].mxu0
    %v3363 = vadd.f32 0.0, %v3362
    %v3364 = vpop.f32.mrb[0].mxu0
    %3365 = vdwg.mxu0
    %v3366 = vsel %vm171, %v3363, -1e+30
    %v3367 = vsel %vm490, %v3366, -inf
    %3368 = vmax.xlane.f32.xlu0 %v3367
    %v3369 = vpop.xlane.xlu0 %3368
    %v3370 = vsub.f32 %v3366, %v3369
    %v3371 = vmul.f32 %v3370, 1.442695
    %v3372 = vpow.pop %v3371
    %v3373 = vsel %vm490, %v3372, 0.0
    %3374 = vadd.xlane.f32.xlu0 %v3373
    %v3375 = vpop.xlane.xlu0 %3374
    %v3376 = vrcp.pop %v3375
    %v3377 = vmul.f32 %v3372, %v3376
    %v3379 = vsel %vm490, %v3377, 0
    %3381 = vmatprep.subr.mxu0 0.0
    %3382 = vmatpush1.msra.mxu0 %v2607
    %3383 = vmatprep.subr.mxu0 0.0
    %3384 = vmatpush1.msra.mxu0 0.0
    %3385 = vmatprep.subr.mxu0 0.0
    %3386 = vmatpush1.msra.mxu0 0.0
    %3387 = vmatprep.subr.mxu0 0.0
    %3388 = vmatpush1.msra.mxu0 0.0
    %3389 = vmatprep.subr.mxu0 0.0
    %3390 = vmatpush1.msra.mxu0 0.0
    %3391 = vmatprep.subr.mxu0 0.0
    %3392 = vmatpush1.msra.mxu0 0.0
    %3393 = vmatprep.subr.mxu0 0.0
    %3394 = vmatpush1.msra.mxu0 0.0
    %3395 = vmatprep.subr.mxu0 0.0
    %3396 = vmatpush1.msra.mxu0 0.0
    %3397 = vmatprep.subr.mxu0 0.0
    %3398 = vmatpush1.msra.mxu0 0.0
    %3399 = vmatprep.subr.mxu0 0.0
    %3400 = vmatpush1.msra.mxu0 0.0
    %3401 = vmatprep.subr.mxu0 0.0
    %3402 = vmatpush1.msra.mxu0 0.0
    %3403 = vmatprep.subr.mxu0 0.0
    %3404 = vmatpush1.msra.mxu0 0.0
    %3405 = vmatprep.subr.mxu0 0.0
    %3406 = vmatpush1.msra.mxu0 0.0
    %3407 = vmatprep.subr.mxu0 0.0
    %3408 = vmatpush1.msra.mxu0 0.0
    %3409 = vmatprep.subr.mxu0 0.0
    %3410 = vmatpush1.msra.mxu0 0.0
    %3411 = vmatprep.subr.mxu0 0.0
    %3412 = vmatpush1.msra.mxu0 0.0
    %3413 = vmatprep.subr.mxu0 0.0
    %3414 = vmatpush1.msra.mxu0 0.0
    %3415 = vmatprep.subr.mxu0 0.0
    %3416 = vmatpush1.msra.mxu0 0.0
    %3417 = vmatprep.subr.mxu0 0.0
    %3418 = vmatpush1.msra.mxu0 0.0
    %3419 = vmatprep.subr.mxu0 0.0
    %3420 = vmatpush1.msra.mxu0 0.0
    %3421 = vmatprep.subr.mxu0 0.0
    %3422 = vmatpush1.msra.mxu0 0.0
    %3423 = vmatprep.subr.mxu0 0.0
    %3424 = vmatpush1.msra.mxu0 0.0
    %3425 = vmatprep.subr.mxu0 0.0
    %3426 = vmatpush1.msra.mxu0 0.0
    %3427 = vmatprep.subr.mxu0 0.0
    %3428 = vmatpush1.msra.mxu0 0.0
    %3429 = vmatprep.subr.mxu0 0.0
    %3430 = vmatpush1.msra.mxu0 0.0
    %3431 = vmatprep.subr.mxu0 0.0
    %3432 = vmatpush1.msra.mxu0 0.0
    %3433 = vmatprep.subr.mxu0 0.0
    %3434 = vmatpush1.msra.mxu0 0.0
    %3435 = vmatprep.subr.mxu0 0.0
    %3436 = vmatpush1.msra.mxu0 0.0
    %3437 = vmatprep.subr.mxu0 0.0
    %3438 = vmatpush1.msra.mxu0 0.0
    %3439 = vmatprep.subr.mxu0 0.0
    %3440 = vmatpush1.msra.mxu0 0.0
    %3441 = vmatprep.subr.mxu0 0.0
    %3442 = vmatpush1.msra.mxu0 0.0
    %3443 = vmatprep.subr.mxu0 0.0
    %3444 = vmatpush1.msra.mxu0 0.0
    %3445 = vmatprep.mubr.f32.mxu0 0.0
    %3446 = vmatmul.mubr.f32.gmra.mrb[0].mxu0 %v3379
    %v3447 = vpop.f32.mrb[0].mxu0
    %v3448 = vadd.f32 0.0, %v3447
    %v3449 = vpop.f32.mrb[0].mxu0
    %3450 = vdwg.mxu0
    %3451 = vrot.lane.b32.xlu0 %v3287, 112
    %v3452 = vpop.permute.xlu0 %3451
    %3453 = vrot.lane.b32.xlu0 %v2605, 48
    %v3454 = vpop.permute.xlu0 %3453
    %v3455 = vsel %vm413, %v3452, 0
    %v3457 = vsel %vm413, %v3454, 0
    %3459 = vmatprep.subr.mxu0 0.0
    %3460 = vmatpush1.xpose.msra.mxu0 %v3457
    %3461 = vmatprep.subr.mxu0 0.0
    %3462 = vmatpush1.xpose.msra.mxu0 0.0
    %3463 = vmatprep.subr.mxu0 0.0
    %3464 = vmatpush1.xpose.msra.mxu0 0.0
    %3465 = vmatprep.subr.mxu0 0.0
    %3466 = vmatpush1.xpose.msra.mxu0 0.0
    %3467 = vmatprep.subr.mxu0 0.0
    %3468 = vmatpush1.xpose.msra.mxu0 0.0
    %3469 = vmatprep.subr.mxu0 0.0
    %3470 = vmatpush1.xpose.msra.mxu0 0.0
    %3471 = vmatprep.subr.mxu0 0.0
    %3472 = vmatpush1.xpose.msra.mxu0 0.0
    %3473 = vmatprep.subr.mxu0 0.0
    %3474 = vmatpush1.xpose.msra.mxu0 0.0
    %3475 = vmatprep.subr.mxu0 0.0
    %3476 = vmatpush1.xpose.msra.mxu0 0.0
    %3477 = vmatprep.subr.mxu0 0.0
    %3478 = vmatpush1.xpose.msra.mxu0 0.0
    %3479 = vmatprep.subr.mxu0 0.0
    %3480 = vmatpush1.xpose.msra.mxu0 0.0
    %3481 = vmatprep.subr.mxu0 0.0
    %3482 = vmatpush1.xpose.msra.mxu0 0.0
    %3483 = vmatprep.subr.mxu0 0.0
    %3484 = vmatpush1.xpose.msra.mxu0 0.0
    %3485 = vmatprep.subr.mxu0 0.0
    %3486 = vmatpush1.xpose.msra.mxu0 0.0
    %3487 = vmatprep.subr.mxu0 0.0
    %3488 = vmatpush1.xpose.msra.mxu0 0.0
    %3489 = vmatprep.subr.mxu0 0.0
    %3490 = vmatpush1.xpose.msra.mxu0 0.0
    %3491 = vmatprep.subr.mxu0 0.0
    %3492 = vmatpush1.xpose.msra.mxu0 0.0
    %3493 = vmatprep.subr.mxu0 0.0
    %3494 = vmatpush1.xpose.msra.mxu0 0.0
    %3495 = vmatprep.subr.mxu0 0.0
    %3496 = vmatpush1.xpose.msra.mxu0 0.0
    %3497 = vmatprep.subr.mxu0 0.0
    %3498 = vmatpush1.xpose.msra.mxu0 0.0
    %3499 = vmatprep.subr.mxu0 0.0
    %3500 = vmatpush1.xpose.msra.mxu0 0.0
    %3501 = vmatprep.subr.mxu0 0.0
    %3502 = vmatpush1.xpose.msra.mxu0 0.0
    %3503 = vmatprep.subr.mxu0 0.0
    %3504 = vmatpush1.xpose.msra.mxu0 0.0
    %3505 = vmatprep.subr.mxu0 0.0
    %3506 = vmatpush1.xpose.msra.mxu0 0.0
    %3507 = vmatprep.subr.mxu0 0.0
    %3508 = vmatpush1.xpose.msra.mxu0 0.0
    %3509 = vmatprep.subr.mxu0 0.0
    %3510 = vmatpush1.xpose.msra.mxu0 0.0
    %3511 = vmatprep.subr.mxu0 0.0
    %3512 = vmatpush1.xpose.msra.mxu0 0.0
    %3513 = vmatprep.subr.mxu0 0.0
    %3514 = vmatpush1.xpose.msra.mxu0 0.0
    %3515 = vmatprep.subr.mxu0 0.0
    %3516 = vmatpush1.xpose.msra.mxu0 0.0
    %3517 = vmatprep.subr.mxu0 0.0
    %3518 = vmatpush1.xpose.msra.mxu0 0.0
    %3519 = vmatprep.subr.mxu0 0.0
    %3520 = vmatpush1.xpose.msra.mxu0 0.0
    %3521 = vmatprep.subr.mxu0 0.0
    %3522 = vmatpush1.xpose.msra.mxu0 0.0
    %3523 = vmatprep.mubr.f32.mxu0 0.0
    %3524 = vmatmul.mubr.f32.gmra.mrb[0].mxu0 %v3455
    %v3525 = vpop.f32.mrb[0].mxu0
    %v3526 = vadd.f32 0.0, %v3525
    %v3527 = vpop.f32.mrb[0].mxu0
    %3528 = vdwg.mxu0
    %v3529 = vsel %vm171, %v3526, -1e+30
    %v3530 = vsel %vm490, %v3529, -inf
    %3531 = vmax.xlane.f32.xlu0 %v3530
    %v3532 = vpop.xlane.xlu0 %3531
    %v3533 = vsub.f32 %v3529, %v3532
    %v3534 = vmul.f32 %v3533, 1.442695
    %v3535 = vpow.pop %v3534
    %v3536 = vsel %vm490, %v3535, 0.0
    %3537 = vadd.xlane.f32.xlu0 %v3536
    %v3538 = vpop.xlane.xlu0 %3537
    %v3539 = vrcp.pop %v3538
    %v3540 = vmul.f32 %v3535, %v3539
    %3542 = vrot.lane.b32.xlu0 %v2607, 112
    %v3543 = vpop.permute.xlu0 %3542
    %v3546 = vsel %vm490, %v3540, 0
    %3548 = vmatprep.subr.mxu0 0.0
    %3549 = vmatpush1.msra.mxu0 %v3543
    %3550 = vmatprep.subr.mxu0 0.0
    %3551 = vmatpush1.msra.mxu0 0.0
    %3552 = vmatprep.subr.mxu0 0.0
    %3553 = vmatpush1.msra.mxu0 0.0
    %3554 = vmatprep.subr.mxu0 0.0
    %3555 = vmatpush1.msra.mxu0 0.0
    %3556 = vmatprep.subr.mxu0 0.0
    %3557 = vmatpush1.msra.mxu0 0.0
    %3558 = vmatprep.subr.mxu0 0.0
    %3559 = vmatpush1.msra.mxu0 0.0
    %3560 = vmatprep.subr.mxu0 0.0
    %3561 = vmatpush1.msra.mxu0 0.0
    %3562 = vmatprep.subr.mxu0 0.0
    %3563 = vmatpush1.msra.mxu0 0.0
    %3564 = vmatprep.subr.mxu0 0.0
    %3565 = vmatpush1.msra.mxu0 0.0
    %3566 = vmatprep.subr.mxu0 0.0
    %3567 = vmatpush1.msra.mxu0 0.0
    %3568 = vmatprep.subr.mxu0 0.0
    %3569 = vmatpush1.msra.mxu0 0.0
    %3570 = vmatprep.subr.mxu0 0.0
    %3571 = vmatpush1.msra.mxu0 0.0
    %3572 = vmatprep.subr.mxu0 0.0
    %3573 = vmatpush1.msra.mxu0 0.0
    %3574 = vmatprep.subr.mxu0 0.0
    %3575 = vmatpush1.msra.mxu0 0.0
    %3576 = vmatprep.subr.mxu0 0.0
    %3577 = vmatpush1.msra.mxu0 0.0
    %3578 = vmatprep.subr.mxu0 0.0
    %3579 = vmatpush1.msra.mxu0 0.0
    %3580 = vmatprep.subr.mxu0 0.0
    %3581 = vmatpush1.msra.mxu0 0.0
    %3582 = vmatprep.subr.mxu0 0.0
    %3583 = vmatpush1.msra.mxu0 0.0
    %3584 = vmatprep.subr.mxu0 0.0
    %3585 = vmatpush1.msra.mxu0 0.0
    %3586 = vmatprep.subr.mxu0 0.0
    %3587 = vmatpush1.msra.mxu0 0.0
    %3588 = vmatprep.subr.mxu0 0.0
    %3589 = vmatpush1.msra.mxu0 0.0
    %3590 = vmatprep.subr.mxu0 0.0
    %3591 = vmatpush1.msra.mxu0 0.0
    %3592 = vmatprep.subr.mxu0 0.0
    %3593 = vmatpush1.msra.mxu0 0.0
    %3594 = vmatprep.subr.mxu0 0.0
    %3595 = vmatpush1.msra.mxu0 0.0
    %3596 = vmatprep.subr.mxu0 0.0
    %3597 = vmatpush1.msra.mxu0 0.0
    %3598 = vmatprep.subr.mxu0 0.0
    %3599 = vmatpush1.msra.mxu0 0.0
    %3600 = vmatprep.subr.mxu0 0.0
    %3601 = vmatpush1.msra.mxu0 0.0
    %3602 = vmatprep.subr.mxu0 0.0
    %3603 = vmatpush1.msra.mxu0 0.0
    %3604 = vmatprep.subr.mxu0 0.0
    %3605 = vmatpush1.msra.mxu0 0.0
    %3606 = vmatprep.subr.mxu0 0.0
    %3607 = vmatpush1.msra.mxu0 0.0
    %3608 = vmatprep.subr.mxu0 0.0
    %3609 = vmatpush1.msra.mxu0 0.0
    %3610 = vmatprep.subr.mxu0 0.0
    %3611 = vmatpush1.msra.mxu0 0.0
    %3612 = vmatprep.mubr.f32.mxu0 0.0
    %3613 = vmatmul.mubr.f32.gmra.mrb[0].mxu0 %v3546
    %v3614 = vpop.f32.mrb[0].mxu0
    %v3615 = vadd.f32 0.0, %v3614
    %v3616 = vpop.f32.mrb[0].mxu0
    %3617 = vdwg.mxu0
    %3618 = vrot.lane.b32.xlu0 %v3287, 96
    %v3619 = vpop.permute.xlu0 %3618
    %3620 = vrot.lane.b32.xlu0 %v2605, 32
    %v3621 = vpop.permute.xlu0 %3620
    %v3622 = vsel %vm413, %v3619, 0
    %v3624 = vsel %vm413, %v3621, 0
    %3626 = vmatprep.subr.mxu0 0.0
    %3627 = vmatpush1.xpose.msra.mxu0 %v3624
    %3628 = vmatprep.subr.mxu0 0.0
    %3629 = vmatpush1.xpose.msra.mxu0 0.0
    %3630 = vmatprep.subr.mxu0 0.0
    %3631 = vmatpush1.xpose.msra.mxu0 0.0
    %3632 = vmatprep.subr.mxu0 0.0
    %3633 = vmatpush1.xpose.msra.mxu0 0.0
    %3634 = vmatprep.subr.mxu0 0.0
    %3635 = vmatpush1.xpose.msra.mxu0 0.0
    %3636 = vmatprep.subr.mxu0 0.0
    %3637 = vmatpush1.xpose.msra.mxu0 0.0
    %3638 = vmatprep.subr.mxu0 0.0
    %3639 = vmatpush1.xpose.msra.mxu0 0.0
    %3640 = vmatprep.subr.mxu0 0.0
    %3641 = vmatpush1.xpose.msra.mxu0 0.0
    %3642 = vmatprep.subr.mxu0 0.0
    %3643 = vmatpush1.xpose.msra.mxu0 0.0
    %3644 = vmatprep.subr.mxu0 0.0
    %3645 = vmatpush1.xpose.msra.mxu0 0.0
    %3646 = vmatprep.subr.mxu0 0.0
    %3647 = vmatpush1.xpose.msra.mxu0 0.0
    %3648 = vmatprep.subr.mxu0 0.0
    %3649 = vmatpush1.xpose.msra.mxu0 0.0
    %3650 = vmatprep.subr.mxu0 0.0
    %3651 = vmatpush1.xpose.msra.mxu0 0.0
    %3652 = vmatprep.subr.mxu0 0.0
    %3653 = vmatpush1.xpose.msra.mxu0 0.0
    %3654 = vmatprep.subr.mxu0 0.0
    %3655 = vmatpush1.xpose.msra.mxu0 0.0
    %3656 = vmatprep.subr.mxu0 0.0
    %3657 = vmatpush1.xpose.msra.mxu0 0.0
    %3658 = vmatprep.subr.mxu0 0.0
    %3659 = vmatpush1.xpose.msra.mxu0 0.0
    %3660 = vmatprep.subr.mxu0 0.0
    %3661 = vmatpush1.xpose.msra.mxu0 0.0
    %3662 = vmatprep.subr.mxu0 0.0
    %3663 = vmatpush1.xpose.msra.mxu0 0.0
    %3664 = vmatprep.subr.mxu0 0.0
    %3665 = vmatpush1.xpose.msra.mxu0 0.0
    %3666 = vmatprep.subr.mxu0 0.0
    %3667 = vmatpush1.xpose.msra.mxu0 0.0
    %3668 = vmatprep.subr.mxu0 0.0
    %3669 = vmatpush1.xpose.msra.mxu0 0.0
    %3670 = vmatprep.subr.mxu0 0.0
    %3671 = vmatpush1.xpose.msra.mxu0 0.0
    %3672 = vmatprep.subr.mxu0 0.0
    %3673 = vmatpush1.xpose.msra.mxu0 0.0
    %3674 = vmatprep.subr.mxu0 0.0
    %3675 = vmatpush1.xpose.msra.mxu0 0.0
    %3676 = vmatprep.subr.mxu0 0.0
    %3677 = vmatpush1.xpose.msra.mxu0 0.0
    %3678 = vmatprep.subr.mxu0 0.0
    %3679 = vmatpush1.xpose.msra.mxu0 0.0
    %3680 = vmatprep.subr.mxu0 0.0
    %3681 = vmatpush1.xpose.msra.mxu0 0.0
    %3682 = vmatprep.subr.mxu0 0.0
    %3683 = vmatpush1.xpose.msra.mxu0 0.0
    %3684 = vmatprep.subr.mxu0 0.0
    %3685 = vmatpush1.xpose.msra.mxu0 0.0
    %3686 = vmatprep.subr.mxu0 0.0
    %3687 = vmatpush1.xpose.msra.mxu0 0.0
    %3688 = vmatprep.subr.mxu0 0.0
    %3689 = vmatpush1.xpose.msra.mxu0 0.0
    %3690 = vmatprep.mubr.f32.mxu0 0.0
    %3691 = vmatmul.mubr.f32.gmra.mrb[0].mxu0 %v3622
    %v3692 = vpop.f32.mrb[0].mxu0
    %v3693 = vadd.f32 0.0, %v3692
    %v3694 = vpop.f32.mrb[0].mxu0
    %3695 = vdwg.mxu0
    %v3696 = vsel %vm171, %v3693, -1e+30
    %v3697 = vsel %vm490, %v3696, -inf
    %3698 = vmax.xlane.f32.xlu0 %v3697
    %v3699 = vpop.xlane.xlu0 %3698
    %v3700 = vsub.f32 %v3696, %v3699
    %v3701 = vmul.f32 %v3700, 1.442695
    %v3702 = vpow.pop %v3701
    %v3703 = vsel %vm490, %v3702, 0.0
    %3704 = vadd.xlane.f32.xlu0 %v3703
    %v3705 = vpop.xlane.xlu0 %3704
    %v3706 = vrcp.pop %v3705
    %v3707 = vmul.f32 %v3702, %v3706
    %3708 = vrot.lane.b32.xlu0 %v2607, 96
    %v3709 = vpop.permute.xlu0 %3708
    %v3712 = vsel %vm490, %v3707, 0
    %3714 = vmatprep.subr.mxu0 0.0
    %3715 = vmatpush1.msra.mxu0 %v3709
    %3716 = vmatprep.subr.mxu0 0.0
    %3717 = vmatpush1.msra.mxu0 0.0
    %3718 = vmatprep.subr.mxu0 0.0
    %3719 = vmatpush1.msra.mxu0 0.0
    %3720 = vmatprep.subr.mxu0 0.0
    %3721 = vmatpush1.msra.mxu0 0.0
    %3722 = vmatprep.subr.mxu0 0.0
    %3723 = vmatpush1.msra.mxu0 0.0
    %3724 = vmatprep.subr.mxu0 0.0
    %3725 = vmatpush1.msra.mxu0 0.0
    %3726 = vmatprep.subr.mxu0 0.0
    %3727 = vmatpush1.msra.mxu0 0.0
    %3728 = vmatprep.subr.mxu0 0.0
    %3729 = vmatpush1.msra.mxu0 0.0
    %3730 = vmatprep.subr.mxu0 0.0
    %3731 = vmatpush1.msra.mxu0 0.0
    %3732 = vmatprep.subr.mxu0 0.0
    %3733 = vmatpush1.msra.mxu0 0.0
    %3734 = vmatprep.subr.mxu0 0.0
    %3735 = vmatpush1.msra.mxu0 0.0
    %3736 = vmatprep.subr.mxu0 0.0
    %3737 = vmatpush1.msra.mxu0 0.0
    %3738 = vmatprep.subr.mxu0 0.0
    %3739 = vmatpush1.msra.mxu0 0.0
    %3740 = vmatprep.subr.mxu0 0.0
    %3741 = vmatpush1.msra.mxu0 0.0
    %3742 = vmatprep.subr.mxu0 0.0
    %3743 = vmatpush1.msra.mxu0 0.0
    %3744 = vmatprep.subr.mxu0 0.0
    %3745 = vmatpush1.msra.mxu0 0.0
    %3746 = vmatprep.subr.mxu0 0.0
    %3747 = vmatpush1.msra.mxu0 0.0
    %3748 = vmatprep.subr.mxu0 0.0
    %3749 = vmatpush1.msra.mxu0 0.0
    %3750 = vmatprep.subr.mxu0 0.0
    %3751 = vmatpush1.msra.mxu0 0.0
    %3752 = vmatprep.subr.mxu0 0.0
    %3753 = vmatpush1.msra.mxu0 0.0
    %3754 = vmatprep.subr.mxu0 0.0
    %3755 = vmatpush1.msra.mxu0 0.0
    %3756 = vmatprep.subr.mxu0 0.0
    %3757 = vmatpush1.msra.mxu0 0.0
    %3758 = vmatprep.subr.mxu0 0.0
    %3759 = vmatpush1.msra.mxu0 0.0
    %3760 = vmatprep.subr.mxu0 0.0
    %3761 = vmatpush1.msra.mxu0 0.0
    %3762 = vmatprep.subr.mxu0 0.0
    %3763 = vmatpush1.msra.mxu0 0.0
    %3764 = vmatprep.subr.mxu0 0.0
    %3765 = vmatpush1.msra.mxu0 0.0
    %3766 = vmatprep.subr.mxu0 0.0
    %3767 = vmatpush1.msra.mxu0 0.0
    %3768 = vmatprep.subr.mxu0 0.0
    %3769 = vmatpush1.msra.mxu0 0.0
    %3770 = vmatprep.subr.mxu0 0.0
    %3771 = vmatpush1.msra.mxu0 0.0
    %3772 = vmatprep.subr.mxu0 0.0
    %3773 = vmatpush1.msra.mxu0 0.0
    %3774 = vmatprep.subr.mxu0 0.0
    %3775 = vmatpush1.msra.mxu0 0.0
    %3776 = vmatprep.subr.mxu0 0.0
    %3777 = vmatpush1.msra.mxu0 0.0
    %3778 = vmatprep.mubr.f32.mxu0 0.0
    %3779 = vmatmul.mubr.f32.gmra.mrb[0].mxu0 %v3712
    %v3780 = vpop.f32.mrb[0].mxu0
    %v3781 = vadd.f32 0.0, %v3780
    %v3782 = vpop.f32.mrb[0].mxu0
    %3783 = vdwg.mxu0
    %3784 = vrot.lane.b32.xlu0 %v3287, 80
    %v3785 = vpop.permute.xlu0 %3784
    %3786 = vrot.lane.b32.xlu0 %v2605, 16
    %v3787 = vpop.permute.xlu0 %3786
    %v3788 = vsel %vm413, %v3785, 0
    %v3790 = vsel %vm413, %v3787, 0
    %3792 = vmatprep.subr.mxu0 0.0
    %3793 = vmatpush1.xpose.msra.mxu0 %v3790
    %3794 = vmatprep.subr.mxu0 0.0
    %3795 = vmatpush1.xpose.msra.mxu0 0.0
    %3796 = vmatprep.subr.mxu0 0.0
    %3797 = vmatpush1.xpose.msra.mxu0 0.0
    %3798 = vmatprep.subr.mxu0 0.0
    %3799 = vmatpush1.xpose.msra.mxu0 0.0
    %3800 = vmatprep.subr.mxu0 0.0
    %3801 = vmatpush1.xpose.msra.mxu0 0.0
    %3802 = vmatprep.subr.mxu0 0.0
    %3803 = vmatpush1.xpose.msra.mxu0 0.0
    %3804 = vmatprep.subr.mxu0 0.0
    %3805 = vmatpush1.xpose.msra.mxu0 0.0
    %3806 = vmatprep.subr.mxu0 0.0
    %3807 = vmatpush1.xpose.msra.mxu0 0.0
    %3808 = vmatprep.subr.mxu0 0.0
    %3809 = vmatpush1.xpose.msra.mxu0 0.0
    %3810 = vmatprep.subr.mxu0 0.0
    %3811 = vmatpush1.xpose.msra.mxu0 0.0
    %3812 = vmatprep.subr.mxu0 0.0
    %3813 = vmatpush1.xpose.msra.mxu0 0.0
    %3814 = vmatprep.subr.mxu0 0.0
    %3815 = vmatpush1.xpose.msra.mxu0 0.0
    %3816 = vmatprep.subr.mxu0 0.0
    %3817 = vmatpush1.xpose.msra.mxu0 0.0
    %3818 = vmatprep.subr.mxu0 0.0
    %3819 = vmatpush1.xpose.msra.mxu0 0.0
    %3820 = vmatprep.subr.mxu0 0.0
    %3821 = vmatpush1.xpose.msra.mxu0 0.0
    %3822 = vmatprep.subr.mxu0 0.0
    %3823 = vmatpush1.xpose.msra.mxu0 0.0
    %3824 = vmatprep.subr.mxu0 0.0
    %3825 = vmatpush1.xpose.msra.mxu0 0.0
    %3826 = vmatprep.subr.mxu0 0.0
    %3827 = vmatpush1.xpose.msra.mxu0 0.0
    %3828 = vmatprep.subr.mxu0 0.0
    %3829 = vmatpush1.xpose.msra.mxu0 0.0
    %3830 = vmatprep.subr.mxu0 0.0
    %3831 = vmatpush1.xpose.msra.mxu0 0.0
    %3832 = vmatprep.subr.mxu0 0.0
    %3833 = vmatpush1.xpose.msra.mxu0 0.0
    %3834 = vmatprep.subr.mxu0 0.0
    %3835 = vmatpush1.xpose.msra.mxu0 0.0
    %3836 = vmatprep.subr.mxu0 0.0
    %3837 = vmatpush1.xpose.msra.mxu0 0.0
    %3838 = vmatprep.subr.mxu0 0.0
    %3839 = vmatpush1.xpose.msra.mxu0 0.0
    %3840 = vmatprep.subr.mxu0 0.0
    %3841 = vmatpush1.xpose.msra.mxu0 0.0
    %3842 = vmatprep.subr.mxu0 0.0
    %3843 = vmatpush1.xpose.msra.mxu0 0.0
    %3844 = vmatprep.subr.mxu0 0.0
    %3845 = vmatpush1.xpose.msra.mxu0 0.0
    %3846 = vmatprep.subr.mxu0 0.0
    %3847 = vmatpush1.xpose.msra.mxu0 0.0
    %3848 = vmatprep.subr.mxu0 0.0
    %3849 = vmatpush1.xpose.msra.mxu0 0.0
    %3850 = vmatprep.subr.mxu0 0.0
    %3851 = vmatpush1.xpose.msra.mxu0 0.0
    %3852 = vmatprep.subr.mxu0 0.0
    %3853 = vmatpush1.xpose.msra.mxu0 0.0
    %3854 = vmatprep.subr.mxu0 0.0
    %3855 = vmatpush1.xpose.msra.mxu0 0.0
    %3856 = vmatprep.mubr.f32.mxu0 0.0
    %3857 = vmatmul.mubr.f32.gmra.mrb[0].mxu0 %v3788
    %v3858 = vpop.f32.mrb[0].mxu0
    %v3859 = vadd.f32 0.0, %v3858
    %v3860 = vpop.f32.mrb[0].mxu0
    %3861 = vdwg.mxu0
    %v3862 = vsel %vm171, %v3859, -1e+30
    %v3863 = vsel %vm490, %v3862, -inf
    %3864 = vmax.xlane.f32.xlu0 %v3863
    %v3865 = vpop.xlane.xlu0 %3864
    %v3866 = vsub.f32 %v3862, %v3865
    %v3867 = vmul.f32 %v3866, 1.442695
    %v3868 = vpow.pop %v3867
    %v3869 = vsel %vm490, %v3868, 0.0
    %3870 = vadd.xlane.f32.xlu0 %v3869
    %v3871 = vpop.xlane.xlu0 %3870
    %v3872 = vrcp.pop %v3871
    %v3873 = vmul.f32 %v3868, %v3872
    %3874 = vrot.lane.b32.xlu0 %v2607, 80
    %v3875 = vpop.permute.xlu0 %3874
    %v3878 = vsel %vm490, %v3873, 0
    %3880 = vmatprep.subr.mxu0 0.0
    %3881 = vmatpush1.msra.mxu0 %v3875
    %3882 = vmatprep.subr.mxu0 0.0
    %3883 = vmatpush1.msra.mxu0 0.0
    %3884 = vmatprep.subr.mxu0 0.0
    %3885 = vmatpush1.msra.mxu0 0.0
    %3886 = vmatprep.subr.mxu0 0.0
    %3887 = vmatpush1.msra.mxu0 0.0
    %3888 = vmatprep.subr.mxu0 0.0
    %3889 = vmatpush1.msra.mxu0 0.0
    %3890 = vmatprep.subr.mxu0 0.0
    %3891 = vmatpush1.msra.mxu0 0.0
    %3892 = vmatprep.subr.mxu0 0.0
    %3893 = vmatpush1.msra.mxu0 0.0
    %3894 = vmatprep.subr.mxu0 0.0
    %3895 = vmatpush1.msra.mxu0 0.0
    %3896 = vmatprep.subr.mxu0 0.0
    %3897 = vmatpush1.msra.mxu0 0.0
    %3898 = vmatprep.subr.mxu0 0.0
    %3899 = vmatpush1.msra.mxu0 0.0
    %3900 = vmatprep.subr.mxu0 0.0
    %3901 = vmatpush1.msra.mxu0 0.0
    %3902 = vmatprep.subr.mxu0 0.0
    %3903 = vmatpush1.msra.mxu0 0.0
    %3904 = vmatprep.subr.mxu0 0.0
    %3905 = vmatpush1.msra.mxu0 0.0
    %3906 = vmatprep.subr.mxu0 0.0
    %3907 = vmatpush1.msra.mxu0 0.0
    %3908 = vmatprep.subr.mxu0 0.0
    %3909 = vmatpush1.msra.mxu0 0.0
    %3910 = vmatprep.subr.mxu0 0.0
    %3911 = vmatpush1.msra.mxu0 0.0
    %3912 = vmatprep.subr.mxu0 0.0
    %3913 = vmatpush1.msra.mxu0 0.0
    %3914 = vmatprep.subr.mxu0 0.0
    %3915 = vmatpush1.msra.mxu0 0.0
    %3916 = vmatprep.subr.mxu0 0.0
    %3917 = vmatpush1.msra.mxu0 0.0
    %3918 = vmatprep.subr.mxu0 0.0
    %3919 = vmatpush1.msra.mxu0 0.0
    %3920 = vmatprep.subr.mxu0 0.0
    %3921 = vmatpush1.msra.mxu0 0.0
    %3922 = vmatprep.subr.mxu0 0.0
    %3923 = vmatpush1.msra.mxu0 0.0
    %3924 = vmatprep.subr.mxu0 0.0
    %3925 = vmatpush1.msra.mxu0 0.0
    %3926 = vmatprep.subr.mxu0 0.0
    %3927 = vmatpush1.msra.mxu0 0.0
    %3928 = vmatprep.subr.mxu0 0.0
    %3929 = vmatpush1.msra.mxu0 0.0
    %3930 = vmatprep.subr.mxu0 0.0
    %3931 = vmatpush1.msra.mxu0 0.0
    %3932 = vmatprep.subr.mxu0 0.0
    %3933 = vmatpush1.msra.mxu0 0.0
    %3934 = vmatprep.subr.mxu0 0.0
    %3935 = vmatpush1.msra.mxu0 0.0
    %3936 = vmatprep.subr.mxu0 0.0
    %3937 = vmatpush1.msra.mxu0 0.0
    %3938 = vmatprep.subr.mxu0 0.0
    %3939 = vmatpush1.msra.mxu0 0.0
    %3940 = vmatprep.subr.mxu0 0.0
    %3941 = vmatpush1.msra.mxu0 0.0
    %3942 = vmatprep.subr.mxu0 0.0
    %3943 = vmatpush1.msra.mxu0 0.0
    %3944 = vmatprep.mubr.f32.mxu0 0.0
    %3945 = vmatmul.mubr.f32.gmra.mrb[0].mxu0 %v3878
    %v3946 = vpop.f32.mrb[0].mxu0
    %v3947 = vadd.f32 0.0, %v3946
    %v3948 = vpop.f32.mrb[0].mxu0
    %3949 = vdwg.mxu0
    %3951 = vrot.lane.b32.xlu0 %v3615, 16
    %v3952 = vpop.permute.xlu0 %3951
    %3955 = vrot.lane.b32.xlu0 %v3781, 32
    %v3956 = vpop.permute.xlu0 %3955
    %3959 = vrot.lane.b32.xlu0 %v3947, 48
    %v3960 = vpop.permute.xlu0 %3959
    %v3962 = vsel %vm413, %v3448, %v3952
    %v3963 = vsel %vm1087, %v3962, %v3956
    %v3964 = vsel %vm1089, %v3963, %v3960
    %s3965 = scalar_lea.vmem %s7, 64
    %v3966 = vld [vmem:[%s3965] sm:$0xff]
    %v3967 = vld [vmem:[%s3965 + $0x8] sm:$0xff]
    %v3968 = vld [vmem:[%s3965 + $0x10] sm:$0xff]
    %v3969 = vld [vmem:[%s3965 + $0x18] sm:$0xff]
    %v3970 = vld [vmem:[%s3965 + $0x20] sm:$0xff]
    %v3971 = vld [vmem:[%s3965 + $0x28] sm:$0xff]
    %v3972 = vld [vmem:[%s3965 + $0x30] sm:$0xff]
    %v3973 = vld [vmem:[%s3965 + $0x38] sm:$0xff]
    %v3975 = vsel %vm174, %v3286, 0
    %v3978 = vsel %vm174, %v3964, 0
    %v3981 = vsel %vm174, %v3966, 0
    %v3984 = vsel %vm174, %v3967, 0
    %v3987 = vsel %vm174, %v3968, 0
    %v3990 = vsel %vm174, %v3969, 0
    %v3993 = vsel %vm174, %v3970, 0
    %v3996 = vsel %vm174, %v3971, 0
    %v3999 = vsel %vm174, %v3972, 0
    %v4002 = vsel %vm174, %v3973, 0
    %4004 = vmatprep.subr.mxu0 0.0
    %4005 = vmatpush1.xpose.msra.mxu0 %v3981
    %4006 = vmatprep.subr.mxu0 0.0
    %4007 = vmatpush1.xpose.msra.mxu0 %v3984
    %4008 = vmatprep.subr.mxu0 0.0
    %4009 = vmatpush1.xpose.msra.mxu0 %v3987
    %4010 = vmatprep.subr.mxu0 0.0
    %4011 = vmatpush1.xpose.msra.mxu0 %v3990
    %4012 = vmatprep.subr.mxu0 0.0
    %4013 = vmatpush1.xpose.msra.mxu0 %v3993
    %4014 = vmatprep.subr.mxu0 0.0
    %4015 = vmatpush1.xpose.msra.mxu0 %v3996
    %4016 = vmatprep.subr.mxu0 0.0
    %4017 = vmatpush1.xpose.msra.mxu0 %v3999
    %4018 = vmatprep.subr.mxu0 0.0
    %4019 = vmatpush1.xpose.msra.mxu0 %v4002
    %4020 = vmatprep.subr.mxu0 0.0
    %4021 = vmatpush1.xpose.msra.mxu0 0.0
    %4022 = vmatprep.subr.mxu0 0.0
    %4023 = vmatpush1.xpose.msra.mxu0 0.0
    %4024 = vmatprep.subr.mxu0 0.0
    %4025 = vmatpush1.xpose.msra.mxu0 0.0
    %4026 = vmatprep.subr.mxu0 0.0
    %4027 = vmatpush1.xpose.msra.mxu0 0.0
    %4028 = vmatprep.subr.mxu0 0.0
    %4029 = vmatpush1.xpose.msra.mxu0 0.0
    %4030 = vmatprep.subr.mxu0 0.0
    %4031 = vmatpush1.xpose.msra.mxu0 0.0
    %4032 = vmatprep.subr.mxu0 0.0
    %4033 = vmatpush1.xpose.msra.mxu0 0.0
    %4034 = vmatprep.subr.mxu0 0.0
    %4035 = vmatpush1.xpose.msra.mxu0 0.0
    %4036 = vmatprep.subr.mxu0 0.0
    %4037 = vmatpush1.xpose.msra.mxu0 0.0
    %4038 = vmatprep.subr.mxu0 0.0
    %4039 = vmatpush1.xpose.msra.mxu0 0.0
    %4040 = vmatprep.subr.mxu0 0.0
    %4041 = vmatpush1.xpose.msra.mxu0 0.0
    %4042 = vmatprep.subr.mxu0 0.0
    %4043 = vmatpush1.xpose.msra.mxu0 0.0
    %4044 = vmatprep.subr.mxu0 0.0
    %4045 = vmatpush1.xpose.msra.mxu0 0.0
    %4046 = vmatprep.subr.mxu0 0.0
    %4047 = vmatpush1.xpose.msra.mxu0 0.0
    %4048 = vmatprep.subr.mxu0 0.0
    %4049 = vmatpush1.xpose.msra.mxu0 0.0
    %4050 = vmatprep.subr.mxu0 0.0
    %4051 = vmatpush1.xpose.msra.mxu0 0.0
    %4052 = vmatprep.subr.mxu0 0.0
    %4053 = vmatpush1.xpose.msra.mxu0 0.0
    %4054 = vmatprep.subr.mxu0 0.0
    %4055 = vmatpush1.xpose.msra.mxu0 0.0
    %4056 = vmatprep.subr.mxu0 0.0
    %4057 = vmatpush1.xpose.msra.mxu0 0.0
    %4058 = vmatprep.subr.mxu0 0.0
    %4059 = vmatpush1.xpose.msra.mxu0 0.0
    %4060 = vmatprep.subr.mxu0 0.0
    %4061 = vmatpush1.xpose.msra.mxu0 0.0
    %4062 = vmatprep.subr.mxu0 0.0
    %4063 = vmatpush1.xpose.msra.mxu0 0.0
    %4064 = vmatprep.subr.mxu0 0.0
    %4065 = vmatpush1.xpose.msra.mxu0 0.0
    %4066 = vmatprep.subr.mxu0 0.0
    %4067 = vmatpush1.xpose.msra.mxu0 0.0
    %4068 = vmatprep.mubr.f32.mxu0 0.0
    %4069 = vmatmul.mubr.f32.gmra.mrb[0].mxu0 %v3975
    %v4070 = vpop.f32.mrb[0].mxu0
    %v4071 = vadd.f32 0.0, %v4070
    %v4072 = vpop.f32.mrb[0].mxu0
    %4073 = vmatprep.mubr.f32.mxu0 0.0
    %4074 = vmatmul.mubr.f32.gmra.mrb[0].mxu0 %v3978
    %v4075 = vpop.f32.mrb[0].mxu0
    %v4076 = vadd.f32 0.0, %v4075
    %v4077 = vpop.f32.mrb[0].mxu0
    %4078 = vdwg.mxu0
    %v4079 = vadd.f32 %v2368, %v4071
    %v4080 = vadd.f32 %v2369, %v4076
    %s4081 = scalar_lea.vmem %s8, 1
    %v4082 = vld [vmem:[%s4081] sm:$0x1]
    %v4084 = vlaneseq
    %v4085 = vshrl.u32 %v4084, 7
    %v4086 = vsub.s32 0, %v4085
    %v4087 = vrot.slane %v4082, %v4086
    %v4089 = vadd.f32 %v4079, %v4087
    %v4090 = vadd.f32 %v4080, %v4087
    %s4091 = scalar_lea.vmem %s9, 1
    %v4092 = vld [vmem:[%s4091] sm:$0x1]
    %s4093 = scalar_lea.vmem %s10, 1
    %v4094 = vld [vmem:[%s4093] sm:$0x1]
    %v4095 = vsel %vm174, %v4089, 0.0
    %4096 = vadd.xlane.f32.xlu0 %v4095
    %v4097 = vpop.xlane.xlu0 %4096
    %v4098 = vsel %vm174, %v4090, 0.0
    %4099 = vadd.xlane.f32.xlu0 %v4098
    %v4100 = vpop.xlane.xlu0 %4099
    %v4101 = vmul.f32 %v4097, %v181
    %v4102 = vmul.f32 %v4100, %v181
    %v4103 = vsub.f32 %v4089, %v4101
    %v4104 = vsub.f32 %v4090, %v4102
    %v4105 = vmul.f32 %v4103, %v4103
    %v4106 = vmul.f32 %v4104, %v4104
    %v4107 = vsel %vm174, %v4105, 0.0
    %4108 = vadd.xlane.f32.xlu0 %v4107
    %v4109 = vpop.xlane.xlu0 %4108
    %v4110 = vsel %vm174, %v4106, 0.0
    %4111 = vadd.xlane.f32.xlu0 %v4110
    %v4112 = vpop.xlane.xlu0 %4111
    %v4113 = vmul.f32 %v4109, %v181
    %v4114 = vmul.f32 %v4112, %v181
    %v4115 = vadd.f32 %v4113, 1e-05
    %v4116 = vadd.f32 %v4114, 1e-05
    %v4117 = vrsqrt.pop %v4115
    %v4118 = vrsqrt.pop %v4116
    %v4119 = vmul.f32 %v4103, %v4117
    %v4120 = vmul.f32 %v4104, %v4118
    %v4122 = vlaneseq
    %v4123 = vshrl.u32 %v4122, 7
    %v4124 = vsub.s32 0, %v4123
    %v4125 = vrot.slane %v4092, %v4124
    %v4127 = vmul.f32 %v4119, %v4125
    %v4128 = vmul.f32 %v4120, %v4125
    %v4130 = vlaneseq
    %v4131 = vshrl.u32 %v4130, 7
    %v4132 = vsub.s32 0, %v4131
    %v4133 = vrot.slane %v4094, %v4132
    %v4135 = vadd.f32 %v4127, %v4133
    %v4136 = vadd.f32 %v4128, %v4133
    %s4137 = scalar_lea.vmem %s11, 256
    %v4138 = vld [vmem:[%s4137] sm:$0xff]
    %v4139 = vld [vmem:[%s4137 + $0x8] sm:$0xff]
    %v4140 = vld [vmem:[%s4137 + $0x10] sm:$0xff]
    %v4141 = vld [vmem:[%s4137 + $0x18] sm:$0xff]
    %v4142 = vld [vmem:[%s4137 + $0x20] sm:$0xff]
    %v4143 = vld [vmem:[%s4137 + $0x28] sm:$0xff]
    %v4144 = vld [vmem:[%s4137 + $0x30] sm:$0xff]
    %v4145 = vld [vmem:[%s4137 + $0x38] sm:$0xff]
    %v4146 = vld [vmem:[%s4137 + $0x40] sm:$0xff]
    %v4147 = vld [vmem:[%s4137 + $0x48] sm:$0xff]
    %v4148 = vld [vmem:[%s4137 + $0x50] sm:$0xff]
    %v4149 = vld [vmem:[%s4137 + $0x58] sm:$0xff]
    %v4150 = vld [vmem:[%s4137 + $0x60] sm:$0xff]
    %v4151 = vld [vmem:[%s4137 + $0x68] sm:$0xff]
    %v4152 = vld [vmem:[%s4137 + $0x70] sm:$0xff]
    %v4153 = vld [vmem:[%s4137 + $0x78] sm:$0xff]
    %v4154 = vld [vmem:[%s4137 + $0x80] sm:$0xff]
    %v4155 = vld [vmem:[%s4137 + $0x88] sm:$0xff]
    %v4156 = vld [vmem:[%s4137 + $0x90] sm:$0xff]
    %v4157 = vld [vmem:[%s4137 + $0x98] sm:$0xff]
    %v4158 = vld [vmem:[%s4137 + $0xa0] sm:$0xff]
    %v4159 = vld [vmem:[%s4137 + $0xa8] sm:$0xff]
    %v4160 = vld [vmem:[%s4137 + $0xb0] sm:$0xff]
    %v4161 = vld [vmem:[%s4137 + $0xb8] sm:$0xff]
    %v4162 = vld [vmem:[%s4137 + $0xc0] sm:$0xff]
    %v4163 = vld [vmem:[%s4137 + $0xc8] sm:$0xff]
    %v4164 = vld [vmem:[%s4137 + $0xd0] sm:$0xff]
    %v4165 = vld [vmem:[%s4137 + $0xd8] sm:$0xff]
    %v4166 = vld [vmem:[%s4137 + $0xe0] sm:$0xff]
    %v4167 = vld [vmem:[%s4137 + $0xe8] sm:$0xff]
    %v4168 = vld [vmem:[%s4137 + $0xf0] sm:$0xff]
    %v4169 = vld [vmem:[%s4137 + $0xf8] sm:$0xff]
    %s4170 = scalar_lea.vmem %s12, 2
    %v4171 = vld [vmem:[%s4170] sm:$0x3]
    %v4173 = vlaneseq
    %v4174 = vshrl.u32 %v4173, 7
    %v4175 = vsub.s32 0, %v4174
    %v4176 = vrot.slane %v4171, %v4175
    %v4177 = vlaneseq
    %v4178 = vshrl.u32 %v4177, 7
    %v4179 = vsub.s32 1, %v4178
    %v4180 = vrot.slane %v4171, %v4179
    %v4184 = vsel %vm174, %v4135, 0
    %v4187 = vsel %vm174, %v4136, 0
    %v4190 = vsel %vm174, %v4138, 0
    %v4193 = vsel %vm174, %v4139, 0
    %v4196 = vsel %vm174, %v4140, 0
    %v4199 = vsel %vm174, %v4141, 0
    %v4202 = vsel %vm174, %v4142, 0
    %v4205 = vsel %vm174, %v4143, 0
    %v4208 = vsel %vm174, %v4144, 0
    %v4211 = vsel %vm174, %v4145, 0
    %v4214 = vsel %vm174, %v4146, 0
    %v4217 = vsel %vm174, %v4147, 0
    %v4220 = vsel %vm174, %v4148, 0
    %v4223 = vsel %vm174, %v4149, 0
    %v4226 = vsel %vm174, %v4150, 0
    %v4229 = vsel %vm174, %v4151, 0
    %v4232 = vsel %vm174, %v4152, 0
    %v4235 = vsel %vm174, %v4153, 0
    %v4238 = vsel %vm174, %v4154, 0
    %v4241 = vsel %vm174, %v4155, 0
    %v4244 = vsel %vm174, %v4156, 0
    %v4247 = vsel %vm174, %v4157, 0
    %v4250 = vsel %vm174, %v4158, 0
    %v4253 = vsel %vm174, %v4159, 0
    %v4256 = vsel %vm174, %v4160, 0
    %v4259 = vsel %vm174, %v4161, 0
    %v4262 = vsel %vm174, %v4162, 0
    %v4265 = vsel %vm174, %v4163, 0
    %v4268 = vsel %vm174, %v4164, 0
    %v4271 = vsel %vm174, %v4165, 0
    %v4274 = vsel %vm174, %v4166, 0
    %v4277 = vsel %vm174, %v4167, 0
    %v4280 = vsel %vm174, %v4168, 0
    %v4283 = vsel %vm174, %v4169, 0
    %4285 = vmatprep.subr.mxu0 0.0
    %4286 = vmatpush1.xpose.msra.mxu0 %v4190
    %4287 = vmatprep.subr.mxu0 0.0
    %4288 = vmatpush1.xpose.msra.mxu0 %v4193
    %4289 = vmatprep.subr.mxu0 0.0
    %4290 = vmatpush1.xpose.msra.mxu0 %v4196
    %4291 = vmatprep.subr.mxu0 0.0
    %4292 = vmatpush1.xpose.msra.mxu0 %v4199
    %4293 = vmatprep.subr.mxu0 0.0
    %4294 = vmatpush1.xpose.msra.mxu0 %v4202
    %4295 = vmatprep.subr.mxu0 0.0
    %4296 = vmatpush1.xpose.msra.mxu0 %v4205
    %4297 = vmatprep.subr.mxu0 0.0
    %4298 = vmatpush1.xpose.msra.mxu0 %v4208
    %4299 = vmatprep.subr.mxu0 0.0
    %4300 = vmatpush1.xpose.msra.mxu0 %v4211
    %4301 = vmatprep.subr.mxu0 0.0
    %4302 = vmatpush1.xpose.msra.mxu0 %v4214
    %4303 = vmatprep.subr.mxu0 0.0
    %4304 = vmatpush1.xpose.msra.mxu0 %v4217
    %4305 = vmatprep.subr.mxu0 0.0
    %4306 = vmatpush1.xpose.msra.mxu0 %v4220
    %4307 = vmatprep.subr.mxu0 0.0
    %4308 = vmatpush1.xpose.msra.mxu0 %v4223
    %4309 = vmatprep.subr.mxu0 0.0
    %4310 = vmatpush1.xpose.msra.mxu0 %v4226
    %4311 = vmatprep.subr.mxu0 0.0
    %4312 = vmatpush1.xpose.msra.mxu0 %v4229
    %4313 = vmatprep.subr.mxu0 0.0
    %4314 = vmatpush1.xpose.msra.mxu0 %v4232
    %4315 = vmatprep.subr.mxu0 0.0
    %4316 = vmatpush1.xpose.msra.mxu0 %v4235
    %4317 = vmatprep.subr.mxu0 0.0
    %4318 = vmatpush1.xpose.msra.mxu0 %v4238
    %4319 = vmatprep.subr.mxu0 0.0
    %4320 = vmatpush1.xpose.msra.mxu0 %v4241
    %4321 = vmatprep.subr.mxu0 0.0
    %4322 = vmatpush1.xpose.msra.mxu0 %v4244
    %4323 = vmatprep.subr.mxu0 0.0
    %4324 = vmatpush1.xpose.msra.mxu0 %v4247
    %4325 = vmatprep.subr.mxu0 0.0
    %4326 = vmatpush1.xpose.msra.mxu0 %v4250
    %4327 = vmatprep.subr.mxu0 0.0
    %4328 = vmatpush1.xpose.msra.mxu0 %v4253
    %4329 = vmatprep.subr.mxu0 0.0
    %4330 = vmatpush1.xpose.msra.mxu0 %v4256
    %4331 = vmatprep.subr.mxu0 0.0
    %4332 = vmatpush1.xpose.msra.mxu0 %v4259
    %4333 = vmatprep.subr.mxu0 0.0
    %4334 = vmatpush1.xpose.msra.mxu0 %v4262
    %4335 = vmatprep.subr.mxu0 0.0
    %4336 = vmatpush1.xpose.msra.mxu0 %v4265
    %4337 = vmatprep.subr.mxu0 0.0
    %4338 = vmatpush1.xpose.msra.mxu0 %v4268
    %4339 = vmatprep.subr.mxu0 0.0
    %4340 = vmatpush1.xpose.msra.mxu0 %v4271
    %4341 = vmatprep.subr.mxu0 0.0
    %4342 = vmatpush1.xpose.msra.mxu0 %v4274
    %4343 = vmatprep.subr.mxu0 0.0
    %4344 = vmatpush1.xpose.msra.mxu0 %v4277
    %4345 = vmatprep.subr.mxu0 0.0
    %4346 = vmatpush1.xpose.msra.mxu0 %v4280
    %4347 = vmatprep.subr.mxu0 0.0
    %4348 = vmatpush1.xpose.msra.mxu0 %v4283
    %4349 = vmatprep.mubr.f32.mxu0 0.0
    %4350 = vmatmul.mubr.f32.gmra.mrb[0].mxu0 %v4184
    %v4351 = vpop.f32.mrb[0].mxu0
    %v4352 = vadd.f32 %v4176, %v4351
    %v4353 = vpop.f32.mrb[0].mxu0
    %v4354 = vadd.f32 %v4180, %v4353
    %4355 = vmatprep.mubr.f32.mxu0 0.0
    %4356 = vmatmul.mubr.f32.gmra.mrb[0].mxu0 %v4187
    %v4357 = vpop.f32.mrb[0].mxu0
    %v4358 = vadd.f32 %v4176, %v4357
    %v4359 = vpop.f32.mrb[0].mxu0
    %v4360 = vadd.f32 %v4180, %v4359
    %4361 = vdwg.mxu0
    %v4362 = vmul.f32 %v4352, 0.5
    %v4363 = vmul.f32 %v4354, 0.5
    %v4364 = vmul.f32 %v4358, 0.5
    %v4365 = vmul.f32 %v4360, 0.5
    %v4366 = vmul.f32 %v4352, 0.70710677
    %v4367 = vmul.f32 %v4354, 0.70710677
    %v4368 = vmul.f32 %v4358, 0.70710677
    %v4369 = vmul.f32 %v4360, 0.70710677
    %vm4370 = vcmp.ge.f32.partialorder %v4366, 0.0
    %vm4371 = vcmp.ge.f32.partialorder %v4367, 0.0
    %vm4372 = vcmp.ge.f32.partialorder %v4368, 0.0
    %vm4373 = vcmp.ge.f32.partialorder %v4369, 0.0
    %v4374 = vsel %vm4370, 1.0, -1.0
    %v4375 = vsel %vm4371, 1.0, -1.0
    %v4376 = vsel %vm4372, 1.0, -1.0
    %v4377 = vsel %vm4373, 1.0, -1.0
    %v4378 = vand.u32 2147483647, %v4366
    %v4379 = vand.u32 2147483647, %v4367
    %v4380 = vand.u32 2147483647, %v4368
    %v4381 = vand.u32 2147483647, %v4369
    %v4382 = vmul.f32 %v4378, 0.3275911
    %v4383 = vmul.f32 %v4379, 0.3275911
    %v4384 = vmul.f32 %v4380, 0.3275911
    %v4385 = vmul.f32 %v4381, 0.3275911
    %v4386 = vadd.f32 %v4382, 1.0
    %v4387 = vadd.f32 %v4383, 1.0
    %v4388 = vadd.f32 %v4384, 1.0
    %v4389 = vadd.f32 %v4385, 1.0
    %v4390 = vrcp.pop %v4386
    %v4391 = vmul.f32 1.0, %v4390
    %v4392 = vrcp.pop %v4387
    %v4393 = vmul.f32 1.0, %v4392
    %v4394 = vrcp.pop %v4388
    %v4395 = vmul.f32 1.0, %v4394
    %v4396 = vrcp.pop %v4389
    %v4397 = vmul.f32 1.0, %v4396
    %v4398 = vmul.f32 %v4391, 1.0614054
    %v4399 = vmul.f32 %v4393, 1.0614054
    %v4400 = vmul.f32 %v4395, 1.0614054
    %v4401 = vmul.f32 %v4397, 1.0614054
    %v4402 = vadd.f32 %v4398, -1.4531521
    %v4403 = vadd.f32 %v4399, -1.4531521
    %v4404 = vadd.f32 %v4400, -1.4531521
    %v4405 = vadd.f32 %v4401, -1.4531521
    %v4406 = vmul.f32 %v4402, %v4391
    %v4407 = vmul.f32 %v4403, %v4393
    %v4408 = vmul.f32 %v4404, %v4395
    %v4409 = vmul.f32 %v4405, %v4397
    %v4410 = vadd.f32 %v4406, 1.4214138
    %v4411 = vadd.f32 %v4407, 1.4214138
    %v4412 = vadd.f32 %v4408, 1.4214138
    %v4413 = vadd.f32 %v4409, 1.4214138
    %v4414 = vmul.f32 %v4410, %v4391
    %v4415 = vmul.f32 %v4411, %v4393
    %v4416 = vmul.f32 %v4412, %v4395
    %v4417 = vmul.f32 %v4413, %v4397
    %v4418 = vadd.f32 %v4414, -0.28449672
    %v4419 = vadd.f32 %v4415, -0.28449672
    %v4420 = vadd.f32 %v4416, -0.28449672
    %v4421 = vadd.f32 %v4417, -0.28449672
    %v4422 = vmul.f32 %v4418, %v4391
    %v4423 = vmul.f32 %v4419, %v4393
    %v4424 = vmul.f32 %v4420, %v4395
    %v4425 = vmul.f32 %v4421, %v4397
    %v4426 = vadd.f32 %v4422, 0.2548296
    %v4427 = vadd.f32 %v4423, 0.2548296
    %v4428 = vadd.f32 %v4424, 0.2548296
    %v4429 = vadd.f32 %v4425, 0.2548296
    %v4430 = vmul.f32 %v4426, %v4391
    %v4431 = vmul.f32 %v4427, %v4393
    %v4432 = vmul.f32 %v4428, %v4395
    %v4433 = vmul.f32 %v4429, %v4397
    %v4434 = vsub.f32 0.0, %v4378
    %v4435 = vsub.f32 0.0, %v4379
    %v4436 = vsub.f32 0.0, %v4380
    %v4437 = vsub.f32 0.0, %v4381
    %v4438 = vmul.f32 %v4434, %v4378
    %v4439 = vmul.f32 %v4435, %v4379
    %v4440 = vmul.f32 %v4436, %v4380
    %v4441 = vmul.f32 %v4437, %v4381
    %v4442 = vmul.f32 %v4438, 1.442695
    %v4443 = vpow.pop %v4442
    %v4444 = vmul.f32 %v4439, 1.442695
    %v4445 = vpow.pop %v4444
    %v4446 = vmul.f32 %v4440, 1.442695
    %v4447 = vpow.pop %v4446
    %v4448 = vmul.f32 %v4441, 1.442695
    %v4449 = vpow.pop %v4448
    %v4450 = vmul.f32 %v4430, %v4443
    %v4451 = vmul.f32 %v4431, %v4445
    %v4452 = vmul.f32 %v4432, %v4447
    %v4453 = vmul.f32 %v4433, %v4449
    %v4454 = vsub.f32 1.0, %v4450
    %v4455 = vsub.f32 1.0, %v4451
    %v4456 = vsub.f32 1.0, %v4452
    %v4457 = vsub.f32 1.0, %v4453
    %v4458 = vmul.f32 %v4374, %v4454
    %v4459 = vmul.f32 %v4375, %v4455
    %v4460 = vmul.f32 %v4376, %v4456
    %v4461 = vmul.f32 %v4377, %v4457
    %v4462 = vadd.f32 %v4458, 1.0
    %v4463 = vadd.f32 %v4459, 1.0
    %v4464 = vadd.f32 %v4460, 1.0
    %v4465 = vadd.f32 %v4461, 1.0
    %v4466 = vmul.f32 %v4362, %v4462
    %v4467 = vmul.f32 %v4363, %v4463
    %v4468 = vmul.f32 %v4364, %v4464
    %v4469 = vmul.f32 %v4365, %v4465
    %s4470 = scalar_lea.vmem %s13, 128
    %v4471 = vld [vmem:[%s4470] sm:$0xff]
    %v4472 = vld [vmem:[%s4470 + $0x8] sm:$0xff]
    %v4473 = vld [vmem:[%s4470 + $0x10] sm:$0xff]
    %v4474 = vld [vmem:[%s4470 + $0x18] sm:$0xff]
    %v4475 = vld [vmem:[%s4470 + $0x20] sm:$0xff]
    %v4476 = vld [vmem:[%s4470 + $0x28] sm:$0xff]
    %v4477 = vld [vmem:[%s4470 + $0x30] sm:$0xff]
    %v4478 = vld [vmem:[%s4470 + $0x38] sm:$0xff]
    %v4479 = vld [vmem:[%s4470 + $0x40] sm:$0xff]
    %v4480 = vld [vmem:[%s4470 + $0x48] sm:$0xff]
    %v4481 = vld [vmem:[%s4470 + $0x50] sm:$0xff]
    %v4482 = vld [vmem:[%s4470 + $0x58] sm:$0xff]
    %v4483 = vld [vmem:[%s4470 + $0x60] sm:$0xff]
    %v4484 = vld [vmem:[%s4470 + $0x68] sm:$0xff]
    %v4485 = vld [vmem:[%s4470 + $0x70] sm:$0xff]
    %v4486 = vld [vmem:[%s4470 + $0x78] sm:$0xff]
    %4487 = vmatprep.subr.mxu0 %v4472
    %4488 = vmatpush1.xpose.msra.mxu0 %v4471
    %4489 = vmatprep.subr.mxu0 %v4474
    %4490 = vmatpush1.xpose.msra.mxu0 %v4473
    %4491 = vmatprep.subr.mxu0 %v4476
    %4492 = vmatpush1.xpose.msra.mxu0 %v4475
    %4493 = vmatprep.subr.mxu0 %v4478
    %4494 = vmatpush1.xpose.msra.mxu0 %v4477
    %4495 = vmatprep.subr.mxu0 %v4480
    %4496 = vmatpush1.xpose.msra.mxu0 %v4479
    %4497 = vmatprep.subr.mxu0 %v4482
    %4498 = vmatpush1.xpose.msra.mxu0 %v4481
    %4499 = vmatprep.subr.mxu0 %v4484
    %4500 = vmatpush1.xpose.msra.mxu0 %v4483
    %4501 = vmatprep.subr.mxu0 %v4486
    %4502 = vmatpush1.xpose.msra.mxu0 %v4485
    %4503 = vmatprep.subr.mxu0 0.0
    %4504 = vmatpush1.xpose.msra.mxu0 0.0
    %4505 = vmatprep.subr.mxu0 0.0
    %4506 = vmatpush1.xpose.msra.mxu0 0.0
    %4507 = vmatprep.subr.mxu0 0.0
    %4508 = vmatpush1.xpose.msra.mxu0 0.0
    %4509 = vmatprep.subr.mxu0 0.0
    %4510 = vmatpush1.xpose.msra.mxu0 0.0
    %4511 = vmatprep.subr.mxu0 0.0
    %4512 = vmatpush1.xpose.msra.mxu0 0.0
    %4513 = vmatprep.subr.mxu0 0.0
    %4514 = vmatpush1.xpose.msra.mxu0 0.0
    %4515 = vmatprep.subr.mxu0 0.0
    %4516 = vmatpush1.xpose.msra.mxu0 0.0
    %4517 = vmatprep.subr.mxu0 0.0
    %4518 = vmatpush1.xpose.msra.mxu0 0.0
    %4519 = vmatprep.subr.mxu0 0.0
    %4520 = vmatpush1.xpose.msra.mxu0 0.0
    %4521 = vmatprep.subr.mxu0 0.0
    %4522 = vmatpush1.xpose.msra.mxu0 0.0
    %4523 = vmatprep.subr.mxu0 0.0
    %4524 = vmatpush1.xpose.msra.mxu0 0.0
    %4525 = vmatprep.subr.mxu0 0.0
    %4526 = vmatpush1.xpose.msra.mxu0 0.0
    %4527 = vmatprep.subr.mxu0 0.0
    %4528 = vmatpush1.xpose.msra.mxu0 0.0
    %4529 = vmatprep.subr.mxu0 0.0
    %4530 = vmatpush1.xpose.msra.mxu0 0.0
    %4531 = vmatprep.subr.mxu0 0.0
    %4532 = vmatpush1.xpose.msra.mxu0 0.0
    %4533 = vmatprep.subr.mxu0 0.0
    %4534 = vmatpush1.xpose.msra.mxu0 0.0
    %4535 = vmatprep.subr.mxu0 0.0
    %4536 = vmatpush1.xpose.msra.mxu0 0.0
    %4537 = vmatprep.subr.mxu0 0.0
    %4538 = vmatpush1.xpose.msra.mxu0 0.0
    %4539 = vmatprep.subr.mxu0 0.0
    %4540 = vmatpush1.xpose.msra.mxu0 0.0
    %4541 = vmatprep.subr.mxu0 0.0
    %4542 = vmatpush1.xpose.msra.mxu0 0.0
    %4543 = vmatprep.subr.mxu0 0.0
    %4544 = vmatpush1.xpose.msra.mxu0 0.0
    %4545 = vmatprep.subr.mxu0 0.0
    %4546 = vmatpush1.xpose.msra.mxu0 0.0
    %4547 = vmatprep.subr.mxu0 0.0
    %4548 = vmatpush1.xpose.msra.mxu0 0.0
    %4549 = vmatprep.subr.mxu0 0.0
    %4550 = vmatpush1.xpose.msra.mxu0 0.0
    %4551 = vmatprep.mubr.f32.mxu0 %v4467
    %4552 = vmatmul.mubr.f32.gmra.mrb[0].mxu0 %v4466
    %v4553 = vpop.f32.mrb[0].mxu0
    %v4554 = vadd.f32 0.0, %v4553
    %v4555 = vpop.f32.mrb[0].mxu0
    %4556 = vmatprep.mubr.f32.mxu0 %v4469
    %4557 = vmatmul.mubr.f32.gmra.mrb[0].mxu0 %v4468
    %v4558 = vpop.f32.mrb[0].mxu0
    %v4559 = vadd.f32 0.0, %v4558
    %v4560 = vpop.f32.mrb[0].mxu0
    %4561 = vdwg.mxu0
    %v4562 = vadd.f32 %v4089, %v4554
    %v4563 = vadd.f32 %v4090, %v4559
    %s4564 = scalar_lea.vmem %s14, 1
    %v4565 = vld [vmem:[%s4564] sm:$0x1]
    %v4567 = vlaneseq
    %v4568 = vshrl.u32 %v4567, 7
    %v4569 = vsub.s32 0, %v4568
    %v4570 = vrot.slane %v4565, %v4569
    %v4572 = vadd.f32 %v4562, %v4570
    %v4573 = vadd.f32 %v4563, %v4570
    %v4574 = vld [vmem:[%s15] sm:$0x1]
    %v4575 = vld [vmem:[%s16] sm:$0x1]
    %v4576 = vsel %vm174, %v4572, 0.0
    %4577 = vadd.xlane.f32.xlu0 %v4576
    %v4578 = vpop.xlane.xlu0 %4577
    %v4579 = vsel %vm174, %v4573, 0.0
    %4580 = vadd.xlane.f32.xlu0 %v4579
    %v4581 = vpop.xlane.xlu0 %4580
    %v4582 = vmul.f32 %v4578, %v181
    %v4583 = vmul.f32 %v4581, %v181
    %v4584 = vsub.f32 %v4572, %v4582
    %v4585 = vsub.f32 %v4573, %v4583
    %v4586 = vmul.f32 %v4584, %v4584
    %v4587 = vmul.f32 %v4585, %v4585
    %v4588 = vsel %vm174, %v4586, 0.0
    %4589 = vadd.xlane.f32.xlu0 %v4588
    %v4590 = vpop.xlane.xlu0 %4589
    %v4591 = vsel %vm174, %v4587, 0.0
    %4592 = vadd.xlane.f32.xlu0 %v4591
    %v4593 = vpop.xlane.xlu0 %4592
    %v4594 = vmul.f32 %v4590, %v181
    %v4595 = vmul.f32 %v4593, %v181
    %v4596 = vadd.f32 %v4594, 1e-05
    %v4597 = vadd.f32 %v4595, 1e-05
    %v4598 = vrsqrt.pop %v4596
    %v4599 = vrsqrt.pop %v4597
    %v4600 = vmul.f32 %v4584, %v4598
    %v4601 = vmul.f32 %v4585, %v4599
    %v4603 = vlaneseq
    %v4604 = vshrl.u32 %v4603, 7
    %v4605 = vsub.s32 0, %v4604
    %v4606 = vrot.slane %v4574, %v4605
    %v4608 = vmul.f32 %v4600, %v4606
    %v4609 = vmul.f32 %v4601, %v4606
    %v4611 = vlaneseq
    %v4612 = vshrl.u32 %v4611, 7
    %v4613 = vsub.s32 0, %v4612
    %v4614 = vrot.slane %v4575, %v4613
    %v4616 = vadd.f32 %v4608, %v4614
    %v4617 = vadd.f32 %v4609, %v4614
    %v4618 = vld [vmem:[%s17] sm:$0xff]
    %v4619 = vld [vmem:[%s17 + $0x8] sm:$0xff]
    %v4620 = vld [vmem:[%s17 + $0x10] sm:$0xff]
    %v4621 = vld [vmem:[%s17 + $0x18] sm:$0xff]
    %v4622 = vld [vmem:[%s17 + $0x20] sm:$0xff]
    %v4623 = vld [vmem:[%s17 + $0x28] sm:$0xff]
    %v4624 = vld [vmem:[%s17 + $0x30] sm:$0xff]
    %v4625 = vld [vmem:[%s17 + $0x38] sm:$0xff]
    %v4626 = vld [vmem:[%s17 + $0x40] sm:$0xff]
    %v4627 = vld [vmem:[%s17 + $0x48] sm:$0xff]
    %v4628 = vld [vmem:[%s17 + $0x50] sm:$0xff]
    %v4629 = vld [vmem:[%s17 + $0x58] sm:$0xff]
    %v4630 = vld [vmem:[%s17 + $0x60] sm:$0xff]
    %v4631 = vld [vmem:[%s17 + $0x68] sm:$0xff]
    %v4632 = vld [vmem:[%s17 + $0x70] sm:$0xff]
    %v4633 = vld [vmem:[%s17 + $0x78] sm:$0xff]
    %v4635 = vsel %vm174, %v4616, 0
    %v4638 = vsel %vm174, %v4617, 0
    %v4641 = vsel %vm174, %v4618, 0
    %v4644 = vsel %vm174, %v4619, 0
    %v4647 = vsel %vm174, %v4620, 0
    %v4650 = vsel %vm174, %v4621, 0
    %v4653 = vsel %vm174, %v4622, 0
    %v4656 = vsel %vm174, %v4623, 0
    %v4659 = vsel %vm174, %v4624, 0
    %v4662 = vsel %vm174, %v4625, 0
    %v4665 = vsel %vm174, %v4626, 0
    %v4668 = vsel %vm174, %v4627, 0
    %v4671 = vsel %vm174, %v4628, 0
    %v4674 = vsel %vm174, %v4629, 0
    %v4677 = vsel %vm174, %v4630, 0
    %v4680 = vsel %vm174, %v4631, 0
    %v4683 = vsel %vm174, %v4632, 0
    %v4686 = vsel %vm174, %v4633, 0
    %4688 = vmatprep.subr.mxu0 0.0
    %4689 = vmatpush1.xpose.msra.mxu0 %v4641
    %4690 = vmatprep.subr.mxu0 0.0
    %4691 = vmatpush1.xpose.msra.mxu0 %v4644
    %4692 = vmatprep.subr.mxu0 0.0
    %4693 = vmatpush1.xpose.msra.mxu0 %v4647
    %4694 = vmatprep.subr.mxu0 0.0
    %4695 = vmatpush1.xpose.msra.mxu0 %v4650
    %4696 = vmatprep.subr.mxu0 0.0
    %4697 = vmatpush1.xpose.msra.mxu0 %v4653
    %4698 = vmatprep.subr.mxu0 0.0
    %4699 = vmatpush1.xpose.msra.mxu0 %v4656
    %4700 = vmatprep.subr.mxu0 0.0
    %4701 = vmatpush1.xpose.msra.mxu0 %v4659
    %4702 = vmatprep.subr.mxu0 0.0
    %4703 = vmatpush1.xpose.msra.mxu0 %v4662
    %4704 = vmatprep.subr.mxu0 0.0
    %4705 = vmatpush1.xpose.msra.mxu0 %v4665
    %4706 = vmatprep.subr.mxu0 0.0
    %4707 = vmatpush1.xpose.msra.mxu0 %v4668
    %4708 = vmatprep.subr.mxu0 0.0
    %4709 = vmatpush1.xpose.msra.mxu0 %v4671
    %4710 = vmatprep.subr.mxu0 0.0
    %4711 = vmatpush1.xpose.msra.mxu0 %v4674
    %4712 = vmatprep.subr.mxu0 0.0
    %4713 = vmatpush1.xpose.msra.mxu0 %v4677
    %4714 = vmatprep.subr.mxu0 0.0
    %4715 = vmatpush1.xpose.msra.mxu0 %v4680
    %4716 = vmatprep.subr.mxu0 0.0
    %4717 = vmatpush1.xpose.msra.mxu0 %v4683
    %4718 = vmatprep.subr.mxu0 0.0
    %4719 = vmatpush1.xpose.msra.mxu0 %v4686
    %4720 = vmatprep.subr.mxu0 0.0
    %4721 = vmatpush1.xpose.msra.mxu0 0.0
    %4722 = vmatprep.subr.mxu0 0.0
    %4723 = vmatpush1.xpose.msra.mxu0 0.0
    %4724 = vmatprep.subr.mxu0 0.0
    %4725 = vmatpush1.xpose.msra.mxu0 0.0
    %4726 = vmatprep.subr.mxu0 0.0
    %4727 = vmatpush1.xpose.msra.mxu0 0.0
    %4728 = vmatprep.subr.mxu0 0.0
    %4729 = vmatpush1.xpose.msra.mxu0 0.0
    %4730 = vmatprep.subr.mxu0 0.0
    %4731 = vmatpush1.xpose.msra.mxu0 0.0
    %4732 = vmatprep.subr.mxu0 0.0
    %4733 = vmatpush1.xpose.msra.mxu0 0.0
    %4734 = vmatprep.subr.mxu0 0.0
    %4735 = vmatpush1.xpose.msra.mxu0 0.0
    %4736 = vmatprep.subr.mxu0 0.0
    %4737 = vmatpush1.xpose.msra.mxu0 0.0
    %4738 = vmatprep.subr.mxu0 0.0
    %4739 = vmatpush1.xpose.msra.mxu0 0.0
    %4740 = vmatprep.subr.mxu0 0.0
    %4741 = vmatpush1.xpose.msra.mxu0 0.0
    %4742 = vmatprep.subr.mxu0 0.0
    %4743 = vmatpush1.xpose.msra.mxu0 0.0
    %4744 = vmatprep.subr.mxu0 0.0
    %4745 = vmatpush1.xpose.msra.mxu0 0.0
    %4746 = vmatprep.subr.mxu0 0.0
    %4747 = vmatpush1.xpose.msra.mxu0 0.0
    %4748 = vmatprep.subr.mxu0 0.0
    %4749 = vmatpush1.xpose.msra.mxu0 0.0
    %4750 = vmatprep.subr.mxu0 0.0
    %4751 = vmatpush1.xpose.msra.mxu0 0.0
    %4752 = vmatprep.mubr.f32.mxu0 0.0
    %4753 = vmatmul.mubr.f32.gmra.mrb[0].mxu0 %v4635
    %v4754 = vpop.f32.mrb[0].mxu0
    %v4755 = vadd.f32 0.0, %v4754
    %v4756 = vpop.f32.mrb[0].mxu0
    %4757 = vmatprep.mubr.f32.mxu0 0.0
    %4758 = vmatmul.mubr.f32.gmra.mrb[0].mxu0 %v4638
    %v4759 = vpop.f32.mrb[0].mxu0
    %v4760 = vadd.f32 0.0, %v4759
    %v4761 = vpop.f32.mrb[0].mxu0
    %4762 = vdwg.mxu0
    %4763 = vst [vmem:[#allocation2] sm:$0xff] %v4755
    %4764 = vst [vmem:[#allocation2 + $0x8] sm:$0xff] %v4760
    // Predicated region
    $region74: #{tpu_custom_call.1} parent=1 // pred_check
      _
    $region75: #{tpu_custom_call.1} parent=1 // pred_check_branch
      %4766 = sbr.rel (0) target = $region77
    $region76: #{tpu_custom_call.1} parent=1 // pred_region
      %s4768 = ssub.s32 256, 256
      %4769 = vsyncadd [#allocation3], %s4768
      %s4770 = sshll.u32 [#allocation2], 4
      %s4771 = int_to_ptr.vmem [resolvable:$true] %s4770
      %4776 = dma.vmem_to_hbm [thread:$0]  %s4771, 256, %s18, [#allocation3], 128, 128, 8
    $region77: #{tpu_custom_call.1} parent=1 // pred_fallthru
      _
    // Predicated region
    $region78: #{tpu_custom_call.1} parent=1 // pred_check
      _
    $region79: #{tpu_custom_call.1} parent=1 // pred_check_branch
      %4778 = sbr.rel (0) target = $region81
    $region80: #{tpu_custom_call.1} parent=1 // pred_region
      %4779 = dma.done [#allocation3], 256
    $region81: #{tpu_custom_call.1} parent=1 // pred_fallthru
      _
    %4780 = vsyncpa [#allocation3], 1

</llo_original>
